<compile_context>
chip_gen: v7x
topology: tpu7x:2x2x1
jax: 0.10.0
libtpu: 0.0.40
codegen_flags: <defaults>
</compile_context>

<pallas_src>
import functools
import math

import jax
import jax.numpy as jnp
from jax import lax
from jax.experimental import pallas as pl
from jax.experimental.pallas import tpu as pltpu

VMEM_LIMIT = 48 * 1024 * 1024   # explicit budget: fits v7x (64 MiB phys) & v5e/v6e
_ROW_TILE = 256                 # max M (row) tile for row-blocked kernels
_VOCAB_TILE = 2048              # max V (lane) tile for the vocab projection


def _cparams(*sem):
    return pltpu.CompilerParams(dimension_semantics=sem,
                                vmem_limit_bytes=VMEM_LIMIT)


def _row_tile(m, cap=_ROW_TILE):
    """Row tile; split small M so the v7x megacore gets >=2 grid steps."""
    if m > cap:
        return cap
    if m >= 16 and m % 16 == 0:
        return m // 2
    return m


# ------------- capability probe: single-buffered constant blocks -------------

def _probe_copy_kernel(x_ref, o_ref):
    o_ref[...] = x_ref[...]


def _probe_buffered():
    try:
        spec = pl.BlockSpec((8, 128), lambda i: (0, 0), pipeline_mode=pl.Buffered(1))
        fn = pl.pallas_call(
            _probe_copy_kernel,
            out_shape=jax.ShapeDtypeStruct((8, 128), jnp.float32),
            grid=(2,),
            in_specs=[spec],
            out_specs=pl.BlockSpec((8, 128), lambda i: (0, 0)),
            compiler_params=_cparams("arbitrary"),
        )
        jax.block_until_ready(fn(jnp.zeros((8, 128), jnp.float32)))
        return True
    except Exception:
        return False


_BUFFERED_OK = _probe_buffered()


def _const_spec(shape, index_map):
    """Constant-index (weight/bias) block; single-buffered when supported."""
    if _BUFFERED_OK:
        return pl.BlockSpec(shape, index_map, pipeline_mode=pl.Buffered(1))
    return pl.BlockSpec(shape, index_map)


# ----------------------------- Pallas kernels ------------------------------

def linear_kernel(x_ref, w_ref, b_ref, o_ref):
    # o = x @ w + b ; bf16 operands, f32 MXU accumulation, bf16 output
    x = x_ref[...].astype(jnp.bfloat16)
    acc = jnp.dot(x, w_ref[...], preferred_element_type=jnp.float32)
    o_ref[...] = (acc + b_ref[...]).astype(o_ref.dtype)


def image_head_kernel(x_ref, wimg_ref, bimg_ref, wproj_ref, bproj_ref,
                      o_ref, acc_ref):
    # K-tiled: acc += x_k @ w_k ; finalize: +bias -> L2norm -> proj -> L2norm
    k = pl.program_id(0)

    @pl.when(k == 0)
    def _():
        acc_ref[...] = jnp.zeros_like(acc_ref)

    acc_ref[...] += jnp.dot(x_ref[...].astype(jnp.bfloat16), wimg_ref[...],
                            preferred_element_type=jnp.float32)

    @pl.when(k == pl.num_programs(0) - 1)
    def _():
        f = acc_ref[...] + bimg_ref[...]
        f = f * lax.rsqrt(jnp.maximum(jnp.sum(f * f, -1, keepdims=True), 1e-24))
        f = jnp.dot(f.astype(jnp.bfloat16), wproj_ref[...],
                    preferred_element_type=jnp.float32) + bproj_ref[...]
        f = f * lax.rsqrt(jnp.maximum(jnp.sum(f * f, -1, keepdims=True), 1e-24))
        o_ref[...] = f.astype(o_ref.dtype)


def decoder_layer_kernel(x_ref, ln1_g_ref, ln1_b_ref, wqkv_ref, bqkv_ref,
                         wo_ref, bo_ref, ln2_g_ref, ln2_b_ref,
                         w1_ref, b1_ref, w2_ref, b2_ref,
                         o_ref, attnw_ref, attn_out_ref, *, num_heads):
    # Whole decoder layer, one batch per grid step.  Residual kept in f32
    # registers inside the kernel; everything crossing HBM is bf16.
    T, D = x_ref.shape
    hd = D // num_heads
    scale = 1.0 / math.sqrt(hd)

    x = x_ref[...].astype(jnp.float32)

    # LN1 -> fused QKV matmul
    mean = jnp.mean(x, axis=-1, keepdims=True)
    var = jnp.mean(jnp.square(x - mean), axis=-1, keepdims=True)
    xn = (x - mean) * lax.rsqrt(var + 1e-5)
    h = (xn * ln1_g_ref[...] + ln1_b_ref[...]).astype(jnp.bfloat16)
    qkv = jnp.dot(h, wqkv_ref[...], preferred_element_type=jnp.float32) + bqkv_ref[...]
    qkv = qkv.astype(jnp.bfloat16)                       # (T, 3D)

    row = lax.broadcasted_iota(jnp.int32, (T, T), 0)
    col = lax.broadcasted_iota(jnp.int32, (T, T), 1)
    causal = col <= row

    # per-head causal attention; head outputs stored directly into a VMEM
    # scratch column slice (no concat, bounded live ranges)
    for hh in range(num_heads):                          # static unroll
        qh = qkv[:, hh * hd:(hh + 1) * hd]
        kh = qkv[:, D + hh * hd:D + (hh + 1) * hd]
        vh = qkv[:, 2 * D + hh * hd:2 * D + (hh + 1) * hd]
        s = lax.dot_general(qh, kh, (((1,), (1,)), ((), ())),
                            preferred_element_type=jnp.float32) * scale
        s = jnp.where(causal, s, jnp.float32(-1e9))
        s = s - jnp.max(s, axis=-1, keepdims=True)
        p = jnp.exp(s)
        p = p * pl.reciprocal(jnp.sum(p, axis=-1, keepdims=True), approx=True)
        attnw_ref[hh] = p.astype(attnw_ref.dtype)        # bf16 writeback
        attn_out_ref[:, hh * hd:(hh + 1) * hd] = jnp.dot(
            p.astype(jnp.bfloat16), vh,
            preferred_element_type=jnp.float32).astype(attn_out_ref.dtype)

    # attention output projection + residual
    x = x + jnp.dot(attn_out_ref[...], wo_ref[...],
                    preferred_element_type=jnp.float32) + bo_ref[...]

    # LN2 -> MLP -> residual
    mean2 = jnp.mean(x, axis=-1, keepdims=True)
    var2 = jnp.mean(jnp.square(x - mean2), axis=-1, keepdims=True)
    xn2 = (x - mean2) * lax.rsqrt(var2 + 1e-5)
    h2 = (xn2 * ln2_g_ref[...] + ln2_b_ref[...]).astype(jnp.bfloat16)
    ff = jnp.dot(h2, w1_ref[...], preferred_element_type=jnp.float32) + b1_ref[...]
    ff = jax.nn.gelu(ff)   # tanh approx (see TODO above)
    ff = jnp.dot(ff.astype(jnp.bfloat16), w2_ref[...],
                 preferred_element_type=jnp.float32) + b2_ref[...]
    o_ref[...] = (x + ff).astype(o_ref.dtype)


def epilogue_kernel(x_ref, wout_ref, bout_ref, g_ref, b_ref, emb_ref, logit_ref):
    # fused: output projection -> final LayerNorm -> vocab projection
    x = x_ref[...].astype(jnp.bfloat16)
    y = jnp.dot(x, wout_ref[...], preferred_element_type=jnp.float32) + bout_ref[...]
    mean = jnp.mean(y, axis=-1, keepdims=True)
    var = jnp.mean(jnp.square(y - mean), axis=-1, keepdims=True)
    yn = (y - mean) * lax.rsqrt(var + 1e-5)
    yn = (yn * g_ref[...] + b_ref[...]).astype(jnp.bfloat16)
    # emb_ref is the pre-transposed (D, TV) table -> plain MKxKN dot, no XLU transpose
    logit_ref[...] = jnp.dot(yn, emb_ref[...],
                             preferred_element_type=jnp.float32).astype(logit_ref.dtype)


# ----------------------------- kernel wrappers ------------------------------

def pallas_image_head(img_flat, wimg, bimg, wproj, bproj):
    B, K = img_flat.shape
    D = wimg.shape[1]
    if K % 256 == 0:
        TK = 256
    elif K % 128 == 0:
        TK = 128
    else:
        TK = K
    return pl.pallas_call(
        image_head_kernel,
        out_shape=jax.ShapeDtypeStruct((B, D), jnp.bfloat16),
        grid=(K // TK,),
        in_specs=[pl.BlockSpec((B, TK), lambda k: (0, k)),
                  pl.BlockSpec((TK, D), lambda k: (k, 0)),
                  _const_spec((1, D), lambda k: (0, 0)),
                  _const_spec((D, D), lambda k: (0, 0)),
                  _const_spec((1, D), lambda k: (0, 0))],
        out_specs=pl.BlockSpec((B, D), lambda k: (0, 0)),
        scratch_shapes=[pltpu.VMEM((B, D), jnp.float32)],
        compiler_params=_cparams("arbitrary"),
    )(img_flat, wimg, bimg, wproj, bproj)


def pallas_linear_bf16(x2d, w, b):
    M, K = x2d.shape
    N = w.shape[1]
    TM = _row_tile(M)
    return pl.pallas_call(
        linear_kernel,
        out_shape=jax.ShapeDtypeStruct((M, N), jnp.bfloat16),
        grid=(pl.cdiv(M, TM),),
        in_specs=[pl.BlockSpec((TM, K), lambda i: (i, 0)),
                  _const_spec((K, N), lambda i: (0, 0)),
                  _const_spec((1, N), lambda i: (0, 0))],
        out_specs=pl.BlockSpec((TM, N), lambda i: (i, 0)),
        compiler_params=_cparams("parallel"),
    )(x2d, w, b)


def pallas_decoder_layer(x, p, num_heads):
    B, T, D = x.shape
    FF = p['w1'].shape[1]
    kernel = functools.partial(decoder_layer_kernel, num_heads=num_heads)
    c2 = lambda shape: _const_spec(shape, lambda b: (0, 0))
    return pl.pallas_call(
        kernel,
        out_shape=(jax.ShapeDtypeStruct((B, T, D), jnp.bfloat16),
                   jax.ShapeDtypeStruct((B, num_heads, T, T), jnp.bfloat16)),
        grid=(B,),
        in_specs=[pl.BlockSpec((None, T, D), lambda b: (b, 0, 0)),
                  c2((1, D)), c2((1, D)),
                  c2((D, 3 * D)), c2((1, 3 * D)),
                  c2((D, D)), c2((1, D)),
                  c2((1, D)), c2((1, D)),
                  c2((D, FF)), c2((1, FF)),
                  c2((FF, D)), c2((1, D))],
        out_specs=(pl.BlockSpec((None, T, D), lambda b: (b, 0, 0)),
                   pl.BlockSpec((None, num_heads, T, T), lambda b: (b, 0, 0, 0))),
        scratch_shapes=[pltpu.VMEM((T, D), jnp.bfloat16)],
        compiler_params=_cparams("parallel"),
    )(x, p['ln1_g'], p['ln1_b'], p['wqkv'], p['bqkv'],
      p['wo'], p['bo'], p['ln2_g'], p['ln2_b'],
      p['w1'], p['b1'], p['w2'], p['b2'])


def pallas_epilogue_logits(x2d, wout, bout, g, b, emb_t):
    M, D = x2d.shape
    V = emb_t.shape[1]
    TM = min(M, _ROW_TILE)
    TV = min(V, _VOCAB_TILE)
    if pl.cdiv(M, TM) * pl.cdiv(V, TV) < 2 and V % 256 == 0:
        TV = V // 2      # ensure >=2 grid steps for the v7x megacore
    return pl.pallas_call(
        epilogue_kernel,
        out_shape=jax.ShapeDtypeStruct((M, V), jnp.float32),
        grid=(pl.cdiv(M, TM), pl.cdiv(V, TV)),
        in_specs=[pl.BlockSpec((TM, D), lambda i, j: (i, 0)),
                  _const_spec((D, D), lambda i, j: (0, 0)),
                  _const_spec((1, D), lambda i, j: (0, 0)),
                  _const_spec((1, D), lambda i, j: (0, 0)),
                  _const_spec((1, D), lambda i, j: (0, 0)),
                  pl.BlockSpec((D, TV), lambda i, j: (0, j))],
        out_specs=pl.BlockSpec((TM, TV), lambda i, j: (i, j)),
        compiler_params=_cparams("parallel", "parallel"),
    )(x2d, wout, bout, g, b, emb_t)


# ------------------------------- model glue --------------------------------

def transformer_forward(params, image, caption_ids, cfg):
    B = image.shape[0]
    D, H, V = cfg['D'], cfg['H'], cfg['V']

    # --- image branch (synthetic stand-in for CLIP get_image_features) ---
    img_flat = image.reshape(B, -1).astype(jnp.float32)
    img_feat = pallas_image_head(img_flat, params['img_w'], params['img_b'],
                                 params['proj_w'], params['proj_b'])   # (B, D) bf16
    img_feat = img_feat.astype(jnp.float32)[:, None, :]                # (B, 1, D)

    # --- caption branch (CLIP-style token + position embeddings) ---
    S = caption_ids.shape[1]
    cap = params['tok_emb'][caption_ids].astype(jnp.float32) \
        + params['clip_pos_emb'][:S][None, :, :] \
        + params['pos_embedding'][:, :S, :]
    x = jnp.concatenate([img_feat, cap], axis=1)                       # (B, T, D)
    B, T, _ = x.shape

    # --- decoder input projection (bf16 residual stream starts here) ---
    x = pallas_linear_bf16(x.reshape(B * T, D),
                           params['dec_proj_w'], params['dec_proj_b']).reshape(B, T, D)

    # --- fused decoder layers ---
    attn_list = []
    for lp in params['layers']:
        x, aw = pallas_decoder_layer(x, lp, H)
        attn_list.append(aw.astype(jnp.float32))

    # --- epilogue: out-proj + final LN + vocab projection (fused) ---
    logits = pallas_epilogue_logits(x.reshape(B * T, D),
                                    params['out_proj_w'], params['out_proj_b'],
                                    params['final_ln_g'], params['final_ln_b'],
                                    params['tok_emb_t'])
    return logits.reshape(B, T, V), attn_list


# ------------------------------ parameter init ------------------------------

def init_params(key, cfg, img_shape):
    D, H, FF, L, V, MAXLEN = (cfg['D'], cfg['H'], cfg['FF'],
                              cfg['L'], cfg['V'], cfg['MAXLEN'])
    img_flat = img_shape[0] * img_shape[1] * img_shape[2]
    keys = jax.random.split(key, 16 + L)

    def nrm(k, shape, s=0.02, dtype=jnp.bfloat16):
        return (jax.random.normal(k, shape, jnp.float32) * s).astype(dtype)

    tok_emb = nrm(keys[2], (V, D))
    params = {
        # synthetic CLIP image tower stand-in
        'img_w': nrm(keys[0], (img_flat, D)),
        'img_b': jnp.zeros((1, D), jnp.float32),
        # Transformer.projection: eye * 0.1, zero bias (as in reference init)
        'proj_w': (jnp.eye(D, dtype=jnp.float32) * 0.1).astype(jnp.bfloat16),
        'proj_b': jnp.zeros((1, D), jnp.float32),
        'pos_embedding': jax.random.normal(keys[1], (1, MAXLEN, D), jnp.float32),
        # synthetic CLIP text embedding tables; vocab projection uses a one-time
        # pre-transposed (D, V) copy (mirrors the reference weight copy)
        'tok_emb': tok_emb,
        'tok_emb_t': jnp.transpose(tok_emb),
        'clip_pos_emb': nrm(keys[3], (MAXLEN, D), dtype=jnp.float32),
        # Decoder projections / final norm
        'dec_proj_w': nrm(keys[4], (D, D)),
        'dec_proj_b': jnp.zeros((1, D), jnp.float32),
        'out_proj_w': nrm(keys[5], (D, D)),
        'out_proj_b': jnp.zeros((1, D), jnp.float32),
        'final_ln_g': jnp.ones((1, D), jnp.float32),
        'final_ln_b': jnp.zeros((1, D), jnp.float32),
        'layers': [],
    }
    for l in range(L):
        lk = jax.random.split(keys[16 + l], 4)
        params['layers'].append({
            'ln1_g': jnp.ones((1, D), jnp.float32),
            'ln1_b': jnp.zeros((1, D), jnp.float32),
            'wqkv': nrm(lk[0], (D, 3 * D)),        # fused Q|K|V weight
            'bqkv': jnp.zeros((1, 3 * D), jnp.float32),
            'wo': nrm(lk[1], (D, D)),
            'bo': jnp.zeros((1, D), jnp.float32),
            'ln2_g': jnp.ones((1, D), jnp.float32),
            'ln2_b': jnp.zeros((1, D), jnp.float32),
            'w1': nrm(lk[2], (D, FF)),
            'b1': jnp.zeros((1, FF), jnp.float32),
            'w2': nrm(lk[3], (FF, D)),
            'b2': jnp.zeros((1, D), jnp.float32),
        })
    return params


# ---------------------------------- main ------------------------------------

if __name__ == "__main__":
    # small, self-consistent config (defaults scaled down)
    cfg = dict(D=64, H=4, FF=128, L=2, V=256, MAXLEN=16)
    img_shape = (3, 16, 16)          # NCHW per-sample (C, H, W)
    B, S_cap = 2, 7                  # total sequence T = 1 (image) + 7 = 8

    root = jax.random.PRNGKey(0)
    k_param, k_img, k_cap = jax.random.split(root, 3)

    params = init_params(k_param, cfg, img_shape)
    image = jax.random.normal(k_img, (B,) + img_shape, jnp.float32)
    caption_ids = jax.random.randint(k_cap, (B, S_cap), 0, cfg['V'])

    fwd = jax.jit(functools.partial(transformer_forward, cfg=cfg))
    logits, attn_weights = fwd(params, image, caption_ids)
    logits = jax.block_until_ready(logits)
    attn_weights = jax.block_until_ready(attn_weights)

    T = 1 + S_cap
    assert logits.shape == (B, T, cfg['V']), logits.shape
    assert len(attn_weights) == cfg['L']
    assert attn_weights[0].shape == (B, cfg['H'], T, T)
    assert bool(jnp.all(jnp.isfinite(logits)))
    # attention rows sum to ~1 (softmax sanity; bf16 storage + approx reciprocal)
    assert bool(jnp.allclose(jnp.sum(attn_weights[0], axis=-1), 1.0, atol=2e-2))

    print("KERNEL_OK")
</pallas_src>

<mosaic_0001>
module attributes {stable_mosaic.version = 11 : i64} {
  func.func @_probe_copy_kernel(%arg0: i32, %arg1: memref<8x128xf32, #tpu.memory_space<vmem>>, %arg2: memref<8x128xf32, #tpu.memory_space<vmem>>) attributes {dimension_semantics = [#tpu.dimension_semantics<arbitrary>], iteration_bounds = array<i64: 2>, scalar_prefetch = 0 : i64, scratch_operands = 0 : i64, tpu.core_type = #tpu.core_type<tc>, window_params = [{pipeline_mode = #tpu.pipeline_mode<synchronous>, transform_indices = @transform_0, window_bounds = array<i64: 8, 128>}, {pipeline_mode = #tpu.pipeline_mode<synchronous>, transform_indices = @transform_1, window_bounds = array<i64: 8, 128>}]} {
    %c0 = arith.constant 0 : index
    %c0_0 = arith.constant 0 : index
    %0 = vector.load %arg1[%c0, %c0_0] : memref<8x128xf32, #tpu.memory_space<vmem>>, vector<8x128xf32>
    %c0_1 = arith.constant 0 : index
    %c0_2 = arith.constant 0 : index
    %1 = vector.load %arg2[%c0_1, %c0_2] : memref<8x128xf32, #tpu.memory_space<vmem>>, vector<8x128xf32>
    tpu.vector_store %arg2[%c0_1, %c0_2], %0 {strides = array<i32>} : memref<8x128xf32, #tpu.memory_space<vmem>>, vector<8x128xf32>,
    return
  }
  func.func @transform_0(%arg0: i32) -> (i32, i32) {
    %c0_i32 = arith.constant 0 : i32
    %c0_i32_0 = arith.constant 0 : i32
    %c0_i32_1 = arith.constant 0 : i32
    return %c0_i32, %c0_i32_0 : i32, i32
  }
  func.func @transform_1(%arg0: i32) -> (i32, i32) {
    %c0_i32 = arith.constant 0 : i32
    %c0_i32_0 = arith.constant 0 : i32
    %c0_i32_1 = arith.constant 0 : i32
    return %c0_i32, %c0_i32_0 : i32, i32
  }
}

module attributes {stable_mosaic.version = 11 : i64} {
  func.func @image_head_kernel(%arg0: i32, %arg1: memref<2x256xf32, #tpu.memory_space<vmem>>, %arg2: memref<256x64xbf16, #tpu.memory_space<vmem>>, %arg3: memref<1x64xf32, #tpu.memory_space<vmem>>, %arg4: memref<64x64xbf16, #tpu.memory_space<vmem>>, %arg5: memref<1x64xf32, #tpu.memory_space<vmem>>, %arg6: memref<2x64xbf16, #tpu.memory_space<vmem>>, %arg7: memref<2x64xf32, #tpu.memory_space<vmem>>) attributes {dimension_semantics = [#tpu.dimension_semantics<arbitrary>], iteration_bounds = array<i64: 3>, scalar_prefetch = 0 : i64, scratch_operands = 1 : i64, tpu.core_type = #tpu.core_type<tc>, window_params = [{transform_indices = @transform_0, window_bounds = array<i64: 2, 256>}, {transform_indices = @transform_1, window_bounds = array<i64: 256, 64>}, {pipeline_mode = #tpu.pipeline_mode<synchronous>, transform_indices = @transform_2, window_bounds = array<i64: 1, 64>}, {pipeline_mode = #tpu.pipeline_mode<synchronous>, transform_indices = @transform_3, window_bounds = array<i64: 64, 64>}, {pipeline_mode = #tpu.pipeline_mode<synchronous>, transform_indices = @transform_4, window_bounds = array<i64: 1, 64>}, {pipeline_mode = #tpu.pipeline_mode<synchronous>, transform_indices = @transform_5, window_bounds = array<i64: 2, 64>}]} {
    %c0_i32 = arith.constant 0 : i32
    %0 = arith.cmpi eq, %arg0, %c0_i32 : i32
    %1 = arith.extui %0 : i1 to i32
    %c0_i32_0 = arith.constant 0 : i32
    %2 = arith.cmpi ne, %1, %c0_i32_0 : i32
    scf.if %2 {
      %cst_9 = arith.constant 0.000000e+00 : f32
      %13 = vector.broadcast %cst_9 : f32 to vector<2x64xf32>
      %c0_10 = arith.constant 0 : index
      %c0_11 = arith.constant 0 : index
      %14 = vector.load %arg7[%c0_10, %c0_11] : memref<2x64xf32, #tpu.memory_space<vmem>>, vector<2x64xf32>
      tpu.vector_store %arg7[%c0_10, %c0_11], %13 {strides = array<i32>} : memref<2x64xf32, #tpu.memory_space<vmem>>, vector<2x64xf32>,
    } else {
    }
    %c0 = arith.constant 0 : index
    %c0_1 = arith.constant 0 : index
    %3 = vector.load %arg7[%c0, %c0_1] : memref<2x64xf32, #tpu.memory_space<vmem>>, vector<2x64xf32>
    %c0_2 = arith.constant 0 : index
    %c0_3 = arith.constant 0 : index
    %4 = vector.load %arg1[%c0_2, %c0_3] : memref<2x256xf32, #tpu.memory_space<vmem>>, vector<2x256xf32>
    %5 = arith.truncf %4 : vector<2x256xf32> to vector<2x256xbf16>
    %c0_4 = arith.constant 0 : index
    %c0_5 = arith.constant 0 : index
    %6 = vector.load %arg2[%c0_4, %c0_5] : memref<256x64xbf16, #tpu.memory_space<vmem>>, vector<256x64xbf16>
    %cst = arith.constant dense<0.000000e+00> : vector<2x64xf32>
    %7 = tpu.matmul %5, %6, %cst {dimension_numbers = #tpu.dot_dimension_numbers<[1], [0], [0], [1], [0, 0, 1, 1], [], []>} : vector<2x256xbf16>, vector<256x64xbf16>, vector<2x64xf32> -> vector<2x64xf32>
    %8 = arith.addf %3, %7 : vector<2x64xf32>
    %c0_6 = arith.constant 0 : index
    %c0_7 = arith.constant 0 : index
    %9 = vector.load %arg7[%c0_6, %c0_7] : memref<2x64xf32, #tpu.memory_space<vmem>>, vector<2x64xf32>
    tpu.vector_store %arg7[%c0_6, %c0_7], %8 {strides = array<i32>} : memref<2x64xf32, #tpu.memory_space<vmem>>, vector<2x64xf32>,
    %c2_i32 = arith.constant 2 : i32
    %10 = arith.cmpi eq, %arg0, %c2_i32 : i32
    %11 = arith.extui %10 : i1 to i32
    %c0_i32_8 = arith.constant 0 : i32
    %12 = arith.cmpi ne, %11, %c0_i32_8 : i32
    scf.if %12 {
      %c0_9 = arith.constant 0 : index
      %c0_10 = arith.constant 0 : index
      %13 = vector.load %arg7[%c0_9, %c0_10] : memref<2x64xf32, #tpu.memory_space<vmem>>, vector<2x64xf32>
      %c0_11 = arith.constant 0 : index
      %c0_12 = arith.constant 0 : index
      %14 = vector.load %arg3[%c0_11, %c0_12] : memref<1x64xf32, #tpu.memory_space<vmem>>, vector<1x64xf32>
      %15 = vector.broadcast %14 : vector<1x64xf32> to vector<2x64xf32>
      %16 = arith.addf %13, %15 : vector<2x64xf32>
      %17 = arith.mulf %16, %16 : vector<2x64xf32>
      %cst_13 = arith.constant dense<0.000000e+00> : vector<2xf32>
      %18 = vector.multi_reduction <add>, %17, %cst_13 [1] : vector<2x64xf32> to vector<2xf32>
      %19 = vector.shape_cast %18 : vector<2xf32> to vector<2x1xf32>
      %cst_14 = arith.constant 1.000000e-24 : f32
      %20 = vector.broadcast %cst_14 : f32 to vector<2x1xf32>
      %21 = arith.maximumf %19, %20 : vector<2x1xf32>
      %22 = math.rsqrt %21 : vector<2x1xf32>
      %23 = vector.broadcast %22 : vector<2x1xf32> to vector<2x64xf32>
      %24 = arith.mulf %16, %23 : vector<2x64xf32>
      %25 = arith.truncf %24 : vector<2x64xf32> to vector<2x64xbf16>
      %c0_15 = arith.constant 0 : index
      %c0_16 = arith.constant 0 : index
      %26 = vector.load %arg4[%c0_15, %c0_16] : memref<64x64xbf16, #tpu.memory_space<vmem>>, vector<64x64xbf16>
      %cst_17 = arith.constant dense<0.000000e+00> : vector<2x64xf32>
      %27 = tpu.matmul %25, %26, %cst_17 {dimension_numbers = #tpu.dot_dimension_numbers<[1], [0], [0], [1], [0, 0, 1, 1], [], []>} : vector<2x64xbf16>, vector<64x64xbf16>, vector<2x64xf32> -> vector<2x64xf32>
      %c0_18 = arith.constant 0 : index
      %c0_19 = arith.constant 0 : index
      %28 = vector.load %arg5[%c0_18, %c0_19] : memref<1x64xf32, #tpu.memory_space<vmem>>, vector<1x64xf32>
      %29 = vector.broadcast %28 : vector<1x64xf32> to vector<2x64xf32>
      %30 = arith.addf %27, %29 : vector<2x64xf32>
      %31 = arith.mulf %30, %30 : vector<2x64xf32>
      %cst_20 = arith.constant dense<0.000000e+00> : vector<2xf32>
      %32 = vector.multi_reduction <add>, %31, %cst_20 [1] : vector<2x64xf32> to vector<2xf32>
      %33 = vector.shape_cast %32 : vector<2xf32> to vector<2x1xf32>
      %cst_21 = arith.constant 1.000000e-24 : f32
      %34 = vector.broadcast %cst_21 : f32 to vector<2x1xf32>
      %35 = arith.maximumf %33, %34 : vector<2x1xf32>
      %36 = math.rsqrt %35 : vector<2x1xf32>
      %37 = vector.broadcast %36 : vector<2x1xf32> to vector<2x64xf32>
      %38 = arith.mulf %30, %37 : vector<2x64xf32>
      %39 = arith.truncf %38 : vector<2x64xf32> to vector<2x64xbf16>
      %c0_22 = arith.constant 0 : index
      %c0_23 = arith.constant 0 : index
      %40 = vector.load %arg6[%c0_22, %c0_23] : memref<2x64xbf16, #tpu.memory_space<vmem>>, vector<2x64xbf16>
      tpu.vector_store %arg6[%c0_22, %c0_23], %39 {strides = array<i32>} : memref<2x64xbf16, #tpu.memory_space<vmem>>, vector<2x64xbf16>,
    } else {
    }
    return
  }
  func.func @transform_0(%arg0: i32) -> (i32, i32) {
    %c0_i32 = arith.constant 0 : i32
    %c0_i32_0 = arith.constant 0 : i32
    return %c0_i32, %arg0 : i32, i32
  }
  func.func @transform_1(%arg0: i32) -> (i32, i32) {
    %c0_i32 = arith.constant 0 : i32
    %c0_i32_0 = arith.constant 0 : i32
    return %arg0, %c0_i32 : i32, i32
  }
  func.func @transform_2(%arg0: i32) -> (i32, i32) {
    %c0_i32 = arith.constant 0 : i32
    %c0_i32_0 = arith.constant 0 : i32
    %c0_i32_1 = arith.constant 0 : i32
    return %c0_i32, %c0_i32_0 : i32, i32
  }
  func.func @transform_3(%arg0: i32) -> (i32, i32) {
    %c0_i32 = arith.constant 0 : i32
    %c0_i32_0 = arith.constant 0 : i32
    %c0_i32_1 = arith.constant 0 : i32
    return %c0_i32, %c0_i32_0 : i32, i32
  }
  func.func @transform_4(%arg0: i32) -> (i32, i32) {
    %c0_i32 = arith.constant 0 : i32
    %c0_i32_0 = arith.constant 0 : i32
    %c0_i32_1 = arith.constant 0 : i32
    return %c0_i32, %c0_i32_0 : i32, i32
  }
  func.func @transform_5(%arg0: i32) -> (i32, i32) {
    %c0_i32 = arith.constant 0 : i32
    %c0_i32_0 = arith.constant 0 : i32
    %c0_i32_1 = arith.constant 0 : i32
    return %c0_i32, %c0_i32_0 : i32, i32
  }
}

module attributes {stable_mosaic.version = 11 : i64} {
  func.func @linear_kernel(%arg0: i32, %arg1: memref<8x64xf32, #tpu.memory_space<vmem>>, %arg2: memref<64x64xbf16, #tpu.memory_space<vmem>>, %arg3: memref<1x64xf32, #tpu.memory_space<vmem>>, %arg4: memref<8x64xbf16, #tpu.memory_space<vmem>>) attributes {dimension_semantics = [#tpu.dimension_semantics<parallel>], iteration_bounds = array<i64: 2>, scalar_prefetch = 0 : i64, scratch_operands = 0 : i64, tpu.core_type = #tpu.core_type<tc>, window_params = [{transform_indices = @transform_0, window_bounds = array<i64: 8, 64>}, {pipeline_mode = #tpu.pipeline_mode<synchronous>, transform_indices = @transform_1, window_bounds = array<i64: 64, 64>}, {pipeline_mode = #tpu.pipeline_mode<synchronous>, transform_indices = @transform_2, window_bounds = array<i64: 1, 64>}, {transform_indices = @transform_3, window_bounds = array<i64: 8, 64>}]} {
    %c0 = arith.constant 0 : index
    %c0_0 = arith.constant 0 : index
    %0 = vector.load %arg1[%c0, %c0_0] : memref<8x64xf32, #tpu.memory_space<vmem>>, vector<8x64xf32>
    %1 = arith.truncf %0 : vector<8x64xf32> to vector<8x64xbf16>
    %c0_1 = arith.constant 0 : index
    %c0_2 = arith.constant 0 : index
    %2 = vector.load %arg2[%c0_1, %c0_2] : memref<64x64xbf16, #tpu.memory_space<vmem>>, vector<64x64xbf16>
    %cst = arith.constant dense<0.000000e+00> : vector<8x64xf32>
    %3 = tpu.matmul %1, %2, %cst {dimension_numbers = #tpu.dot_dimension_numbers<[1], [0], [0], [1], [0, 0, 1, 1], [], []>} : vector<8x64xbf16>, vector<64x64xbf16>, vector<8x64xf32> -> vector<8x64xf32>
    %c0_3 = arith.constant 0 : index
    %c0_4 = arith.constant 0 : index
    %4 = vector.load %arg3[%c0_3, %c0_4] : memref<1x64xf32, #tpu.memory_space<vmem>>, vector<1x64xf32>
    %5 = vector.broadcast %4 : vector<1x64xf32> to vector<8x64xf32>
    %6 = arith.addf %3, %5 : vector<8x64xf32>
    %7 = arith.truncf %6 : vector<8x64xf32> to vector<8x64xbf16>
    %c0_5 = arith.constant 0 : index
    %c0_6 = arith.constant 0 : index
    %8 = vector.load %arg4[%c0_5, %c0_6] : memref<8x64xbf16, #tpu.memory_space<vmem>>, vector<8x64xbf16>
    tpu.vector_store %arg4[%c0_5, %c0_6], %7 {strides = array<i32>} : memref<8x64xbf16, #tpu.memory_space<vmem>>, vector<8x64xbf16>,
    return
  }
  func.func @transform_0(%arg0: i32) -> (i32, i32) {
    %c0_i32 = arith.constant 0 : i32
    %c0_i32_0 = arith.constant 0 : i32
    return %arg0, %c0_i32 : i32, i32
  }
  func.func @transform_1(%arg0: i32) -> (i32, i32) {
    %c0_i32 = arith.constant 0 : i32
    %c0_i32_0 = arith.constant 0 : i32
    %c0_i32_1 = arith.constant 0 : i32
    return %c0_i32, %c0_i32_0 : i32, i32
  }
  func.func @transform_2(%arg0: i32) -> (i32, i32) {
    %c0_i32 = arith.constant 0 : i32
    %c0_i32_0 = arith.constant 0 : i32
    %c0_i32_1 = arith.constant 0 : i32
    return %c0_i32, %c0_i32_0 : i32, i32
  }
  func.func @transform_3(%arg0: i32) -> (i32, i32) {
    %c0_i32 = arith.constant 0 : i32
    %c0_i32_0 = arith.constant 0 : i32
    return %arg0, %c0_i32 : i32, i32
  }
}

module attributes {stable_mosaic.version = 11 : i64} {
  func.func @decoder_layer_kernel(%arg0: i32, %arg1: memref<1x8x64xbf16, #tpu.memory_space<vmem>>, %arg2: memref<1x64xf32, #tpu.memory_space<vmem>>, %arg3: memref<1x64xf32, #tpu.memory_space<vmem>>, %arg4: memref<64x192xbf16, #tpu.memory_space<vmem>>, %arg5: memref<1x192xf32, #tpu.memory_space<vmem>>, %arg6: memref<64x64xbf16, #tpu.memory_space<vmem>>, %arg7: memref<1x64xf32, #tpu.memory_space<vmem>>, %arg8: memref<1x64xf32, #tpu.memory_space<vmem>>, %arg9: memref<1x64xf32, #tpu.memory_space<vmem>>, %arg10: memref<64x128xbf16, #tpu.memory_space<vmem>>, %arg11: memref<1x128xf32, #tpu.memory_space<vmem>>, %arg12: memref<128x64xbf16, #tpu.memory_space<vmem>>, %arg13: memref<1x64xf32, #tpu.memory_space<vmem>>, %arg14: memref<1x8x64xbf16, #tpu.memory_space<vmem>>, %arg15: memref<1x4x8x8xbf16, #tpu.memory_space<vmem>>, %arg16: memref<8x64xbf16, #tpu.memory_space<vmem>>) attributes {dimension_semantics = [#tpu.dimension_semantics<parallel>], iteration_bounds = array<i64: 2>, scalar_prefetch = 0 : i64, scratch_operands = 1 : i64, tpu.core_type = #tpu.core_type<tc>, window_params = [{transform_indices = @transform_0, window_bounds = array<i64: 1, 8, 64>}, {pipeline_mode = #tpu.pipeline_mode<synchronous>, transform_indices = @transform_1, window_bounds = array<i64: 1, 64>}, {pipeline_mode = #tpu.pipeline_mode<synchronous>, transform_indices = @transform_2, window_bounds = array<i64: 1, 64>}, {pipeline_mode = #tpu.pipeline_mode<synchronous>, transform_indices = @transform_3, window_bounds = array<i64: 64, 192>}, {pipeline_mode = #tpu.pipeline_mode<synchronous>, transform_indices = @transform_4, window_bounds = array<i64: 1, 192>}, {pipeline_mode = #tpu.pipeline_mode<synchronous>, transform_indices = @transform_5, window_bounds = array<i64: 64, 64>}, {pipeline_mode = #tpu.pipeline_mode<synchronous>, transform_indices = @transform_6, window_bounds = array<i64: 1, 64>}, {pipeline_mode = #tpu.pipeline_mode<synchronous>, transform_indices = @transform_7, window_bounds = array<i64: 1, 64>}, {pipeline_mode = #tpu.pipeline_mode<synchronous>, transform_indices = @transform_8, window_bounds = array<i64: 1, 64>}, {pipeline_mode = #tpu.pipeline_mode<synchronous>, transform_indices = @transform_9, window_bounds = array<i64: 64, 128>}, {pipeline_mode = #tpu.pipeline_mode<synchronous>, transform_indices = @transform_10, window_bounds = array<i64: 1, 128>}, {pipeline_mode = #tpu.pipeline_mode<synchronous>, transform_indices = @transform_11, window_bounds = array<i64: 128, 64>}, {pipeline_mode = #tpu.pipeline_mode<synchronous>, transform_indices = @transform_12, window_bounds = array<i64: 1, 64>}, {transform_indices = @transform_13, window_bounds = array<i64: 1, 8, 64>}, {transform_indices = @transform_14, window_bounds = array<i64: 1, 4, 8, 8>}]} {
    %c0 = arith.constant 0 : index
    %c0_0 = arith.constant 0 : index
    %c0_1 = arith.constant 0 : index
    %0 = vector.load %arg1[%c0, %c0_0, %c0_1] : memref<1x8x64xbf16, #tpu.memory_space<vmem>>, vector<1x8x64xbf16>
    %1 = vector.shape_cast %0 : vector<1x8x64xbf16> to vector<8x64xbf16>
    %2 = arith.extf %1 : vector<8x64xbf16> to vector<8x64xf32>
    %cst = arith.constant dense<0.000000e+00> : vector<8xf32>
    %3 = vector.multi_reduction <add>, %2, %cst [1] : vector<8x64xf32> to vector<8xf32>
    %4 = vector.shape_cast %3 : vector<8xf32> to vector<8x1xf32>
    %cst_2 = arith.constant 6.400000e+01 : f32
    %5 = vector.broadcast %cst_2 : f32 to vector<8x1xf32>
    %6 = arith.divf %4, %5 : vector<8x1xf32>
    %7 = vector.broadcast %6 : vector<8x1xf32> to vector<8x64xf32>
    %8 = arith.subf %2, %7 : vector<8x64xf32>
    %9 = arith.mulf %8, %8 : vector<8x64xf32>
    %cst_3 = arith.constant dense<0.000000e+00> : vector<8xf32>
    %10 = vector.multi_reduction <add>, %9, %cst_3 [1] : vector<8x64xf32> to vector<8xf32>
    %11 = vector.shape_cast %10 : vector<8xf32> to vector<8x1xf32>
    %cst_4 = arith.constant 6.400000e+01 : f32
    %12 = vector.broadcast %cst_4 : f32 to vector<8x1xf32>
    %13 = arith.divf %11, %12 : vector<8x1xf32>
    %14 = vector.broadcast %6 : vector<8x1xf32> to vector<8x64xf32>
    %15 = arith.subf %2, %14 : vector<8x64xf32>
    %cst_5 = arith.constant 9.99999974E-6 : f32
    %16 = vector.broadcast %cst_5 : f32 to vector<8x1xf32>
    %17 = arith.addf %13, %16 : vector<8x1xf32>
    %18 = math.rsqrt %17 : vector<8x1xf32>
    %19 = vector.broadcast %18 : vector<8x1xf32> to vector<8x64xf32>
    %20 = arith.mulf %15, %19 : vector<8x64xf32>
    %c0_6 = arith.constant 0 : index
    %c0_7 = arith.constant 0 : index
    %21 = vector.load %arg2[%c0_6, %c0_7] : memref<1x64xf32, #tpu.memory_space<vmem>>, vector<1x64xf32>
    %22 = vector.broadcast %21 : vector<1x64xf32> to vector<8x64xf32>
    %23 = arith.mulf %20, %22 : vector<8x64xf32>
    %c0_8 = arith.constant 0 : index
    %c0_9 = arith.constant 0 : index
    %24 = vector.load %arg3[%c0_8, %c0_9] : memref<1x64xf32, #tpu.memory_space<vmem>>, vector<1x64xf32>
    %25 = vector.broadcast %24 : vector<1x64xf32> to vector<8x64xf32>
    %26 = arith.addf %23, %25 : vector<8x64xf32>
    %27 = arith.truncf %26 : vector<8x64xf32> to vector<8x64xbf16>
    %c0_10 = arith.constant 0 : index
    %c0_11 = arith.constant 0 : index
    %28 = vector.load %arg4[%c0_10, %c0_11] : memref<64x192xbf16, #tpu.memory_space<vmem>>, vector<64x192xbf16>
    %cst_12 = arith.constant dense<0.000000e+00> : vector<8x192xf32>
    %29 = tpu.matmul %27, %28, %cst_12 {dimension_numbers = #tpu.dot_dimension_numbers<[1], [0], [0], [1], [0, 0, 1, 1], [], []>} : vector<8x64xbf16>, vector<64x192xbf16>, vector<8x192xf32> -> vector<8x192xf32>
    %c0_13 = arith.constant 0 : index
    %c0_14 = arith.constant 0 : index
    %30 = vector.load %arg5[%c0_13, %c0_14] : memref<1x192xf32, #tpu.memory_space<vmem>>, vector<1x192xf32>
    %31 = vector.broadcast %30 : vector<1x192xf32> to vector<8x192xf32>
    %32 = arith.addf %29, %31 : vector<8x192xf32>
    %33 = arith.truncf %32 : vector<8x192xf32> to vector<8x192xbf16>
    %34 = tpu.iota {dimensions = array<i32: 0>} : vector<8x8xi32>
    %35 = tpu.iota {dimensions = array<i32: 1>} : vector<8x8xi32>
    %36 = arith.cmpi sle, %35, %34 : vector<8x8xi32>
    %37 = vector.extract_strided_slice %33 {offsets = [0, 0], sizes = [8, 16], strides = [1, 1]} : vector<8x192xbf16> to vector<8x16xbf16>
    %38 = vector.extract_strided_slice %33 {offsets = [0, 64], sizes = [8, 16], strides = [1, 1]} : vector<8x192xbf16> to vector<8x16xbf16>
    %39 = vector.extract_strided_slice %33 {offsets = [0, 128], sizes = [8, 16], strides = [1, 1]} : vector<8x192xbf16> to vector<8x16xbf16>
    %cst_15 = arith.constant dense<0.000000e+00> : vector<8x8xf32>
    %40 = tpu.matmul %37, %38, %cst_15 {dimension_numbers = #tpu.dot_dimension_numbers<[1], [1], [0], [0], [0, 0, 1, 0], [], []>} : vector<8x16xbf16>, vector<8x16xbf16>, vector<8x8xf32> -> vector<8x8xf32>
    %cst_16 = arith.constant 2.500000e-01 : f32
    %41 = vector.broadcast %cst_16 : f32 to vector<8x8xf32>
    %42 = arith.mulf %40, %41 : vector<8x8xf32>
    %cst_17 = arith.constant -1.000000e+09 : f32
    %43 = vector.broadcast %cst_17 : f32 to vector<8x8xf32>
    %44 = arith.select %36, %42, %43 : vector<8x8xi1>, vector<8x8xf32>
    %cst_18 = arith.constant dense<0xFF800000> : vector<8xf32>
    %45 = vector.multi_reduction <maximumf>, %44, %cst_18 [1] : vector<8x8xf32> to vector<8xf32>
    %46 = vector.shape_cast %45 : vector<8xf32> to vector<8x1xf32>
    %47 = vector.broadcast %46 : vector<8x1xf32> to vector<8x8xf32>
    %48 = arith.subf %44, %47 : vector<8x8xf32>
    %49 = math.exp %48 : vector<8x8xf32>
    %cst_19 = arith.constant dense<0.000000e+00> : vector<8xf32>
    %50 = vector.multi_reduction <add>, %49, %cst_19 [1] : vector<8x8xf32> to vector<8xf32>
    %51 = vector.shape_cast %50 : vector<8xf32> to vector<8x1xf32>
    %52 = tpu.reciprocal %51 {approx = true} : vector<8x1xf32> -> vector<8x1xf32>
    %53 = vector.broadcast %52 : vector<8x1xf32> to vector<8x8xf32>
    %54 = arith.mulf %49, %53 : vector<8x8xf32>
    %55 = arith.truncf %54 : vector<8x8xf32> to vector<8x8xbf16>
    %c0_20 = arith.constant 0 : index
    %c0_21 = arith.constant 0 : index
    %c0_22 = arith.constant 0 : index
    %c0_23 = arith.constant 0 : index
    %56 = vector.load %arg15[%c0_20, %c0_21, %c0_22, %c0_23] : memref<1x4x8x8xbf16, #tpu.memory_space<vmem>>, vector<1x1x8x8xbf16>
    %57 = vector.shape_cast %56 : vector<1x1x8x8xbf16> to vector<8x8xbf16>
    %58 = vector.shape_cast %55 : vector<8x8xbf16> to vector<1x1x8x8xbf16>
    tpu.vector_store %arg15[%c0_20, %c0_21, %c0_22, %c0_23], %58 {strides = array<i32>} : memref<1x4x8x8xbf16, #tpu.memory_space<vmem>>, vector<1x1x8x8xbf16>,
    %59 = arith.truncf %54 : vector<8x8xf32> to vector<8x8xbf16>
    %cst_24 = arith.constant dense<0.000000e+00> : vector<8x16xf32>
    %60 = tpu.matmul %59, %39, %cst_24 {dimension_numbers = #tpu.dot_dimension_numbers<[1], [0], [0], [1], [0, 0, 1, 1], [], []>} : vector<8x8xbf16>, vector<8x16xbf16>, vector<8x16xf32> -> vector<8x16xf32>
    %61 = arith.truncf %60 : vector<8x16xf32> to vector<8x16xbf16>
    %c0_25 = arith.constant 0 : index
    %c0_26 = arith.constant 0 : index
    %62 = vector.load %arg16[%c0_25, %c0_26] : memref<8x64xbf16, #tpu.memory_space<vmem>>, vector<8x16xbf16>
    tpu.vector_store %arg16[%c0_25, %c0_26], %61 {strides = array<i32>} : memref<8x64xbf16, #tpu.memory_space<vmem>>, vector<8x16xbf16>,
    %63 = vector.extract_strided_slice %33 {offsets = [0, 16], sizes = [8, 16], strides = [1, 1]} : vector<8x192xbf16> to vector<8x16xbf16>
    %64 = vector.extract_strided_slice %33 {offsets = [0, 80], sizes = [8, 16], strides = [1, 1]} : vector<8x192xbf16> to vector<8x16xbf16>
    %65 = vector.extract_strided_slice %33 {offsets = [0, 144], sizes = [8, 16], strides = [1, 1]} : vector<8x192xbf16> to vector<8x16xbf16>
    %cst_27 = arith.constant dense<0.000000e+00> : vector<8x8xf32>
    %66 = tpu.matmul %63, %64, %cst_27 {dimension_numbers = #tpu.dot_dimension_numbers<[1], [1], [0], [0], [0, 0, 1, 0], [], []>} : vector<8x16xbf16>, vector<8x16xbf16>, vector<8x8xf32> -> vector<8x8xf32>
    %cst_28 = arith.constant 2.500000e-01 : f32
    %67 = vector.broadcast %cst_28 : f32 to vector<8x8xf32>
    %68 = arith.mulf %66, %67 : vector<8x8xf32>
    %cst_29 = arith.constant -1.000000e+09 : f32
    %69 = vector.broadcast %cst_29 : f32 to vector<8x8xf32>
    %70 = arith.select %36, %68, %69 : vector<8x8xi1>, vector<8x8xf32>
    %cst_30 = arith.constant dense<0xFF800000> : vector<8xf32>
    %71 = vector.multi_reduction <maximumf>, %70, %cst_30 [1] : vector<8x8xf32> to vector<8xf32>
    %72 = vector.shape_cast %71 : vector<8xf32> to vector<8x1xf32>
    %73 = vector.broadcast %72 : vector<8x1xf32> to vector<8x8xf32>
    %74 = arith.subf %70, %73 : vector<8x8xf32>
    %75 = math.exp %74 : vector<8x8xf32>
    %cst_31 = arith.constant dense<0.000000e+00> : vector<8xf32>
    %76 = vector.multi_reduction <add>, %75, %cst_31 [1] : vector<8x8xf32> to vector<8xf32>
    %77 = vector.shape_cast %76 : vector<8xf32> to vector<8x1xf32>
    %78 = tpu.reciprocal %77 {approx = true} : vector<8x1xf32> -> vector<8x1xf32>
    %79 = vector.broadcast %78 : vector<8x1xf32> to vector<8x8xf32>
    %80 = arith.mulf %75, %79 : vector<8x8xf32>
    %81 = arith.truncf %80 : vector<8x8xf32> to vector<8x8xbf16>
    %c0_32 = arith.constant 0 : index
    %c1 = arith.constant 1 : index
    %c0_33 = arith.constant 0 : index
    %c0_34 = arith.constant 0 : index
    %82 = vector.load %arg15[%c0_32, %c1, %c0_33, %c0_34] : memref<1x4x8x8xbf16, #tpu.memory_space<vmem>>, vector<1x1x8x8xbf16>
    %83 = vector.shape_cast %82 : vector<1x1x8x8xbf16> to vector<8x8xbf16>
    %84 = vector.shape_cast %81 : vector<8x8xbf16> to vector<1x1x8x8xbf16>
    tpu.vector_store %arg15[%c0_32, %c1, %c0_33, %c0_34], %84 {strides = array<i32>} : memref<1x4x8x8xbf16, #tpu.memory_space<vmem>>, vector<1x1x8x8xbf16>,
    %85 = arith.truncf %80 : vector<8x8xf32> to vector<8x8xbf16>
    %cst_35 = arith.constant dense<0.000000e+00> : vector<8x16xf32>
    %86 = tpu.matmul %85, %65, %cst_35 {dimension_numbers = #tpu.dot_dimension_numbers<[1], [0], [0], [1], [0, 0, 1, 1], [], []>} : vector<8x8xbf16>, vector<8x16xbf16>, vector<8x16xf32> -> vector<8x16xf32>
    %87 = arith.truncf %86 : vector<8x16xf32> to vector<8x16xbf16>
    %c0_36 = arith.constant 0 : index
    %c16 = arith.constant 16 : index
    %88 = vector.load %arg16[%c0_36, %c16] : memref<8x64xbf16, #tpu.memory_space<vmem>>, vector<8x16xbf16>
    tpu.vector_store %arg16[%c0_36, %c16], %87 {strides = array<i32>} : memref<8x64xbf16, #tpu.memory_space<vmem>>, vector<8x16xbf16>,
    %89 = vector.extract_strided_slice %33 {offsets = [0, 32], sizes = [8, 16], strides = [1, 1]} : vector<8x192xbf16> to vector<8x16xbf16>
    %90 = vector.extract_strided_slice %33 {offsets = [0, 96], sizes = [8, 16], strides = [1, 1]} : vector<8x192xbf16> to vector<8x16xbf16>
    %91 = vector.extract_strided_slice %33 {offsets = [0, 160], sizes = [8, 16], strides = [1, 1]} : vector<8x192xbf16> to vector<8x16xbf16>
    %cst_37 = arith.constant dense<0.000000e+00> : vector<8x8xf32>
    %92 = tpu.matmul %89, %90, %cst_37 {dimension_numbers = #tpu.dot_dimension_numbers<[1], [1], [0], [0], [0, 0, 1, 0], [], []>} : vector<8x16xbf16>, vector<8x16xbf16>, vector<8x8xf32> -> vector<8x8xf32>
    %cst_38 = arith.constant 2.500000e-01 : f32
    %93 = vector.broadcast %cst_38 : f32 to vector<8x8xf32>
    %94 = arith.mulf %92, %93 : vector<8x8xf32>
    %cst_39 = arith.constant -1.000000e+09 : f32
    %95 = vector.broadcast %cst_39 : f32 to vector<8x8xf32>
    %96 = arith.select %36, %94, %95 : vector<8x8xi1>, vector<8x8xf32>
    %cst_40 = arith.constant dense<0xFF800000> : vector<8xf32>
    %97 = vector.multi_reduction <maximumf>, %96, %cst_40 [1] : vector<8x8xf32> to vector<8xf32>
    %98 = vector.shape_cast %97 : vector<8xf32> to vector<8x1xf32>
    %99 = vector.broadcast %98 : vector<8x1xf32> to vector<8x8xf32>
    %100 = arith.subf %96, %99 : vector<8x8xf32>
    %101 = math.exp %100 : vector<8x8xf32>
    %cst_41 = arith.constant dense<0.000000e+00> : vector<8xf32>
    %102 = vector.multi_reduction <add>, %101, %cst_41 [1] : vector<8x8xf32> to vector<8xf32>
    %103 = vector.shape_cast %102 : vector<8xf32> to vector<8x1xf32>
    %104 = tpu.reciprocal %103 {approx = true} : vector<8x1xf32> -> vector<8x1xf32>
    %105 = vector.broadcast %104 : vector<8x1xf32> to vector<8x8xf32>
    %106 = arith.mulf %101, %105 : vector<8x8xf32>
    %107 = arith.truncf %106 : vector<8x8xf32> to vector<8x8xbf16>
    %c0_42 = arith.constant 0 : index
    %c2 = arith.constant 2 : index
    %c0_43 = arith.constant 0 : index
    %c0_44 = arith.constant 0 : index
    %108 = vector.load %arg15[%c0_42, %c2, %c0_43, %c0_44] : memref<1x4x8x8xbf16, #tpu.memory_space<vmem>>, vector<1x1x8x8xbf16>
    %109 = vector.shape_cast %108 : vector<1x1x8x8xbf16> to vector<8x8xbf16>
    %110 = vector.shape_cast %107 : vector<8x8xbf16> to vector<1x1x8x8xbf16>
    tpu.vector_store %arg15[%c0_42, %c2, %c0_43, %c0_44], %110 {strides = array<i32>} : memref<1x4x8x8xbf16, #tpu.memory_space<vmem>>, vector<1x1x8x8xbf16>,
    %111 = arith.truncf %106 : vector<8x8xf32> to vector<8x8xbf16>
    %cst_45 = arith.constant dense<0.000000e+00> : vector<8x16xf32>
    %112 = tpu.matmul %111, %91, %cst_45 {dimension_numbers = #tpu.dot_dimension_numbers<[1], [0], [0], [1], [0, 0, 1, 1], [], []>} : vector<8x8xbf16>, vector<8x16xbf16>, vector<8x16xf32> -> vector<8x16xf32>
    %113 = arith.truncf %112 : vector<8x16xf32> to vector<8x16xbf16>
    %c0_46 = arith.constant 0 : index
    %c32 = arith.constant 32 : index
    %114 = vector.load %arg16[%c0_46, %c32] : memref<8x64xbf16, #tpu.memory_space<vmem>>, vector<8x16xbf16>
    tpu.vector_store %arg16[%c0_46, %c32], %113 {strides = array<i32>} : memref<8x64xbf16, #tpu.memory_space<vmem>>, vector<8x16xbf16>,
    %115 = vector.extract_strided_slice %33 {offsets = [0, 48], sizes = [8, 16], strides = [1, 1]} : vector<8x192xbf16> to vector<8x16xbf16>
    %116 = vector.extract_strided_slice %33 {offsets = [0, 112], sizes = [8, 16], strides = [1, 1]} : vector<8x192xbf16> to vector<8x16xbf16>
    %117 = vector.extract_strided_slice %33 {offsets = [0, 176], sizes = [8, 16], strides = [1, 1]} : vector<8x192xbf16> to vector<8x16xbf16>
    %cst_47 = arith.constant dense<0.000000e+00> : vector<8x8xf32>
    %118 = tpu.matmul %115, %116, %cst_47 {dimension_numbers = #tpu.dot_dimension_numbers<[1], [1], [0], [0], [0, 0, 1, 0], [], []>} : vector<8x16xbf16>, vector<8x16xbf16>, vector<8x8xf32> -> vector<8x8xf32>
    %cst_48 = arith.constant 2.500000e-01 : f32
    %119 = vector.broadcast %cst_48 : f32 to vector<8x8xf32>
    %120 = arith.mulf %118, %119 : vector<8x8xf32>
    %cst_49 = arith.constant -1.000000e+09 : f32
    %121 = vector.broadcast %cst_49 : f32 to vector<8x8xf32>
    %122 = arith.select %36, %120, %121 : vector<8x8xi1>, vector<8x8xf32>
    %cst_50 = arith.constant dense<0xFF800000> : vector<8xf32>
    %123 = vector.multi_reduction <maximumf>, %122, %cst_50 [1] : vector<8x8xf32> to vector<8xf32>
    %124 = vector.shape_cast %123 : vector<8xf32> to vector<8x1xf32>
    %125 = vector.broadcast %124 : vector<8x1xf32> to vector<8x8xf32>
    %126 = arith.subf %122, %125 : vector<8x8xf32>
    %127 = math.exp %126 : vector<8x8xf32>
    %cst_51 = arith.constant dense<0.000000e+00> : vector<8xf32>
    %128 = vector.multi_reduction <add>, %127, %cst_51 [1] : vector<8x8xf32> to vector<8xf32>
    %129 = vector.shape_cast %128 : vector<8xf32> to vector<8x1xf32>
    %130 = tpu.reciprocal %129 {approx = true} : vector<8x1xf32> -> vector<8x1xf32>
    %131 = vector.broadcast %130 : vector<8x1xf32> to vector<8x8xf32>
    %132 = arith.mulf %127, %131 : vector<8x8xf32>
    %133 = arith.truncf %132 : vector<8x8xf32> to vector<8x8xbf16>
    %c0_52 = arith.constant 0 : index
    %c3 = arith.constant 3 : index
    %c0_53 = arith.constant 0 : index
    %c0_54 = arith.constant 0 : index
    %134 = vector.load %arg15[%c0_52, %c3, %c0_53, %c0_54] : memref<1x4x8x8xbf16, #tpu.memory_space<vmem>>, vector<1x1x8x8xbf16>
    %135 = vector.shape_cast %134 : vector<1x1x8x8xbf16> to vector<8x8xbf16>
    %136 = vector.shape_cast %133 : vector<8x8xbf16> to vector<1x1x8x8xbf16>
    tpu.vector_store %arg15[%c0_52, %c3, %c0_53, %c0_54], %136 {strides = array<i32>} : memref<1x4x8x8xbf16, #tpu.memory_space<vmem>>, vector<1x1x8x8xbf16>,
    %137 = arith.truncf %132 : vector<8x8xf32> to vector<8x8xbf16>
    %cst_55 = arith.constant dense<0.000000e+00> : vector<8x16xf32>
    %138 = tpu.matmul %137, %117, %cst_55 {dimension_numbers = #tpu.dot_dimension_numbers<[1], [0], [0], [1], [0, 0, 1, 1], [], []>} : vector<8x8xbf16>, vector<8x16xbf16>, vector<8x16xf32> -> vector<8x16xf32>
    %139 = arith.truncf %138 : vector<8x16xf32> to vector<8x16xbf16>
    %c0_56 = arith.constant 0 : index
    %c48 = arith.constant 48 : index
    %140 = vector.load %arg16[%c0_56, %c48] : memref<8x64xbf16, #tpu.memory_space<vmem>>, vector<8x16xbf16>
    tpu.vector_store %arg16[%c0_56, %c48], %139 {strides = array<i32>} : memref<8x64xbf16, #tpu.memory_space<vmem>>, vector<8x16xbf16>,
    %c0_57 = arith.constant 0 : index
    %c0_58 = arith.constant 0 : index
    %141 = vector.load %arg16[%c0_57, %c0_58] : memref<8x64xbf16, #tpu.memory_space<vmem>>, vector<8x64xbf16>
    %c0_59 = arith.constant 0 : index
    %c0_60 = arith.constant 0 : index
    %142 = vector.load %arg6[%c0_59, %c0_60] : memref<64x64xbf16, #tpu.memory_space<vmem>>, vector<64x64xbf16>
    %cst_61 = arith.constant dense<0.000000e+00> : vector<8x64xf32>
    %143 = tpu.matmul %141, %142, %cst_61 {dimension_numbers = #tpu.dot_dimension_numbers<[1], [0], [0], [1], [0, 0, 1, 1], [], []>} : vector<8x64xbf16>, vector<64x64xbf16>, vector<8x64xf32> -> vector<8x64xf32>
    %144 = arith.addf %2, %143 : vector<8x64xf32>
    %c0_62 = arith.constant 0 : index
    %c0_63 = arith.constant 0 : index
    %145 = vector.load %arg7[%c0_62, %c0_63] : memref<1x64xf32, #tpu.memory_space<vmem>>, vector<1x64xf32>
    %146 = vector.broadcast %145 : vector<1x64xf32> to vector<8x64xf32>
    %147 = arith.addf %144, %146 : vector<8x64xf32>
    %cst_64 = arith.constant dense<0.000000e+00> : vector<8xf32>
    %148 = vector.multi_reduction <add>, %147, %cst_64 [1] : vector<8x64xf32> to vector<8xf32>
    %149 = vector.shape_cast %148 : vector<8xf32> to vector<8x1xf32>
    %cst_65 = arith.constant 6.400000e+01 : f32
    %150 = vector.broadcast %cst_65 : f32 to vector<8x1xf32>
    %151 = arith.divf %149, %150 : vector<8x1xf32>
    %152 = vector.broadcast %151 : vector<8x1xf32> to vector<8x64xf32>
    %153 = arith.subf %147, %152 : vector<8x64xf32>
    %154 = arith.mulf %153, %153 : vector<8x64xf32>
    %cst_66 = arith.constant dense<0.000000e+00> : vector<8xf32>
    %155 = vector.multi_reduction <add>, %154, %cst_66 [1] : vector<8x64xf32> to vector<8xf32>
    %156 = vector.shape_cast %155 : vector<8xf32> to vector<8x1xf32>
    %cst_67 = arith.constant 6.400000e+01 : f32
    %157 = vector.broadcast %cst_67 : f32 to vector<8x1xf32>
    %158 = arith.divf %156, %157 : vector<8x1xf32>
    %159 = vector.broadcast %151 : vector<8x1xf32> to vector<8x64xf32>
    %160 = arith.subf %147, %159 : vector<8x64xf32>
    %cst_68 = arith.constant 9.99999974E-6 : f32
    %161 = vector.broadcast %cst_68 : f32 to vector<8x1xf32>
    %162 = arith.addf %158, %161 : vector<8x1xf32>
    %163 = math.rsqrt %162 : vector<8x1xf32>
    %164 = vector.broadcast %163 : vector<8x1xf32> to vector<8x64xf32>
    %165 = arith.mulf %160, %164 : vector<8x64xf32>
    %c0_69 = arith.constant 0 : index
    %c0_70 = arith.constant 0 : index
    %166 = vector.load %arg8[%c0_69, %c0_70] : memref<1x64xf32, #tpu.memory_space<vmem>>, vector<1x64xf32>
    %167 = vector.broadcast %166 : vector<1x64xf32> to vector<8x64xf32>
    %168 = arith.mulf %165, %167 : vector<8x64xf32>
    %c0_71 = arith.constant 0 : index
    %c0_72 = arith.constant 0 : index
    %169 = vector.load %arg9[%c0_71, %c0_72] : memref<1x64xf32, #tpu.memory_space<vmem>>, vector<1x64xf32>
    %170 = vector.broadcast %169 : vector<1x64xf32> to vector<8x64xf32>
    %171 = arith.addf %168, %170 : vector<8x64xf32>
    %172 = arith.truncf %171 : vector<8x64xf32> to vector<8x64xbf16>
    %c0_73 = arith.constant 0 : index
    %c0_74 = arith.constant 0 : index
    %173 = vector.load %arg10[%c0_73, %c0_74] : memref<64x128xbf16, #tpu.memory_space<vmem>>, vector<64x128xbf16>
    %cst_75 = arith.constant dense<0.000000e+00> : vector<8x128xf32>
    %174 = tpu.matmul %172, %173, %cst_75 {dimension_numbers = #tpu.dot_dimension_numbers<[1], [0], [0], [1], [0, 0, 1, 1], [], []>} : vector<8x64xbf16>, vector<64x128xbf16>, vector<8x128xf32> -> vector<8x128xf32>
    %c0_76 = arith.constant 0 : index
    %c0_77 = arith.constant 0 : index
    %175 = vector.load %arg11[%c0_76, %c0_77] : memref<1x128xf32, #tpu.memory_space<vmem>>, vector<1x128xf32>
    %176 = vector.broadcast %175 : vector<1x128xf32> to vector<8x128xf32>
    %177 = arith.addf %174, %176 : vector<8x128xf32>
    %178 = arith.mulf %177, %177 : vector<8x128xf32>
    %179 = arith.mulf %177, %178 : vector<8x128xf32>
    %cst_78 = arith.constant 4.471500e-02 : f32
    %180 = vector.broadcast %cst_78 : f32 to vector<8x128xf32>
    %181 = arith.mulf %180, %179 : vector<8x128xf32>
    %182 = arith.addf %177, %181 : vector<8x128xf32>
    %cst_79 = arith.constant 0.797884583 : f32
    %183 = vector.broadcast %cst_79 : f32 to vector<8x128xf32>
    %184 = arith.mulf %183, %182 : vector<8x128xf32>
    %185 = math.tanh %184 : vector<8x128xf32>
    %cst_80 = arith.constant 1.000000e+00 : f32
    %186 = vector.broadcast %cst_80 : f32 to vector<8x128xf32>
    %187 = arith.addf %186, %185 : vector<8x128xf32>
    %cst_81 = arith.constant 5.000000e-01 : f32
    %188 = vector.broadcast %cst_81 : f32 to vector<8x128xf32>
    %189 = arith.mulf %188, %187 : vector<8x128xf32>
    %190 = arith.mulf %177, %189 : vector<8x128xf32>
    %191 = arith.truncf %190 : vector<8x128xf32> to vector<8x128xbf16>
    %c0_82 = arith.constant 0 : index
    %c0_83 = arith.constant 0 : index
    %192 = vector.load %arg12[%c0_82, %c0_83] : memref<128x64xbf16, #tpu.memory_space<vmem>>, vector<128x64xbf16>
    %cst_84 = arith.constant dense<0.000000e+00> : vector<8x64xf32>
    %193 = tpu.matmul %191, %192, %cst_84 {dimension_numbers = #tpu.dot_dimension_numbers<[1], [0], [0], [1], [0, 0, 1, 1], [], []>} : vector<8x128xbf16>, vector<128x64xbf16>, vector<8x64xf32> -> vector<8x64xf32>
    %c0_85 = arith.constant 0 : index
    %c0_86 = arith.constant 0 : index
    %194 = vector.load %arg13[%c0_85, %c0_86] : memref<1x64xf32, #tpu.memory_space<vmem>>, vector<1x64xf32>
    %195 = vector.broadcast %194 : vector<1x64xf32> to vector<8x64xf32>
    %196 = arith.addf %193, %195 : vector<8x64xf32>
    %197 = arith.addf %147, %196 : vector<8x64xf32>
    %198 = arith.truncf %197 : vector<8x64xf32> to vector<8x64xbf16>
    %c0_87 = arith.constant 0 : index
    %c0_88 = arith.constant 0 : index
    %c0_89 = arith.constant 0 : index
    %199 = vector.load %arg14[%c0_87, %c0_88, %c0_89] : memref<1x8x64xbf16, #tpu.memory_space<vmem>>, vector<1x8x64xbf16>
    %200 = vector.shape_cast %199 : vector<1x8x64xbf16> to vector<8x64xbf16>
    %201 = vector.shape_cast %198 : vector<8x64xbf16> to vector<1x8x64xbf16>
    tpu.vector_store %arg14[%c0_87, %c0_88, %c0_89], %201 {strides = array<i32>} : memref<1x8x64xbf16, #tpu.memory_space<vmem>>, vector<1x8x64xbf16>,
    return
  }
  func.func @transform_0(%arg0: i32) -> (i32, i32, i32) {
    %c0_i32 = arith.constant 0 : i32
    %c0_i32_0 = arith.constant 0 : i32
    %c0_i32_1 = arith.constant 0 : i32
    return %arg0, %c0_i32, %c0_i32_0 : i32, i32, i32
  }
  func.func @transform_1(%arg0: i32) -> (i32, i32) {
    %c0_i32 = arith.constant 0 : i32
    %c0_i32_0 = arith.constant 0 : i32
    %c0_i32_1 = arith.constant 0 : i32
    return %c0_i32, %c0_i32_0 : i32, i32
  }
  func.func @transform_2(%arg0: i32) -> (i32, i32) {
    %c0_i32 = arith.constant 0 : i32
    %c0_i32_0 = arith.constant 0 : i32
    %c0_i32_1 = arith.constant 0 : i32
    return %c0_i32, %c0_i32_0 : i32, i32
  }
  func.func @transform_3(%arg0: i32) -> (i32, i32) {
    %c0_i32 = arith.constant 0 : i32
    %c0_i32_0 = arith.constant 0 : i32
    %c0_i32_1 = arith.constant 0 : i32
    return %c0_i32, %c0_i32_0 : i32, i32
  }
  func.func @transform_4(%arg0: i32) -> (i32, i32) {
    %c0_i32 = arith.constant 0 : i32
    %c0_i32_0 = arith.constant 0 : i32
    %c0_i32_1 = arith.constant 0 : i32
    return %c0_i32, %c0_i32_0 : i32, i32
  }
  func.func @transform_5(%arg0: i32) -> (i32, i32) {
    %c0_i32 = arith.constant 0 : i32
    %c0_i32_0 = arith.constant 0 : i32
    %c0_i32_1 = arith.constant 0 : i32
    return %c0_i32, %c0_i32_0 : i32, i32
  }
  func.func @transform_6(%arg0: i32) -> (i32, i32) {
    %c0_i32 = arith.constant 0 : i32
    %c0_i32_0 = arith.constant 0 : i32
    %c0_i32_1 = arith.constant 0 : i32
    return %c0_i32, %c0_i32_0 : i32, i32
  }
  func.func @transform_7(%arg0: i32) -> (i32, i32) {
    %c0_i32 = arith.constant 0 : i32
    %c0_i32_0 = arith.constant 0 : i32
    %c0_i32_1 = arith.constant 0 : i32
    return %c0_i32, %c0_i32_0 : i32, i32
  }
  func.func @transform_8(%arg0: i32) -> (i32, i32) {
    %c0_i32 = arith.constant 0 : i32
    %c0_i32_0 = arith.constant 0 : i32
    %c0_i32_1 = arith.constant 0 : i32
    return %c0_i32, %c0_i32_0 : i32, i32
  }
  func.func @transform_9(%arg0: i32) -> (i32, i32) {
    %c0_i32 = arith.constant 0 : i32
    %c0_i32_0 = arith.constant 0 : i32
    %c0_i32_1 = arith.constant 0 : i32
    return %c0_i32, %c0_i32_0 : i32, i32
  }
  func.func @transform_10(%arg0: i32) -> (i32, i32) {
    %c0_i32 = arith.constant 0 : i32
    %c0_i32_0 = arith.constant 0 : i32
    %c0_i32_1 = arith.constant 0 : i32
    return %c0_i32, %c0_i32_0 : i32, i32
  }
  func.func @transform_11(%arg0: i32) -> (i32, i32) {
    %c0_i32 = arith.constant 0 : i32
    %c0_i32_0 = arith.constant 0 : i32
    %c0_i32_1 = arith.constant 0 : i32
    return %c0_i32, %c0_i32_0 : i32, i32
  }
  func.func @transform_12(%arg0: i32) -> (i32, i32) {
    %c0_i32 = arith.constant 0 : i32
    %c0_i32_0 = arith.constant 0 : i32
    %c0_i32_1 = arith.constant 0 : i32
    return %c0_i32, %c0_i32_0 : i32, i32
  }
  func.func @transform_13(%arg0: i32) -> (i32, i32, i32) {
    %c0_i32 = arith.constant 0 : i32
    %c0_i32_0 = arith.constant 0 : i32
    %c0_i32_1 = arith.constant 0 : i32
    return %arg0, %c0_i32, %c0_i32_0 : i32, i32, i32
  }
  func.func @transform_14(%arg0: i32) -> (i32, i32, i32, i32) {
    %c0_i32 = arith.constant 0 : i32
    %c0_i32_0 = arith.constant 0 : i32
    %c0_i32_1 = arith.constant 0 : i32
    %c0_i32_2 = arith.constant 0 : i32
    return %arg0, %c0_i32, %c0_i32_0, %c0_i32_1 : i32, i32, i32, i32
  }
}

module attributes {stable_mosaic.version = 11 : i64} {
  func.func @epilogue_kernel(%arg0: i32, %arg1: i32, %arg2: memref<16x64xbf16, #tpu.memory_space<vmem>>, %arg3: memref<64x64xbf16, #tpu.memory_space<vmem>>, %arg4: memref<1x64xf32, #tpu.memory_space<vmem>>, %arg5: memref<1x64xf32, #tpu.memory_space<vmem>>, %arg6: memref<1x64xf32, #tpu.memory_space<vmem>>, %arg7: memref<64x128xbf16, #tpu.memory_space<vmem>>, %arg8: memref<16x128xf32, #tpu.memory_space<vmem>>) attributes {dimension_semantics = [#tpu.dimension_semantics<parallel>, #tpu.dimension_semantics<parallel>], iteration_bounds = array<i64: 1, 2>, scalar_prefetch = 0 : i64, scratch_operands = 0 : i64, tpu.core_type = #tpu.core_type<tc>, window_params = [{transform_indices = @transform_0, window_bounds = array<i64: 16, 64>}, {pipeline_mode = #tpu.pipeline_mode<synchronous>, transform_indices = @transform_1, window_bounds = array<i64: 64, 64>}, {pipeline_mode = #tpu.pipeline_mode<synchronous>, transform_indices = @transform_2, window_bounds = array<i64: 1, 64>}, {pipeline_mode = #tpu.pipeline_mode<synchronous>, transform_indices = @transform_3, window_bounds = array<i64: 1, 64>}, {pipeline_mode = #tpu.pipeline_mode<synchronous>, transform_indices = @transform_4, window_bounds = array<i64: 1, 64>}, {transform_indices = @transform_5, window_bounds = array<i64: 64, 128>}, {transform_indices = @transform_6, window_bounds = array<i64: 16, 128>}]} {
    %c0 = arith.constant 0 : index
    %c0_0 = arith.constant 0 : index
    %0 = vector.load %arg2[%c0, %c0_0] : memref<16x64xbf16, #tpu.memory_space<vmem>>, vector<16x64xbf16>
    %c0_1 = arith.constant 0 : index
    %c0_2 = arith.constant 0 : index
    %1 = vector.load %arg3[%c0_1, %c0_2] : memref<64x64xbf16, #tpu.memory_space<vmem>>, vector<64x64xbf16>
    %cst = arith.constant dense<0.000000e+00> : vector<16x64xf32>
    %2 = tpu.matmul %0, %1, %cst {dimension_numbers = #tpu.dot_dimension_numbers<[1], [0], [0], [1], [0, 0, 1, 1], [], []>} : vector<16x64xbf16>, vector<64x64xbf16>, vector<16x64xf32> -> vector<16x64xf32>
    %c0_3 = arith.constant 0 : index
    %c0_4 = arith.constant 0 : index
    %3 = vector.load %arg4[%c0_3, %c0_4] : memref<1x64xf32, #tpu.memory_space<vmem>>, vector<1x64xf32>
    %4 = vector.broadcast %3 : vector<1x64xf32> to vector<16x64xf32>
    %5 = arith.addf %2, %4 : vector<16x64xf32>
    %cst_5 = arith.constant dense<0.000000e+00> : vector<16xf32>
    %6 = vector.multi_reduction <add>, %5, %cst_5 [1] : vector<16x64xf32> to vector<16xf32>
    %7 = vector.shape_cast %6 : vector<16xf32> to vector<16x1xf32>
    %cst_6 = arith.constant 6.400000e+01 : f32
    %8 = vector.broadcast %cst_6 : f32 to vector<16x1xf32>
    %9 = arith.divf %7, %8 : vector<16x1xf32>
    %10 = vector.broadcast %9 : vector<16x1xf32> to vector<16x64xf32>
    %11 = arith.subf %5, %10 : vector<16x64xf32>
    %12 = arith.mulf %11, %11 : vector<16x64xf32>
    %cst_7 = arith.constant dense<0.000000e+00> : vector<16xf32>
    %13 = vector.multi_reduction <add>, %12, %cst_7 [1] : vector<16x64xf32> to vector<16xf32>
    %14 = vector.shape_cast %13 : vector<16xf32> to vector<16x1xf32>
    %cst_8 = arith.constant 6.400000e+01 : f32
    %15 = vector.broadcast %cst_8 : f32 to vector<16x1xf32>
    %16 = arith.divf %14, %15 : vector<16x1xf32>
    %17 = vector.broadcast %9 : vector<16x1xf32> to vector<16x64xf32>
    %18 = arith.subf %5, %17 : vector<16x64xf32>
    %cst_9 = arith.constant 9.99999974E-6 : f32
    %19 = vector.broadcast %cst_9 : f32 to vector<16x1xf32>
    %20 = arith.addf %16, %19 : vector<16x1xf32>
    %21 = math.rsqrt %20 : vector<16x1xf32>
    %22 = vector.broadcast %21 : vector<16x1xf32> to vector<16x64xf32>
    %23 = arith.mulf %18, %22 : vector<16x64xf32>
    %c0_10 = arith.constant 0 : index
    %c0_11 = arith.constant 0 : index
    %24 = vector.load %arg5[%c0_10, %c0_11] : memref<1x64xf32, #tpu.memory_space<vmem>>, vector<1x64xf32>
    %25 = vector.broadcast %24 : vector<1x64xf32> to vector<16x64xf32>
    %26 = arith.mulf %23, %25 : vector<16x64xf32>
    %c0_12 = arith.constant 0 : index
    %c0_13 = arith.constant 0 : index
    %27 = vector.load %arg6[%c0_12, %c0_13] : memref<1x64xf32, #tpu.memory_space<vmem>>, vector<1x64xf32>
    %28 = vector.broadcast %27 : vector<1x64xf32> to vector<16x64xf32>
    %29 = arith.addf %26, %28 : vector<16x64xf32>
    %30 = arith.truncf %29 : vector<16x64xf32> to vector<16x64xbf16>
    %c0_14 = arith.constant 0 : index
    %c0_15 = arith.constant 0 : index
    %31 = vector.load %arg7[%c0_14, %c0_15] : memref<64x128xbf16, #tpu.memory_space<vmem>>, vector<64x128xbf16>
    %cst_16 = arith.constant dense<0.000000e+00> : vector<16x128xf32>
    %32 = tpu.matmul %30, %31, %cst_16 {dimension_numbers = #tpu.dot_dimension_numbers<[1], [0], [0], [1], [0, 0, 1, 1], [], []>} : vector<16x64xbf16>, vector<64x128xbf16>, vector<16x128xf32> -> vector<16x128xf32>
    %c0_17 = arith.constant 0 : index
    %c0_18 = arith.constant 0 : index
    %33 = vector.load %arg8[%c0_17, %c0_18] : memref<16x128xf32, #tpu.memory_space<vmem>>, vector<16x128xf32>
    tpu.vector_store %arg8[%c0_17, %c0_18], %32 {strides = array<i32>} : memref<16x128xf32, #tpu.memory_space<vmem>>, vector<16x128xf32>,
    return
  }
  func.func @transform_0(%arg0: i32, %arg1: i32) -> (i32, i32) {
    %c0_i32 = arith.constant 0 : i32
    %c0_i32_0 = arith.constant 0 : i32
    return %arg0, %c0_i32 : i32, i32
  }
  func.func @transform_1(%arg0: i32, %arg1: i32) -> (i32, i32) {
    %c0_i32 = arith.constant 0 : i32
    %c0_i32_0 = arith.constant 0 : i32
    %c0_i32_1 = arith.constant 0 : i32
    return %c0_i32, %c0_i32_0 : i32, i32
  }
  func.func @transform_2(%arg0: i32, %arg1: i32) -> (i32, i32) {
    %c0_i32 = arith.constant 0 : i32
    %c0_i32_0 = arith.constant 0 : i32
    %c0_i32_1 = arith.constant 0 : i32
    return %c0_i32, %c0_i32_0 : i32, i32
  }
  func.func @transform_3(%arg0: i32, %arg1: i32) -> (i32, i32) {
    %c0_i32 = arith.constant 0 : i32
    %c0_i32_0 = arith.constant 0 : i32
    %c0_i32_1 = arith.constant 0 : i32
    return %c0_i32, %c0_i32_0 : i32, i32
  }
  func.func @transform_4(%arg0: i32, %arg1: i32) -> (i32, i32) {
    %c0_i32 = arith.constant 0 : i32
    %c0_i32_0 = arith.constant 0 : i32
    %c0_i32_1 = arith.constant 0 : i32
    return %c0_i32, %c0_i32_0 : i32, i32
  }
  func.func @transform_5(%arg0: i32, %arg1: i32) -> (i32, i32) {
    %c0_i32 = arith.constant 0 : i32
    %c0_i32_0 = arith.constant 0 : i32
    return %c0_i32, %arg1 : i32, i32
  }
  func.func @transform_6(%arg0: i32, %arg1: i32) -> (i32, i32) {
    %c0_i32 = arith.constant 0 : i32
    return %arg0, %arg1 : i32, i32
  }
}

</mosaic_0001>

<llo_original>
// kernel: tpu_custom_call.1
$region0: #{tpu_custom_call.1}
  #allocation0 [shape = 'u32[]', space=smem, size = 0x4, offset = 0x4, fixed_abs, tag = 'smem constant byte address 0x4 - core index']
  #allocation1 [shape = 'u32[144,128]{1,0:T(1,128)}', space=vmem, size = 0x12000, scoped, tag = 'internal scratch']
  %s0 = inlined_call_operand.hbm [shape: f32[8,128], index: 0, kind: input, shape index: {}]
  %s1 = inlined_call_operand.hbm [shape: f32[8,128], index: 1, kind: output, shape index: {}]
  %s2 = sld [smem:[#allocation0]]
  $region41: #{tpu_custom_call.1} parent=0
    _
  %s4 = ssub.s32 1, %s2
  %s5 = scalar_select 0, %s4, %s2
  $region1: #{tpu_custom_call.1} parent=0
    #allocation2 [shape = 'u8[4096]{0}', space=vmem, size = 0x1000, scoped, tag = 'input window, operand 0, single buffered']
    #allocation3 [shape = 's32[2]{0}', space=sflag, size = 0x8, scoped, tag = 'scoped memory for tpu_custom_call.1']
    #allocation4 [shape = 's32[2]{0}', space=sflag, size = 0x8, scoped, tag = 'scoped memory for tpu_custom_call.1']
    #allocation5 [shape = 'u8[4096]{0}', space=vmem, size = 0x1000, scoped, tag = 'output window, operand 0, single buffered']
    %6 = vsyncpa [#allocation3], 0
    %7 = vsyncpa [#allocation4], 0
    loop: start=0, step=1, limit=4
    $region2: #{tpu_custom_call.1} parent=1 // loop_pre_header
      _
    $region3: #{tpu_custom_call.1} parent=1 // loop_header
      %s9 = sphi 0, %s13
      %p10 = scmp.ge.s32.totalorder %s9, 4
      %s17 = sphi 0, %s17
      %s19 = sphi 0, %s17
      %s20 = sphi 0, %s19
      %s34 = sphi 0, %s20
      %s38 = sphi 0, %s38
      %s40 = sphi 0, %s38
      %s41 = sphi 0, %s40
      %s55 = sphi 0, %s41
    $region4: #{tpu_custom_call.1} parent=1 // loop_header_branch
      %12 = sbr.rel (%p10) target = $region8
    $region5: #{tpu_custom_call.1} parent=1 // loop_body
      %s14 = ssub.s32 %s9, 1
      %s15 = ssub.s32 %s9, 2
      %s16 = sadd.s32 %s9, 1
      %s18 = sadd.s32 %s17, 1
      %p21 = scmp.eq.s32.totalorder %s9, 1
      %p22 = scmp.ne.s32.totalorder %s17, %s19
      %p23 = scmp.eq.s32.totalorder %s9, 0
      %p24 = por %p22, %p23
      %p25 = scmp.ne.s32.totalorder %s17, %s19
      %p26 = scmp.eq.s32.totalorder %s14, 1
      %p27 = por %p25, %p26
      %p28 = scmp.ne.s32.totalorder %s19, %s20
      %p29 = scmp.eq.s32.totalorder %s14, 0
      %p30 = por %p28, %p29
      %p31 = scmp.ne.s32.totalorder %s19, %s20
      %p32 = scmp.eq.s32.totalorder %s15, 1
      %p33 = por %p31, %p32
      %p35 = scmp.ne.s32.totalorder %s20, %s34
      %p36 = scmp.eq.s32.totalorder %s15, 0
      %p37 = por %p35, %p36
      %s39 = sadd.s32 %s38, 1
      %p42 = scmp.eq.s32.totalorder %s9, 1
      %p43 = scmp.ne.s32.totalorder %s38, %s40
      %p44 = scmp.eq.s32.totalorder %s9, 0
      %p45 = por %p43, %p44
      %p46 = scmp.ne.s32.totalorder %s38, %s40
      %p47 = scmp.eq.s32.totalorder %s14, 1
      %p48 = por %p46, %p47
      %p49 = scmp.ne.s32.totalorder %s40, %s41
      %p50 = scmp.eq.s32.totalorder %s14, 0
      %p51 = por %p49, %p50
      %p52 = scmp.ne.s32.totalorder %s40, %s41
      %p53 = scmp.eq.s32.totalorder %s15, 1
      %p54 = por %p52, %p53
      %p56 = scmp.ne.s32.totalorder %s41, %s55
      %p57 = scmp.eq.s32.totalorder %s15, 0
      %p58 = por %p56, %p57
      %p59 = scmp.le.s32.totalorder 1, %s9
      %p60 = scmp.lt.s32.totalorder %s9, 3
      %p61 = pnand %p59, %p60
      %p62 = pneg %p61
      // Predicated region
      $region9: #{tpu_custom_call.1} parent=5 // pred_check
        _
      $region10: #{tpu_custom_call.1} parent=5 // pred_check_branch
        %64 = sbr.rel (%p61) target = $region12
      $region11: #{tpu_custom_call.1} parent=5 // pred_region
        %s65 = ssub.s32 %s9, 1
        // Predicated region
        $region13: #{tpu_custom_call.1} parent=11 // pred_check
          %p66 = pneg %p30
        $region14: #{tpu_custom_call.1} parent=11 // pred_check_branch
          %68 = sbr.rel (%p66) target = $region16
        $region15: #{tpu_custom_call.1} parent=11 // pred_region
          %s70 = ssub.s32 128, 128
          %71 = vsyncadd [#allocation3], %s70
          %s73 = sshll.u32 [#allocation2], 4
          %s74 = int_to_ptr.vmem [resolvable:$true] %s73
          %76 = dma.hbm_to_vmem [thread:$0]  %s0, 128, %s74, [#allocation3]
        $region16: #{tpu_custom_call.1} parent=11 // pred_fallthru
          _
      $region12: #{tpu_custom_call.1} parent=5 // pred_fallthru
        _
      %p77 = scmp.lt.s32.totalorder %s9, 2
      // Predicated region
      $region17: #{tpu_custom_call.1} parent=5 // pred_check
        %p78 = pneg %p77
      $region18: #{tpu_custom_call.1} parent=5 // pred_check_branch
        %80 = sbr.rel (%p78) target = $region20
      $region19: #{tpu_custom_call.1} parent=5 // pred_region
        _
      $region20: #{tpu_custom_call.1} parent=5 // pred_fallthru
        _
      %p81 = scmp.le.s32.totalorder 1, %s9
      %p82 = scmp.lt.s32.totalorder %s9, 3
      %p83 = pnand %p81, %p82
      %p84 = pneg %p83
      // Predicated region
      $region21: #{tpu_custom_call.1} parent=5 // pred_check
        _
      $region22: #{tpu_custom_call.1} parent=5 // pred_check_branch
        %86 = sbr.rel (%p83) target = $region24
      $region23: #{tpu_custom_call.1} parent=5 // pred_region
        %s87 = ssub.s32 %s9, 1
        // Predicated region
        $region25: #{tpu_custom_call.1} parent=23 // pred_check
          %p88 = pneg %p30
        $region26: #{tpu_custom_call.1} parent=23 // pred_check_branch
          %90 = sbr.rel (%p88) target = $region28
        $region27: #{tpu_custom_call.1} parent=23 // pred_region
          %91 = dma.done [#allocation3], 128
        $region28: #{tpu_custom_call.1} parent=23 // pred_fallthru
          _
        %p92 = pneg %p30
        %p93 = pneg %p27
        %p94 = pneg %p51
        %p95 = pneg %p48
        %v96 = vld [vmem:[#allocation2] sm:$0xff]
        %97 = vst [vmem:[#allocation5] sm:$0xff] %v96
        // Predicated region
        $region29: #{tpu_custom_call.1} parent=23 // pred_check
          %p98 = pneg %p48
        $region30: #{tpu_custom_call.1} parent=23 // pred_check_branch
          %100 = sbr.rel (%p98) target = $region32
        $region31: #{tpu_custom_call.1} parent=23 // pred_region
          %s102 = ssub.s32 128, 128
          %103 = vsyncadd [#allocation4], %s102
          %s105 = sshll.u32 [#allocation5], 4
          %s106 = int_to_ptr.vmem [resolvable:$true] %s105
          %108 = dma.vmem_to_hbm [thread:$0]  %s106, 128, %s1, [#allocation4]
        $region32: #{tpu_custom_call.1} parent=23 // pred_fallthru
          _
        // Predicated region
        $region33: #{tpu_custom_call.1} parent=23 // pred_check
          %p109 = pneg %p48
        $region34: #{tpu_custom_call.1} parent=23 // pred_check_branch
          %111 = sbr.rel (%p109) target = $region36
        $region35: #{tpu_custom_call.1} parent=23 // pred_region
          %112 = dma.done [#allocation4], 128
        $region36: #{tpu_custom_call.1} parent=23 // pred_fallthru
          _
      $region24: #{tpu_custom_call.1} parent=5 // pred_fallthru
        _
      %p113 = scmp.le.s32.totalorder 2, %s9
      // Predicated region
      $region37: #{tpu_custom_call.1} parent=5 // pred_check
        %p114 = pneg %p113
      $region38: #{tpu_custom_call.1} parent=5 // pred_check_branch
        %116 = sbr.rel (%p114) target = $region40
      $region39: #{tpu_custom_call.1} parent=5 // pred_region
        %s117 = ssub.s32 %s9, 2
      $region40: #{tpu_custom_call.1} parent=5 // pred_fallthru
        _
    $region6: #{tpu_custom_call.1} parent=1 // loop_footer
      %s13 = sadd.s32 1, %s9
    $region7: #{tpu_custom_call.1} parent=1 // loop_footer_branch
      %8 = sbr.rel target = $region3
    $region8: #{tpu_custom_call.1} parent=1 // loop_exit
      _
    %118 = vsyncpa [#allocation3], 1
    %s119 = scalar_lea.sflag [#allocation3], 1
    %120 = vsyncpa %s119, 1
    %121 = vsyncpa [#allocation4], 1
    %s122 = scalar_lea.sflag [#allocation4], 1
    %123 = vsyncpa %s122, 1

// kernel: transformer_forward.6
$region0: #{transformer_forward.6}
  #allocation0 [shape = 'u32[]', space=smem, size = 0x4, offset = 0x4, fixed_abs, tag = 'smem constant byte address 0x4 - core index']
  #allocation1 [shape = 'u32[144,128]{1,0:T(1,128)}', space=vmem, size = 0x12000, scoped, tag = 'internal scratch']
  %s0 = inlined_call_operand.vmem [shape: f32[16,64], index: 0, kind: input, shape index: {}]
  %s1 = inlined_call_operand.vmem [shape: bf16[64,64], index: 1, kind: input, shape index: {}]
  %s2 = inlined_call_operand.vmem [shape: f32[1,64], index: 2, kind: input, shape index: {}]
  %s3 = inlined_call_operand.vmem [shape: bf16[16,64], index: 3, kind: output, shape index: {}]
  %s4 = sld [smem:[#allocation0]]
  $region45: #{transformer_forward.6} parent=0
    _
  %s6 = ssub.s32 1, %s4
  %s7 = scalar_select 0, %s6, %s4
  loop: start=0, step=1, limit=4
  $region2: #{transformer_forward.6} parent=0 // loop_pre_header
    _
  $region3: #{transformer_forward.6} parent=0 // loop_header
    %s9 = sphi 0, %s13
    %p10 = scmp.ge.s32.totalorder %s9, 4
    %s19 = sphi 0, %s21
    %s22 = sphi 0, %s19
    %s23 = sphi 0, %s22
    %s39 = sphi 0, %s23
    %s43 = sphi 0, %s43
    %s45 = sphi 0, %s43
    %s46 = sphi 0, %s45
    %s60 = sphi 0, %s46
    %s64 = sphi 0, %s64
    %s66 = sphi 0, %s64
    %s67 = sphi 0, %s66
    %s81 = sphi 0, %s67
    %s87 = sphi 0, %s89
    %s90 = sphi 0, %s87
    %s91 = sphi 0, %s90
    %s107 = sphi 0, %s91
  $region4: #{transformer_forward.6} parent=0 // loop_header_branch
    %12 = sbr.rel (%p10) target = $region8
  $region5: #{transformer_forward.6} parent=0 // loop_body
    %s14 = ssub.s32 %s9, 1
    %s15 = ssub.s32 %s9, 2
    %s16 = sadd.s32 %s9, 1
    %s17 = ssub.s32 %s9, %s16
    %p18 = scmp.eq.s32.totalorder %s17, 0
    %s20 = sadd.s32 %s19, 1
    %s21 = scalar_select %p18, %s19, %s20
    %p24 = pneg %p18
    %p25 = scmp.eq.s32.totalorder %s9, 1
    %p26 = por %p24, %p25
    %p27 = scmp.ne.s32.totalorder %s19, %s22
    %p28 = scmp.eq.s32.totalorder %s9, 0
    %p29 = por %p27, %p28
    %p30 = scmp.ne.s32.totalorder %s19, %s22
    %p31 = scmp.eq.s32.totalorder %s14, 1
    %p32 = por %p30, %p31
    %p33 = scmp.ne.s32.totalorder %s22, %s23
    %p34 = scmp.eq.s32.totalorder %s14, 0
    %p35 = por %p33, %p34
    %p36 = scmp.ne.s32.totalorder %s22, %s23
    %p37 = scmp.eq.s32.totalorder %s15, 1
    %p38 = por %p36, %p37
    %p40 = scmp.ne.s32.totalorder %s23, %s39
    %p41 = scmp.eq.s32.totalorder %s15, 0
    %p42 = por %p40, %p41
    %s44 = sadd.s32 %s43, 1
    %p47 = scmp.eq.s32.totalorder %s9, 1
    %p48 = scmp.ne.s32.totalorder %s43, %s45
    %p49 = scmp.eq.s32.totalorder %s9, 0
    %p50 = por %p48, %p49
    %p51 = scmp.ne.s32.totalorder %s43, %s45
    %p52 = scmp.eq.s32.totalorder %s14, 1
    %p53 = por %p51, %p52
    %p54 = scmp.ne.s32.totalorder %s45, %s46
    %p55 = scmp.eq.s32.totalorder %s14, 0
    %p56 = por %p54, %p55
    %p57 = scmp.ne.s32.totalorder %s45, %s46
    %p58 = scmp.eq.s32.totalorder %s15, 1
    %p59 = por %p57, %p58
    %p61 = scmp.ne.s32.totalorder %s46, %s60
    %p62 = scmp.eq.s32.totalorder %s15, 0
    %p63 = por %p61, %p62
    %s65 = sadd.s32 %s64, 1
    %p68 = scmp.eq.s32.totalorder %s9, 1
    %p69 = scmp.ne.s32.totalorder %s64, %s66
    %p70 = scmp.eq.s32.totalorder %s9, 0
    %p71 = por %p69, %p70
    %p72 = scmp.ne.s32.totalorder %s64, %s66
    %p73 = scmp.eq.s32.totalorder %s14, 1
    %p74 = por %p72, %p73
    %p75 = scmp.ne.s32.totalorder %s66, %s67
    %p76 = scmp.eq.s32.totalorder %s14, 0
    %p77 = por %p75, %p76
    %p78 = scmp.ne.s32.totalorder %s66, %s67
    %p79 = scmp.eq.s32.totalorder %s15, 1
    %p80 = por %p78, %p79
    %p82 = scmp.ne.s32.totalorder %s67, %s81
    %p83 = scmp.eq.s32.totalorder %s15, 0
    %p84 = por %p82, %p83
    %s85 = ssub.s32 %s9, %s16
    %p86 = scmp.eq.s32.totalorder %s85, 0
    %s88 = sadd.s32 %s87, 1
    %s89 = scalar_select %p86, %s87, %s88
    %p92 = pneg %p86
    %p93 = scmp.eq.s32.totalorder %s9, 1
    %p94 = por %p92, %p93
    %p95 = scmp.ne.s32.totalorder %s87, %s90
    %p96 = scmp.eq.s32.totalorder %s9, 0
    %p97 = por %p95, %p96
    %p98 = scmp.ne.s32.totalorder %s87, %s90
    %p99 = scmp.eq.s32.totalorder %s14, 1
    %p100 = por %p98, %p99
    %p101 = scmp.ne.s32.totalorder %s90, %s91
    %p102 = scmp.eq.s32.totalorder %s14, 0
    %p103 = por %p101, %p102
    %p104 = scmp.ne.s32.totalorder %s90, %s91
    %p105 = scmp.eq.s32.totalorder %s15, 1
    %p106 = por %p104, %p105
    %p108 = scmp.ne.s32.totalorder %s91, %s107
    %p109 = scmp.eq.s32.totalorder %s15, 0
    %p110 = por %p108, %p109
    %p111 = scmp.le.s32.totalorder 1, %s9
    %p112 = scmp.lt.s32.totalorder %s9, 3
    %p113 = pnand %p111, %p112
    %p114 = pneg %p113
    // Predicated region
    $region9: #{transformer_forward.6} parent=5 // pred_check
      _
    $region10: #{transformer_forward.6} parent=5 // pred_check_branch
      %116 = sbr.rel (%p113) target = $region12
    $region11: #{transformer_forward.6} parent=5 // pred_region
      %s117 = ssub.s32 %s9, 1
      // Predicated region
      $region13: #{transformer_forward.6} parent=11 // pred_check
        %p118 = pneg %p56
      $region14: #{transformer_forward.6} parent=11 // pred_check_branch
        %120 = sbr.rel (%p118) target = $region16
      $region15: #{transformer_forward.6} parent=11 // pred_region
        _
      $region16: #{transformer_forward.6} parent=11 // pred_fallthru
        _
      // Predicated region
      $region17: #{transformer_forward.6} parent=11 // pred_check
        %p121 = pneg %p77
      $region18: #{transformer_forward.6} parent=11 // pred_check_branch
        %123 = sbr.rel (%p121) target = $region20
      $region19: #{transformer_forward.6} parent=11 // pred_region
        _
      $region20: #{transformer_forward.6} parent=11 // pred_fallthru
        _
    $region12: #{transformer_forward.6} parent=5 // pred_fallthru
      _
    %p124 = scmp.lt.s32.totalorder %s9, 2
    // Predicated region
    $region21: #{transformer_forward.6} parent=5 // pred_check
      %p125 = pneg %p124
    $region22: #{transformer_forward.6} parent=5 // pred_check_branch
      %127 = sbr.rel (%p125) target = $region24
    $region23: #{transformer_forward.6} parent=5 // pred_region
      // Predicated region
      $region25: #{transformer_forward.6} parent=23 // pred_check
        %p128 = pneg %p29
      $region26: #{transformer_forward.6} parent=23 // pred_check_branch
        %130 = sbr.rel (%p128) target = $region28
      $region27: #{transformer_forward.6} parent=23 // pred_region
        %p131 = scmp.lt.s32.totalorder %s9, 1
        %s132 = scalar_select %p131, %s9, 1
        %s133 = smul.addr %s132, 8
        %s134 = scalar_lea.vmem %s0, %s133
      $region28: #{transformer_forward.6} parent=23 // pred_fallthru
        _
    $region24: #{transformer_forward.6} parent=5 // pred_fallthru
      _
    %p135 = scmp.le.s32.totalorder 1, %s9
    %p136 = scmp.lt.s32.totalorder %s9, 3
    %p137 = pnand %p135, %p136
    %p138 = pneg %p137
    // Predicated region
    $region29: #{transformer_forward.6} parent=5 // pred_check
      _
    $region30: #{transformer_forward.6} parent=5 // pred_check_branch
      %140 = sbr.rel (%p137) target = $region32
    $region31: #{transformer_forward.6} parent=5 // pred_region
      %s141 = ssub.s32 %s9, 1
      %p142 = scmp.lt.s32.totalorder %s14, 1
      %s143 = scalar_select %p142, %s14, 1
      %s144 = smul.addr %s143, 8
      %s145 = scalar_lea.vmem %s0, %s144
      %p146 = pneg %p35
      %p147 = pneg %p32
      %p148 = pneg %p56
      %p149 = pneg %p53
      %p150 = pneg %p77
      %p151 = pneg %p74
      %p152 = pneg %p103
      %p153 = pneg %p100
      %p154 = scmp.lt.s32.totalorder %s14, 1
      %s155 = scalar_select %p154, %s14, 1
      %s156 = smul.addr %s155, 4
      %s157 = scalar_lea.vmem %s3, %s156
      %p158 = scmp.lt.s32.totalorder %s14, 1
      %s159 = scalar_select %p158, %s14, 1
      %s160 = smul.addr %s159, 8
      %s161 = scalar_lea.vmem %s0, %s160
      %p162 = scmp.lt.s32.totalorder %s14, 1
      %s163 = scalar_select %p162, %s14, 1
      %s164 = smul.addr %s163, 4
      %s165 = scalar_lea.vmem %s3, %s164
      %v167 = vld [vmem:[%s161] sm:$0xff]
      %v168 = vpack.c.bf16 %v167, %v167
      %v169 = vld [vmem:[%s1] sm:$0xf]
      %v170 = vld [vmem:[%s1 + $0x4] sm:$0xf]
      %v171 = vld [vmem:[%s1 + $0x8] sm:$0xf]
      %v172 = vld [vmem:[%s1 + $0xc] sm:$0xf]
      %v173 = vld [vmem:[%s1 + $0x10] sm:$0xf]
      %v174 = vld [vmem:[%s1 + $0x14] sm:$0xf]
      %v175 = vld [vmem:[%s1 + $0x18] sm:$0xf]
      %v176 = vld [vmem:[%s1 + $0x1c] sm:$0xf]
      %v177 = vld [vmem:[%s2] sm:$0x1]
      %v179 = vlaneseq
      %v180 = vshrl.u32 %v179, 7
      %v181 = vsub.s32 0, %v180
      %v182 = vrot.slane %v177, %v181
      %v192 = vunpack.c.l.b16 %v169
      %v193 = vunpack.c.l.b16 %v170
      %v194 = vunpack.c.l.b16 %v171
      %v195 = vunpack.c.l.b16 %v172
      %v196 = vunpack.c.l.b16 %v173
      %v197 = vunpack.c.l.b16 %v174
      %v198 = vunpack.c.l.b16 %v175
      %v199 = vunpack.c.l.b16 %v176
      %v200 = vpack.c.b16 %v193, %v192
      %v201 = vpack.c.b16 %v195, %v194
      %v202 = vpack.c.b16 %v197, %v196
      %v203 = vpack.c.b16 %v199, %v198
      %vm208 = vcmask 523264
      %v210 = vsel %vm208, %v168, 0
      %212 = vmatprep.subr.bf16.mxu0 0
      %213 = vmatpush1.bf16.msra.mxu0 %v200
      %214 = vmatprep.subr.bf16.mxu0 0
      %215 = vmatpush1.bf16.msra.mxu0 %v201
      %216 = vmatprep.subr.bf16.mxu0 0
      %217 = vmatpush1.bf16.msra.mxu0 %v202
      %218 = vmatprep.subr.bf16.mxu0 0
      %219 = vmatpush1.bf16.msra.mxu0 %v203
      %220 = vmatprep.subr.bf16.mxu0 0
      %221 = vmatpush1.bf16.msra.mxu0 0
      %222 = vmatprep.subr.bf16.mxu0 0
      %223 = vmatpush1.bf16.msra.mxu0 0
      %224 = vmatprep.subr.bf16.mxu0 0
      %225 = vmatpush1.bf16.msra.mxu0 0
      %226 = vmatprep.subr.bf16.mxu0 0
      %227 = vmatpush1.bf16.msra.mxu0 0
      %228 = vmatprep.subr.bf16.mxu0 0
      %229 = vmatpush1.bf16.msra.mxu0 0
      %230 = vmatprep.subr.bf16.mxu0 0
      %231 = vmatpush1.bf16.msra.mxu0 0
      %232 = vmatprep.subr.bf16.mxu0 0
      %233 = vmatpush1.bf16.msra.mxu0 0
      %234 = vmatprep.subr.bf16.mxu0 0
      %235 = vmatpush1.bf16.msra.mxu0 0
      %236 = vmatprep.subr.bf16.mxu0 0
      %237 = vmatpush1.bf16.msra.mxu0 0
      %238 = vmatprep.subr.bf16.mxu0 0
      %239 = vmatpush1.bf16.msra.mxu0 0
      %240 = vmatprep.subr.bf16.mxu0 0
      %241 = vmatpush1.bf16.msra.mxu0 0
      %242 = vmatprep.subr.bf16.mxu0 0
      %243 = vmatpush1.bf16.msra.mxu0 0
      %244 = vmatprep.mubr.bf16.mxu0 0
      %245 = vmatmul.mubr.bf16.gmra.mrb[0].mxu0 %v210
      %v246 = vpop.f32.mrb[0].mxu0
      %v247 = vadd.f32 %v182, %v246
      %v248 = vpop.f32.mrb[0].mxu0
      %v249 = vpop.f32.mrb[0].mxu0
      %v250 = vpop.f32.mrb[0].mxu0
      %251 = vdwg.mxu0
      %v252 = vpack.c.bf16 %v247, %v247
      %vm253 = vcmask 519168
      %254 = vst.msk [vmem:[%s165] sm:$0xf] %vm253, %v252
      %p255 = scmp.lt.s32.totalorder %s14, 1
      %s256 = scalar_select %p255, %s14, 1
      %s257 = smul.addr %s256, 4
      %s258 = scalar_lea.vmem %s3, %s257
      // Predicated region
      $region33: #{transformer_forward.6} parent=31 // pred_check
        %p259 = pneg %p100
      $region34: #{transformer_forward.6} parent=31 // pred_check_branch
        %261 = sbr.rel (%p259) target = $region36
      $region35: #{transformer_forward.6} parent=31 // pred_region
        _
      $region36: #{transformer_forward.6} parent=31 // pred_fallthru
        _
    $region32: #{transformer_forward.6} parent=5 // pred_fallthru
      _
    %p262 = scmp.le.s32.totalorder 2, %s9
    // Predicated region
    $region37: #{transformer_forward.6} parent=5 // pred_check
      %p263 = pneg %p262
    $region38: #{transformer_forward.6} parent=5 // pred_check_branch
      %265 = sbr.rel (%p263) target = $region40
    $region39: #{transformer_forward.6} parent=5 // pred_region
      %s266 = ssub.s32 %s9, 2
      // Predicated region
      $region41: #{transformer_forward.6} parent=39 // pred_check
        %p267 = pneg %p106
      $region42: #{transformer_forward.6} parent=39 // pred_check_branch
        %269 = sbr.rel (%p267) target = $region44
      $region43: #{transformer_forward.6} parent=39 // pred_region
        %p270 = scmp.lt.s32.totalorder %s15, 1
        %s271 = scalar_select %p270, %s15, 1
        %s272 = smul.addr %s271, 4
        %s273 = scalar_lea.vmem %s3, %s272
      $region44: #{transformer_forward.6} parent=39 // pred_fallthru
        _
    $region40: #{transformer_forward.6} parent=5 // pred_fallthru
      _
  $region6: #{transformer_forward.6} parent=0 // loop_footer
    %s13 = sadd.s32 1, %s9
  $region7: #{transformer_forward.6} parent=0 // loop_footer_branch
    %8 = sbr.rel target = $region3
  $region8: #{transformer_forward.6} parent=0 // loop_exit
    _

// kernel: transformer_forward.5
$region0: #{transformer_forward.5}
  #allocation0 [shape = 'u32[]', space=smem, size = 0x4, offset = 0x4, fixed_abs, tag = 'smem constant byte address 0x4 - core index']
  #allocation1 [shape = 'u32[144,128]{1,0:T(1,128)}', space=vmem, size = 0x12000, scoped, tag = 'internal scratch']
  #allocation2 [shape = 'f32[2,64]{1,0:T(2,128)}', space=vmem, size = 0x400, scoped, tag = 'scratch operand']
  %s0 = inlined_call_operand.vmem [shape: f32[2,768], index: 0, kind: input, shape index: {}]
  %s1 = inlined_call_operand.vmem [shape: bf16[768,64], index: 1, kind: input, shape index: {}]
  %s2 = inlined_call_operand.vmem [shape: f32[1,64], index: 2, kind: input, shape index: {}]
  %s3 = inlined_call_operand.vmem [shape: bf16[64,64], index: 3, kind: input, shape index: {}]
  %s4 = inlined_call_operand.vmem [shape: f32[1,64], index: 4, kind: input, shape index: {}]
  %s5 = inlined_call_operand.vmem [shape: bf16[2,64], index: 5, kind: output, shape index: {}]
  %s6 = sld [smem:[#allocation0]]
  $region61: #{transformer_forward.5} parent=0
    _
  %s8 = ssub.s32 1, %s6
  %s9 = scalar_select 0, %s8, %s6
  loop: start=0, step=1, limit=5
  $region2: #{transformer_forward.5} parent=0 // loop_pre_header
    _
  $region3: #{transformer_forward.5} parent=0 // loop_header
    %s11 = sphi 0, %s15
    %p12 = scmp.ge.s32.totalorder %s11, 5
    %s21 = sphi 0, %s23
    %s24 = sphi 0, %s21
    %s25 = sphi 0, %s24
    %s41 = sphi 0, %s25
    %s47 = sphi 0, %s49
    %s50 = sphi 0, %s47
    %s51 = sphi 0, %s50
    %s67 = sphi 0, %s51
    %s71 = sphi 0, %s71
    %s73 = sphi 0, %s71
    %s74 = sphi 0, %s73
    %s88 = sphi 0, %s74
    %s92 = sphi 0, %s92
    %s94 = sphi 0, %s92
    %s95 = sphi 0, %s94
    %s109 = sphi 0, %s95
    %s113 = sphi 0, %s113
    %s115 = sphi 0, %s113
    %s116 = sphi 0, %s115
    %s130 = sphi 0, %s116
    %s134 = sphi 0, %s134
    %s136 = sphi 0, %s134
    %s137 = sphi 0, %s136
    %s151 = sphi 0, %s137
  $region4: #{transformer_forward.5} parent=0 // loop_header_branch
    %14 = sbr.rel (%p12) target = $region8
  $region5: #{transformer_forward.5} parent=0 // loop_body
    %s16 = ssub.s32 %s11, 1
    %s17 = ssub.s32 %s11, 2
    %s18 = sadd.s32 %s11, 1
    %s19 = ssub.s32 %s11, %s18
    %p20 = scmp.eq.s32.totalorder %s19, 0
    %s22 = sadd.s32 %s21, 1
    %s23 = scalar_select %p20, %s21, %s22
    %p26 = pneg %p20
    %p27 = scmp.eq.s32.totalorder %s11, 2
    %p28 = por %p26, %p27
    %p29 = scmp.ne.s32.totalorder %s21, %s24
    %p30 = scmp.eq.s32.totalorder %s11, 0
    %p31 = por %p29, %p30
    %p32 = scmp.ne.s32.totalorder %s21, %s24
    %p33 = scmp.eq.s32.totalorder %s16, 2
    %p34 = por %p32, %p33
    %p35 = scmp.ne.s32.totalorder %s24, %s25
    %p36 = scmp.eq.s32.totalorder %s16, 0
    %p37 = por %p35, %p36
    %p38 = scmp.ne.s32.totalorder %s24, %s25
    %p39 = scmp.eq.s32.totalorder %s17, 2
    %p40 = por %p38, %p39
    %p42 = scmp.ne.s32.totalorder %s25, %s41
    %p43 = scmp.eq.s32.totalorder %s17, 0
    %p44 = por %p42, %p43
    %s45 = ssub.s32 %s11, %s18
    %p46 = scmp.eq.s32.totalorder %s45, 0
    %s48 = sadd.s32 %s47, 1
    %s49 = scalar_select %p46, %s47, %s48
    %p52 = pneg %p46
    %p53 = scmp.eq.s32.totalorder %s11, 2
    %p54 = por %p52, %p53
    %p55 = scmp.ne.s32.totalorder %s47, %s50
    %p56 = scmp.eq.s32.totalorder %s11, 0
    %p57 = por %p55, %p56
    %p58 = scmp.ne.s32.totalorder %s47, %s50
    %p59 = scmp.eq.s32.totalorder %s16, 2
    %p60 = por %p58, %p59
    %p61 = scmp.ne.s32.totalorder %s50, %s51
    %p62 = scmp.eq.s32.totalorder %s16, 0
    %p63 = por %p61, %p62
    %p64 = scmp.ne.s32.totalorder %s50, %s51
    %p65 = scmp.eq.s32.totalorder %s17, 2
    %p66 = por %p64, %p65
    %p68 = scmp.ne.s32.totalorder %s51, %s67
    %p69 = scmp.eq.s32.totalorder %s17, 0
    %p70 = por %p68, %p69
    %s72 = sadd.s32 %s71, 1
    %p75 = scmp.eq.s32.totalorder %s11, 2
    %p76 = scmp.ne.s32.totalorder %s71, %s73
    %p77 = scmp.eq.s32.totalorder %s11, 0
    %p78 = por %p76, %p77
    %p79 = scmp.ne.s32.totalorder %s71, %s73
    %p80 = scmp.eq.s32.totalorder %s16, 2
    %p81 = por %p79, %p80
    %p82 = scmp.ne.s32.totalorder %s73, %s74
    %p83 = scmp.eq.s32.totalorder %s16, 0
    %p84 = por %p82, %p83
    %p85 = scmp.ne.s32.totalorder %s73, %s74
    %p86 = scmp.eq.s32.totalorder %s17, 2
    %p87 = por %p85, %p86
    %p89 = scmp.ne.s32.totalorder %s74, %s88
    %p90 = scmp.eq.s32.totalorder %s17, 0
    %p91 = por %p89, %p90
    %s93 = sadd.s32 %s92, 1
    %p96 = scmp.eq.s32.totalorder %s11, 2
    %p97 = scmp.ne.s32.totalorder %s92, %s94
    %p98 = scmp.eq.s32.totalorder %s11, 0
    %p99 = por %p97, %p98
    %p100 = scmp.ne.s32.totalorder %s92, %s94
    %p101 = scmp.eq.s32.totalorder %s16, 2
    %p102 = por %p100, %p101
    %p103 = scmp.ne.s32.totalorder %s94, %s95
    %p104 = scmp.eq.s32.totalorder %s16, 0
    %p105 = por %p103, %p104
    %p106 = scmp.ne.s32.totalorder %s94, %s95
    %p107 = scmp.eq.s32.totalorder %s17, 2
    %p108 = por %p106, %p107
    %p110 = scmp.ne.s32.totalorder %s95, %s109
    %p111 = scmp.eq.s32.totalorder %s17, 0
    %p112 = por %p110, %p111
    %s114 = sadd.s32 %s113, 1
    %p117 = scmp.eq.s32.totalorder %s11, 2
    %p118 = scmp.ne.s32.totalorder %s113, %s115
    %p119 = scmp.eq.s32.totalorder %s11, 0
    %p120 = por %p118, %p119
    %p121 = scmp.ne.s32.totalorder %s113, %s115
    %p122 = scmp.eq.s32.totalorder %s16, 2
    %p123 = por %p121, %p122
    %p124 = scmp.ne.s32.totalorder %s115, %s116
    %p125 = scmp.eq.s32.totalorder %s16, 0
    %p126 = por %p124, %p125
    %p127 = scmp.ne.s32.totalorder %s115, %s116
    %p128 = scmp.eq.s32.totalorder %s17, 2
    %p129 = por %p127, %p128
    %p131 = scmp.ne.s32.totalorder %s116, %s130
    %p132 = scmp.eq.s32.totalorder %s17, 0
    %p133 = por %p131, %p132
    %s135 = sadd.s32 %s134, 1
    %p138 = scmp.eq.s32.totalorder %s11, 2
    %p139 = scmp.ne.s32.totalorder %s134, %s136
    %p140 = scmp.eq.s32.totalorder %s11, 0
    %p141 = por %p139, %p140
    %p142 = scmp.ne.s32.totalorder %s134, %s136
    %p143 = scmp.eq.s32.totalorder %s16, 2
    %p144 = por %p142, %p143
    %p145 = scmp.ne.s32.totalorder %s136, %s137
    %p146 = scmp.eq.s32.totalorder %s16, 0
    %p147 = por %p145, %p146
    %p148 = scmp.ne.s32.totalorder %s136, %s137
    %p149 = scmp.eq.s32.totalorder %s17, 2
    %p150 = por %p148, %p149
    %p152 = scmp.ne.s32.totalorder %s137, %s151
    %p153 = scmp.eq.s32.totalorder %s17, 0
    %p154 = por %p152, %p153
    %p155 = scmp.le.s32.totalorder 1, %s11
    %p156 = scmp.lt.s32.totalorder %s11, 4
    %p157 = pnand %p155, %p156
    %p158 = pneg %p157
    // Predicated region
    $region9: #{transformer_forward.5} parent=5 // pred_check
      _
    $region10: #{transformer_forward.5} parent=5 // pred_check_branch
      %160 = sbr.rel (%p157) target = $region12
    $region11: #{transformer_forward.5} parent=5 // pred_region
      %s161 = ssub.s32 %s11, 1
      // Predicated region
      $region13: #{transformer_forward.5} parent=11 // pred_check
        %p162 = pneg %p84
      $region14: #{transformer_forward.5} parent=11 // pred_check_branch
        %164 = sbr.rel (%p162) target = $region16
      $region15: #{transformer_forward.5} parent=11 // pred_region
        _
      $region16: #{transformer_forward.5} parent=11 // pred_fallthru
        _
      // Predicated region
      $region17: #{transformer_forward.5} parent=11 // pred_check
        %p165 = pneg %p105
      $region18: #{transformer_forward.5} parent=11 // pred_check_branch
        %167 = sbr.rel (%p165) target = $region20
      $region19: #{transformer_forward.5} parent=11 // pred_region
        _
      $region20: #{transformer_forward.5} parent=11 // pred_fallthru
        _
      // Predicated region
      $region21: #{transformer_forward.5} parent=11 // pred_check
        %p168 = pneg %p126
      $region22: #{transformer_forward.5} parent=11 // pred_check_branch
        %170 = sbr.rel (%p168) target = $region24
      $region23: #{transformer_forward.5} parent=11 // pred_region
        _
      $region24: #{transformer_forward.5} parent=11 // pred_fallthru
        _
    $region12: #{transformer_forward.5} parent=5 // pred_fallthru
      _
    %p171 = scmp.lt.s32.totalorder %s11, 3
    // Predicated region
    $region25: #{transformer_forward.5} parent=5 // pred_check
      %p172 = pneg %p171
    $region26: #{transformer_forward.5} parent=5 // pred_check_branch
      %174 = sbr.rel (%p172) target = $region28
    $region27: #{transformer_forward.5} parent=5 // pred_region
      // Predicated region
      $region29: #{transformer_forward.5} parent=27 // pred_check
        %p175 = pneg %p31
      $region30: #{transformer_forward.5} parent=27 // pred_check_branch
        %177 = sbr.rel (%p175) target = $region32
      $region31: #{transformer_forward.5} parent=27 // pred_region
        %s178 = smul.u32 2, %s11
        %p179 = scmp.lt.s32.totalorder %s178, 5
        %s180 = scalar_select %p179, %s178, 5
        %s181 = smul.addr %s180, 2
        %s182 = scalar_lea.vmem %s0, %s181
        %s183 = smul.u32 2, %s11
      $region32: #{transformer_forward.5} parent=27 // pred_fallthru
        _
      // Predicated region
      $region33: #{transformer_forward.5} parent=27 // pred_check
        %p184 = pneg %p57
      $region34: #{transformer_forward.5} parent=27 // pred_check_branch
        %186 = sbr.rel (%p184) target = $region36
      $region35: #{transformer_forward.5} parent=27 // pred_region
        %s187 = smul.u32 32, %s11
        %p188 = scmp.lt.s32.totalorder %s187, 95
        %s189 = scalar_select %p188, %s187, 95
        %s190 = smul.addr %s189, 4
        %s191 = scalar_lea.vmem %s1, %s190
        %s192 = smul.u32 32, %s11
      $region36: #{transformer_forward.5} parent=27 // pred_fallthru
        _
    $region28: #{transformer_forward.5} parent=5 // pred_fallthru
      _
    %p193 = scmp.le.s32.totalorder 1, %s11
    %p194 = scmp.lt.s32.totalorder %s11, 4
    %p195 = pnand %p193, %p194
    %p196 = pneg %p195
    // Predicated region
    $region37: #{transformer_forward.5} parent=5 // pred_check
      _
    $region38: #{transformer_forward.5} parent=5 // pred_check_branch
      %198 = sbr.rel (%p195) target = $region40
    $region39: #{transformer_forward.5} parent=5 // pred_region
      %s199 = ssub.s32 %s11, 1
      %s200 = smul.u32 2, %s16
      %p201 = scmp.lt.s32.totalorder %s200, 5
      %s202 = scalar_select %p201, %s200, 5
      %s203 = smul.addr %s202, 2
      %s204 = scalar_lea.vmem %s0, %s203
      %p205 = pneg %p37
      %p206 = pneg %p34
      %s207 = smul.u32 32, %s16
      %p208 = scmp.lt.s32.totalorder %s207, 95
      %s209 = scalar_select %p208, %s207, 95
      %s210 = smul.addr %s209, 4
      %s211 = scalar_lea.vmem %s1, %s210
      %p212 = pneg %p63
      %p213 = pneg %p60
      %p214 = pneg %p84
      %p215 = pneg %p81
      %p216 = pneg %p105
      %p217 = pneg %p102
      %p218 = pneg %p126
      %p219 = pneg %p123
      %p220 = pneg %p147
      %p221 = pneg %p144
      %s222 = smul.u32 2, %s16
      %p223 = scmp.lt.s32.totalorder %s222, 5
      %s224 = scalar_select %p223, %s222, 5
      %s225 = smul.addr %s224, 2
      %s226 = scalar_lea.vmem %s0, %s225
      %s227 = smul.u32 2, %s16
      %s228 = smul.u32 32, %s16
      %p229 = scmp.lt.s32.totalorder %s228, 95
      %s230 = scalar_select %p229, %s228, 95
      %s231 = smul.addr %s230, 4
      %s232 = scalar_lea.vmem %s1, %s231
      %s233 = smul.u32 32, %s16
      %p235 = scmp.eq.s32.totalorder %s16, 0
      // Predicated region
      $region41: #{transformer_forward.5} parent=39 // pred_check
        %p236 = pneg %p235
      $region42: #{transformer_forward.5} parent=39 // pred_check_branch
        %238 = sbr.rel (%p236) target = $region44
      $region43: #{transformer_forward.5} parent=39 // pred_region
        %vm239 = vcmask 517120
        %240 = vst.msk [vmem:[#allocation2] sm:$0x3] %vm239, 0.0
      $region44: #{transformer_forward.5} parent=39 // pred_fallthru
        _
      %v241 = vld [vmem:[#allocation2] sm:$0x3]
      %v242 = vld [vmem:[%s226] sm:$0xf]
      %v245 = vunpack.c.l.s4 1983009808
      %v246 = vunpack.c.0.s8 %v245
      %v247 = vlaneseq
      %v248 = vshrl.u32 %v247, 7
      %v249 = vsub.s32 %v246, %v248
      %v250 = vrot.slane %v242, %v249
      %v251 = vcombine.high %v250, %v250
      %v254 = vpack.c.bf16 %v250, %v250
      %v255 = vpack.c.bf16 %v251, %v251
      %v256 = vld [vmem:[%s232] sm:$0xf]
      %v257 = vld [vmem:[%s232 + $0x4] sm:$0xf]
      %v258 = vld [vmem:[%s232 + $0x8] sm:$0xf]
      %v259 = vld [vmem:[%s232 + $0xc] sm:$0xf]
      %v260 = vld [vmem:[%s232 + $0x10] sm:$0xf]
      %v261 = vld [vmem:[%s232 + $0x14] sm:$0xf]
      %v262 = vld [vmem:[%s232 + $0x18] sm:$0xf]
      %v263 = vld [vmem:[%s232 + $0x1c] sm:$0xf]
      %v264 = vld [vmem:[%s232 + $0x20] sm:$0xf]
      %v265 = vld [vmem:[%s232 + $0x24] sm:$0xf]
      %v266 = vld [vmem:[%s232 + $0x28] sm:$0xf]
      %v267 = vld [vmem:[%s232 + $0x2c] sm:$0xf]
      %v268 = vld [vmem:[%s232 + $0x30] sm:$0xf]
      %v269 = vld [vmem:[%s232 + $0x34] sm:$0xf]
      %v270 = vld [vmem:[%s232 + $0x38] sm:$0xf]
      %v271 = vld [vmem:[%s232 + $0x3c] sm:$0xf]
      %v272 = vld [vmem:[%s232 + $0x40] sm:$0xf]
      %v273 = vld [vmem:[%s232 + $0x44] sm:$0xf]
      %v274 = vld [vmem:[%s232 + $0x48] sm:$0xf]
      %v275 = vld [vmem:[%s232 + $0x4c] sm:$0xf]
      %v276 = vld [vmem:[%s232 + $0x50] sm:$0xf]
      %v277 = vld [vmem:[%s232 + $0x54] sm:$0xf]
      %v278 = vld [vmem:[%s232 + $0x58] sm:$0xf]
      %v279 = vld [vmem:[%s232 + $0x5c] sm:$0xf]
      %v280 = vld [vmem:[%s232 + $0x60] sm:$0xf]
      %v281 = vld [vmem:[%s232 + $0x64] sm:$0xf]
      %v282 = vld [vmem:[%s232 + $0x68] sm:$0xf]
      %v283 = vld [vmem:[%s232 + $0x6c] sm:$0xf]
      %v284 = vld [vmem:[%s232 + $0x70] sm:$0xf]
      %v285 = vld [vmem:[%s232 + $0x74] sm:$0xf]
      %v286 = vld [vmem:[%s232 + $0x78] sm:$0xf]
      %v287 = vld [vmem:[%s232 + $0x7c] sm:$0xf]
      %v320 = vunpack.c.l.b16 %v256
      %v321 = vunpack.c.l.b16 %v257
      %v322 = vunpack.c.l.b16 %v258
      %v323 = vunpack.c.l.b16 %v259
      %v324 = vunpack.c.l.b16 %v260
      %v325 = vunpack.c.l.b16 %v261
      %v326 = vunpack.c.l.b16 %v262
      %v327 = vunpack.c.l.b16 %v263
      %v328 = vunpack.c.l.b16 %v264
      %v329 = vunpack.c.l.b16 %v265
      %v330 = vunpack.c.l.b16 %v266
      %v331 = vunpack.c.l.b16 %v267
      %v332 = vunpack.c.l.b16 %v268
      %v333 = vunpack.c.l.b16 %v269
      %v334 = vunpack.c.l.b16 %v270
      %v335 = vunpack.c.l.b16 %v271
      %v336 = vunpack.c.l.b16 %v272
      %v337 = vunpack.c.l.b16 %v273
      %v338 = vunpack.c.l.b16 %v274
      %v339 = vunpack.c.l.b16 %v275
      %v340 = vunpack.c.l.b16 %v276
      %v341 = vunpack.c.l.b16 %v277
      %v342 = vunpack.c.l.b16 %v278
      %v343 = vunpack.c.l.b16 %v279
      %v344 = vunpack.c.l.b16 %v280
      %v345 = vunpack.c.l.b16 %v281
      %v346 = vunpack.c.l.b16 %v282
      %v347 = vunpack.c.l.b16 %v283
      %v348 = vunpack.c.l.b16 %v284
      %v349 = vunpack.c.l.b16 %v285
      %v350 = vunpack.c.l.b16 %v286
      %v351 = vunpack.c.l.b16 %v287
      %v352 = vpack.c.b16 %v321, %v320
      %v353 = vpack.c.b16 %v323, %v322
      %v354 = vpack.c.b16 %v325, %v324
      %v355 = vpack.c.b16 %v327, %v326
      %v356 = vpack.c.b16 %v329, %v328
      %v357 = vpack.c.b16 %v331, %v330
      %v358 = vpack.c.b16 %v333, %v332
      %v359 = vpack.c.b16 %v335, %v334
      %v360 = vpack.c.b16 %v337, %v336
      %v361 = vpack.c.b16 %v339, %v338
      %v362 = vpack.c.b16 %v341, %v340
      %v363 = vpack.c.b16 %v343, %v342
      %v364 = vpack.c.b16 %v345, %v344
      %v365 = vpack.c.b16 %v347, %v346
      %v366 = vpack.c.b16 %v349, %v348
      %v367 = vpack.c.b16 %v351, %v350
      %384 = vmatprep.subr.bf16.mxu0 0
      %385 = vmatpush1.bf16.msra.mxu0 %v352
      %386 = vmatprep.subr.bf16.mxu0 0
      %387 = vmatpush1.bf16.msra.mxu0 %v353
      %388 = vmatprep.subr.bf16.mxu0 0
      %389 = vmatpush1.bf16.msra.mxu0 %v354
      %390 = vmatprep.subr.bf16.mxu0 0
      %391 = vmatpush1.bf16.msra.mxu0 %v355
      %392 = vmatprep.subr.bf16.mxu0 0
      %393 = vmatpush1.bf16.msra.mxu0 %v356
      %394 = vmatprep.subr.bf16.mxu0 0
      %395 = vmatpush1.bf16.msra.mxu0 %v357
      %396 = vmatprep.subr.bf16.mxu0 0
      %397 = vmatpush1.bf16.msra.mxu0 %v358
      %398 = vmatprep.subr.bf16.mxu0 0
      %399 = vmatpush1.bf16.msra.mxu0 %v359
      %400 = vmatprep.subr.bf16.mxu0 0
      %401 = vmatpush1.bf16.msra.mxu0 %v360
      %402 = vmatprep.subr.bf16.mxu0 0
      %403 = vmatpush1.bf16.msra.mxu0 %v361
      %404 = vmatprep.subr.bf16.mxu0 0
      %405 = vmatpush1.bf16.msra.mxu0 %v362
      %406 = vmatprep.subr.bf16.mxu0 0
      %407 = vmatpush1.bf16.msra.mxu0 %v363
      %408 = vmatprep.subr.bf16.mxu0 0
      %409 = vmatpush1.bf16.msra.mxu0 %v364
      %410 = vmatprep.subr.bf16.mxu0 0
      %411 = vmatpush1.bf16.msra.mxu0 %v365
      %412 = vmatprep.subr.bf16.mxu0 0
      %413 = vmatpush1.bf16.msra.mxu0 %v366
      %414 = vmatprep.subr.bf16.mxu0 0
      %415 = vmatpush1.bf16.msra.mxu0 %v367
      %416 = vmatprep.mubr.bf16.mxu0 %v255
      %417 = vmatmul.mubr.bf16.gmra.mrb[0].mxu0 %v254
      %v418 = vpop.f32.mrb[0].mxu0
      %v419 = vadd.f32 0.0, %v418
      %v420 = vpop.f32.mrb[0].mxu0
      %v421 = vpop.f32.mrb[0].mxu0
      %v422 = vpop.f32.mrb[0].mxu0
      %423 = vdwg.mxu0
      %v424 = vadd.f32 %v241, %v419
      %vm425 = vcmask 517120
      %426 = vst.msk [vmem:[#allocation2] sm:$0x3] %vm425, %v424
      %p427 = scmp.eq.s32.totalorder %s16, 2
      // Predicated region
      $region45: #{transformer_forward.5} parent=39 // pred_check
        %p428 = pneg %p427
      $region46: #{transformer_forward.5} parent=39 // pred_check_branch
        %430 = sbr.rel (%p428) target = $region48
      $region47: #{transformer_forward.5} parent=39 // pred_region
        %v431 = vld [vmem:[#allocation2] sm:$0x3]
        %v432 = vld [vmem:[%s2] sm:$0x1]
        %v434 = vlaneseq
        %v435 = vshrl.u32 %v434, 7
        %v436 = vsub.s32 0, %v435
        %v437 = vrot.slane %v432, %v436
        %v439 = vadd.f32 %v431, %v437
        %v440 = vmul.f32 %v439, %v439
        %v441 = vsel %vm425, %v440, 0.0
        %442 = vadd.xlane.f32.xlu0 %v441
        %v443 = vpop.xlane.xlu0 %442
        %v444 = vmax.f32 %v443, 1e-24
        %v445 = vrsqrt.pop %v444
        %v446 = vmul.f32 %v439, %v445
        %v447 = vpack.c.bf16 %v446, %v446
        %v448 = vld [vmem:[%s3] sm:$0xf]
        %v449 = vld [vmem:[%s3 + $0x4] sm:$0xf]
        %v450 = vld [vmem:[%s3 + $0x8] sm:$0xf]
        %v451 = vld [vmem:[%s3 + $0xc] sm:$0xf]
        %v452 = vld [vmem:[%s3 + $0x10] sm:$0xf]
        %v453 = vld [vmem:[%s3 + $0x14] sm:$0xf]
        %v454 = vld [vmem:[%s3 + $0x18] sm:$0xf]
        %v455 = vld [vmem:[%s3 + $0x1c] sm:$0xf]
        %v456 = vld [vmem:[%s4] sm:$0x1]
        %v458 = vlaneseq
        %v459 = vshrl.u32 %v458, 7
        %v460 = vsub.s32 0, %v459
        %v461 = vrot.slane %v456, %v460
        %v471 = vunpack.c.l.b16 %v448
        %v472 = vunpack.c.l.b16 %v449
        %v473 = vunpack.c.l.b16 %v450
        %v474 = vunpack.c.l.b16 %v451
        %v475 = vunpack.c.l.b16 %v452
        %v476 = vunpack.c.l.b16 %v453
        %v477 = vunpack.c.l.b16 %v454
        %v478 = vunpack.c.l.b16 %v455
        %v479 = vpack.c.b16 %v472, %v471
        %v480 = vpack.c.b16 %v474, %v473
        %v481 = vpack.c.b16 %v476, %v475
        %v482 = vpack.c.b16 %v478, %v477
        %vm487 = vcmask 523264
        %v489 = vsel %vm487, %v447, 0
        %491 = vmatprep.subr.bf16.mxu0 0
        %492 = vmatpush1.bf16.msra.mxu0 %v479
        %493 = vmatprep.subr.bf16.mxu0 0
        %494 = vmatpush1.bf16.msra.mxu0 %v480
        %495 = vmatprep.subr.bf16.mxu0 0
        %496 = vmatpush1.bf16.msra.mxu0 %v481
        %497 = vmatprep.subr.bf16.mxu0 0
        %498 = vmatpush1.bf16.msra.mxu0 %v482
        %499 = vmatprep.subr.bf16.mxu0 0
        %500 = vmatpush1.bf16.msra.mxu0 0
        %501 = vmatprep.subr.bf16.mxu0 0
        %502 = vmatpush1.bf16.msra.mxu0 0
        %503 = vmatprep.subr.bf16.mxu0 0
        %504 = vmatpush1.bf16.msra.mxu0 0
        %505 = vmatprep.subr.bf16.mxu0 0
        %506 = vmatpush1.bf16.msra.mxu0 0
        %507 = vmatprep.subr.bf16.mxu0 0
        %508 = vmatpush1.bf16.msra.mxu0 0
        %509 = vmatprep.subr.bf16.mxu0 0
        %510 = vmatpush1.bf16.msra.mxu0 0
        %511 = vmatprep.subr.bf16.mxu0 0
        %512 = vmatpush1.bf16.msra.mxu0 0
        %513 = vmatprep.subr.bf16.mxu0 0
        %514 = vmatpush1.bf16.msra.mxu0 0
        %515 = vmatprep.subr.bf16.mxu0 0
        %516 = vmatpush1.bf16.msra.mxu0 0
        %517 = vmatprep.subr.bf16.mxu0 0
        %518 = vmatpush1.bf16.msra.mxu0 0
        %519 = vmatprep.subr.bf16.mxu0 0
        %520 = vmatpush1.bf16.msra.mxu0 0
        %521 = vmatprep.subr.bf16.mxu0 0
        %522 = vmatpush1.bf16.msra.mxu0 0
        %523 = vmatprep.mubr.bf16.mxu0 0
        %524 = vmatmul.mubr.bf16.gmra.mrb[0].mxu0 %v489
        %v525 = vpop.f32.mrb[0].mxu0
        %v526 = vadd.f32 %v461, %v525
        %v527 = vpop.f32.mrb[0].mxu0
        %v528 = vpop.f32.mrb[0].mxu0
        %v529 = vpop.f32.mrb[0].mxu0
        %530 = vdwg.mxu0
        %v531 = vmul.f32 %v526, %v526
        %v532 = vsel %vm425, %v531, 0.0
        %533 = vadd.xlane.f32.xlu0 %v532
        %v534 = vpop.xlane.xlu0 %533
        %v535 = vmax.f32 %v534, 1e-24
        %v536 = vrsqrt.pop %v535
        %v537 = vmul.f32 %v526, %v536
        %v538 = vpack.c.bf16 %v537, %v537
        %vm539 = vcmask 516096
        %540 = vst.msk [vmem:[%s5] sm:$0x1] %vm539, %v538
      $region48: #{transformer_forward.5} parent=39 // pred_fallthru
        _
      // Predicated region
      $region49: #{transformer_forward.5} parent=39 // pred_check
        %p541 = pneg %p144
      $region50: #{transformer_forward.5} parent=39 // pred_check_branch
        %543 = sbr.rel (%p541) target = $region52
      $region51: #{transformer_forward.5} parent=39 // pred_region
        _
      $region52: #{transformer_forward.5} parent=39 // pred_fallthru
        _
      // Predicated region
      $region53: #{transformer_forward.5} parent=39 // pred_check
        %p544 = pneg %p144
      $region54: #{transformer_forward.5} parent=39 // pred_check_branch
        %546 = sbr.rel (%p544) target = $region56
      $region55: #{transformer_forward.5} parent=39 // pred_region
        _
      $region56: #{transformer_forward.5} parent=39 // pred_fallthru
        _
    $region40: #{transformer_forward.5} parent=5 // pred_fallthru
      _
    %p547 = scmp.le.s32.totalorder 2, %s11
    // Predicated region
    $region57: #{transformer_forward.5} parent=5 // pred_check
      %p548 = pneg %p547
    $region58: #{transformer_forward.5} parent=5 // pred_check_branch
      %550 = sbr.rel (%p548) target = $region60
    $region59: #{transformer_forward.5} parent=5 // pred_region
      %s551 = ssub.s32 %s11, 2
    $region60: #{transformer_forward.5} parent=5 // pred_fallthru
      _
  $region6: #{transformer_forward.5} parent=0 // loop_footer
    %s15 = sadd.s32 1, %s11
  $region7: #{transformer_forward.5} parent=0 // loop_footer_branch
    %10 = sbr.rel target = $region3
  $region8: #{transformer_forward.5} parent=0 // loop_exit
    _

// kernel: transformer_forward.9
$region0: #{transformer_forward.9}
  #allocation0 [shape = 'u32[]', space=smem, size = 0x4, offset = 0x4, fixed_abs, tag = 'smem constant byte address 0x4 - core index']
  #allocation1 [shape = 'u32[144,128]{1,0:T(1,128)}', space=vmem, size = 0x12000, scoped, tag = 'internal scratch']
  %s0 = inlined_call_operand.vmem [shape: bf16[16,64], index: 0, kind: input, shape index: {}]
  %s1 = inlined_call_operand.vmem [shape: bf16[64,64], index: 1, kind: input, shape index: {}]
  %s2 = inlined_call_operand.vmem [shape: f32[1,64], index: 2, kind: input, shape index: {}]
  %s3 = inlined_call_operand.vmem [shape: f32[1,64], index: 3, kind: input, shape index: {}]
  %s4 = inlined_call_operand.vmem [shape: f32[1,64], index: 4, kind: input, shape index: {}]
  %s5 = inlined_call_operand.vmem [shape: bf16[64,256], index: 5, kind: input, shape index: {}]
  %s6 = inlined_call_operand.hbm [shape: f32[16,256], index: 6, kind: output, shape index: {}]
  %s7 = sld [smem:[#allocation0]]
  $region98: #{transformer_forward.9} parent=0
    _
  %s9 = ssub.s32 1, %s7
  %s10 = scalar_select 0, %s9, %s7
  $region1: #{transformer_forward.9} parent=0
    #allocation2 [shape = 'u8[32768]{0}', space=vmem, size = 0x8000, scoped, tag = 'input window, operand 5']
    #allocation3 [shape = 'u8[16384]{0}', space=vmem, size = 0x4000, scoped, tag = 'output window, operand 0']
    #allocation4 [shape = 's32[2]{0}', space=sflag, size = 0x8, scoped, tag = 'scoped memory for transformer_forward.9']
    %11 = vsyncpa [#allocation4], 0
    %s12 = scalar_lea.sflag [#allocation4], 1
    %13 = vsyncpa %s12, 0
    loop: start=0, step=1, limit=4
    $region2: #{transformer_forward.9} parent=1 // loop_pre_header
      _
    $region3: #{transformer_forward.9} parent=1 // loop_header
      %s15 = sphi 0, %s19
      %p16 = scmp.ge.s32.totalorder %s15, 4
      %s22 = sphi 0, %s34
      %s23 = sphi 0, %s30
      %s24 = sphi 0, %s22
      %s25 = sphi 0, %s23
      %s26 = sphi 0, %s24
      %s27 = sphi 0, %s25
      %s37 = sphi 0, %s39
      %s40 = sphi 0, %s37
      %s41 = sphi 0, %s40
      %s57 = sphi 0, %s41
      %s61 = sphi 0, %s61
      %s63 = sphi 0, %s61
      %s64 = sphi 0, %s63
      %s78 = sphi 0, %s64
      %s82 = sphi 0, %s82
      %s84 = sphi 0, %s82
      %s85 = sphi 0, %s84
      %s99 = sphi 0, %s85
      %s103 = sphi 0, %s103
      %s105 = sphi 0, %s103
      %s106 = sphi 0, %s105
      %s120 = sphi 0, %s106
      %s124 = sphi 0, %s124
      %s126 = sphi 0, %s124
      %s127 = sphi 0, %s126
      %s141 = sphi 0, %s127
      %s147 = sphi 0, %s149
      %s150 = sphi 0, %s147
      %s151 = sphi 0, %s150
      %s167 = sphi 0, %s151
      %s175 = sphi 0, %s177
      %s178 = sphi 0, %s175
      %s179 = sphi 0, %s178
      %s195 = sphi 0, %s179
    $region4: #{transformer_forward.9} parent=1 // loop_header_branch
      %18 = sbr.rel (%p16) target = $region8
    $region5: #{transformer_forward.9} parent=1 // loop_body
      %s20 = ssub.s32 %s15, 1
      %s21 = ssub.s32 %s15, 2
      %s28 = sadd.s32 1, %s23
      %p29 = scmp.ge.s32.totalorder %s28, 2
      %s30 = scalar_select %p29, 0, %s28
      %s31 = sadd.s32 1, %s22
      %s32 = scalar_select %p29, %s31, %s22
      %p33 = scmp.ge.s32.totalorder %s32, 1
      %s34 = scalar_select %p33, 0, %s32
      %s35 = ssub.s32 %s22, %s34
      %p36 = scmp.eq.s32.totalorder %s35, 0
      %s38 = sadd.s32 %s37, 1
      %s39 = scalar_select %p36, %s37, %s38
      %p42 = pneg %p36
      %p43 = scmp.eq.s32.totalorder %s15, 1
      %p44 = por %p42, %p43
      %p45 = scmp.ne.s32.totalorder %s37, %s40
      %p46 = scmp.eq.s32.totalorder %s15, 0
      %p47 = por %p45, %p46
      %p48 = scmp.ne.s32.totalorder %s37, %s40
      %p49 = scmp.eq.s32.totalorder %s20, 1
      %p50 = por %p48, %p49
      %p51 = scmp.ne.s32.totalorder %s40, %s41
      %p52 = scmp.eq.s32.totalorder %s20, 0
      %p53 = por %p51, %p52
      %p54 = scmp.ne.s32.totalorder %s40, %s41
      %p55 = scmp.eq.s32.totalorder %s21, 1
      %p56 = por %p54, %p55
      %p58 = scmp.ne.s32.totalorder %s41, %s57
      %p59 = scmp.eq.s32.totalorder %s21, 0
      %p60 = por %p58, %p59
      %s62 = sadd.s32 %s61, 1
      %p65 = scmp.eq.s32.totalorder %s15, 1
      %p66 = scmp.ne.s32.totalorder %s61, %s63
      %p67 = scmp.eq.s32.totalorder %s15, 0
      %p68 = por %p66, %p67
      %p69 = scmp.ne.s32.totalorder %s61, %s63
      %p70 = scmp.eq.s32.totalorder %s20, 1
      %p71 = por %p69, %p70
      %p72 = scmp.ne.s32.totalorder %s63, %s64
      %p73 = scmp.eq.s32.totalorder %s20, 0
      %p74 = por %p72, %p73
      %p75 = scmp.ne.s32.totalorder %s63, %s64
      %p76 = scmp.eq.s32.totalorder %s21, 1
      %p77 = por %p75, %p76
      %p79 = scmp.ne.s32.totalorder %s64, %s78
      %p80 = scmp.eq.s32.totalorder %s21, 0
      %p81 = por %p79, %p80
      %s83 = sadd.s32 %s82, 1
      %p86 = scmp.eq.s32.totalorder %s15, 1
      %p87 = scmp.ne.s32.totalorder %s82, %s84
      %p88 = scmp.eq.s32.totalorder %s15, 0
      %p89 = por %p87, %p88
      %p90 = scmp.ne.s32.totalorder %s82, %s84
      %p91 = scmp.eq.s32.totalorder %s20, 1
      %p92 = por %p90, %p91
      %p93 = scmp.ne.s32.totalorder %s84, %s85
      %p94 = scmp.eq.s32.totalorder %s20, 0
      %p95 = por %p93, %p94
      %p96 = scmp.ne.s32.totalorder %s84, %s85
      %p97 = scmp.eq.s32.totalorder %s21, 1
      %p98 = por %p96, %p97
      %p100 = scmp.ne.s32.totalorder %s85, %s99
      %p101 = scmp.eq.s32.totalorder %s21, 0
      %p102 = por %p100, %p101
      %s104 = sadd.s32 %s103, 1
      %p107 = scmp.eq.s32.totalorder %s15, 1
      %p108 = scmp.ne.s32.totalorder %s103, %s105
      %p109 = scmp.eq.s32.totalorder %s15, 0
      %p110 = por %p108, %p109
      %p111 = scmp.ne.s32.totalorder %s103, %s105
      %p112 = scmp.eq.s32.totalorder %s20, 1
      %p113 = por %p111, %p112
      %p114 = scmp.ne.s32.totalorder %s105, %s106
      %p115 = scmp.eq.s32.totalorder %s20, 0
      %p116 = por %p114, %p115
      %p117 = scmp.ne.s32.totalorder %s105, %s106
      %p118 = scmp.eq.s32.totalorder %s21, 1
      %p119 = por %p117, %p118
      %p121 = scmp.ne.s32.totalorder %s106, %s120
      %p122 = scmp.eq.s32.totalorder %s21, 0
      %p123 = por %p121, %p122
      %s125 = sadd.s32 %s124, 1
      %p128 = scmp.eq.s32.totalorder %s15, 1
      %p129 = scmp.ne.s32.totalorder %s124, %s126
      %p130 = scmp.eq.s32.totalorder %s15, 0
      %p131 = por %p129, %p130
      %p132 = scmp.ne.s32.totalorder %s124, %s126
      %p133 = scmp.eq.s32.totalorder %s20, 1
      %p134 = por %p132, %p133
      %p135 = scmp.ne.s32.totalorder %s126, %s127
      %p136 = scmp.eq.s32.totalorder %s20, 0
      %p137 = por %p135, %p136
      %p138 = scmp.ne.s32.totalorder %s126, %s127
      %p139 = scmp.eq.s32.totalorder %s21, 1
      %p140 = por %p138, %p139
      %p142 = scmp.ne.s32.totalorder %s127, %s141
      %p143 = scmp.eq.s32.totalorder %s21, 0
      %p144 = por %p142, %p143
      %s145 = ssub.s32 %s23, %s30
      %p146 = scmp.eq.s32.totalorder %s145, 0
      %s148 = sadd.s32 %s147, 1
      %s149 = scalar_select %p146, %s147, %s148
      %p152 = pneg %p146
      %p153 = scmp.eq.s32.totalorder %s15, 1
      %p154 = por %p152, %p153
      %p155 = scmp.ne.s32.totalorder %s147, %s150
      %p156 = scmp.eq.s32.totalorder %s15, 0
      %p157 = por %p155, %p156
      %p158 = scmp.ne.s32.totalorder %s147, %s150
      %p159 = scmp.eq.s32.totalorder %s20, 1
      %p160 = por %p158, %p159
      %p161 = scmp.ne.s32.totalorder %s150, %s151
      %p162 = scmp.eq.s32.totalorder %s20, 0
      %p163 = por %p161, %p162
      %p164 = scmp.ne.s32.totalorder %s150, %s151
      %p165 = scmp.eq.s32.totalorder %s21, 1
      %p166 = por %p164, %p165
      %p168 = scmp.ne.s32.totalorder %s151, %s167
      %p169 = scmp.eq.s32.totalorder %s21, 0
      %p170 = por %p168, %p169
      %s171 = ssub.s32 %s22, %s34
      %s172 = ssub.s32 %s23, %s30
      %s173 = sor.u32 %s171, %s172
      %p174 = scmp.eq.s32.totalorder %s173, 0
      %s176 = sadd.s32 %s175, 1
      %s177 = scalar_select %p174, %s175, %s176
      %p180 = pneg %p174
      %p181 = scmp.eq.s32.totalorder %s15, 1
      %p182 = por %p180, %p181
      %p183 = scmp.ne.s32.totalorder %s175, %s178
      %p184 = scmp.eq.s32.totalorder %s15, 0
      %p185 = por %p183, %p184
      %p186 = scmp.ne.s32.totalorder %s175, %s178
      %p187 = scmp.eq.s32.totalorder %s20, 1
      %p188 = por %p186, %p187
      %p189 = scmp.ne.s32.totalorder %s178, %s179
      %p190 = scmp.eq.s32.totalorder %s20, 0
      %p191 = por %p189, %p190
      %p192 = scmp.ne.s32.totalorder %s178, %s179
      %p193 = scmp.eq.s32.totalorder %s21, 1
      %p194 = por %p192, %p193
      %p196 = scmp.ne.s32.totalorder %s179, %s195
      %p197 = scmp.eq.s32.totalorder %s21, 0
      %p198 = por %p196, %p197
      %p199 = scmp.le.s32.totalorder 1, %s15
      %p200 = scmp.lt.s32.totalorder %s15, 3
      %p201 = pnand %p199, %p200
      %p202 = pneg %p201
      // Predicated region
      $region9: #{transformer_forward.9} parent=5 // pred_check
        _
      $region10: #{transformer_forward.9} parent=5 // pred_check_branch
        %204 = sbr.rel (%p201) target = $region12
      $region11: #{transformer_forward.9} parent=5 // pred_region
        %s205 = ssub.s32 %s15, 1
        // Predicated region
        $region13: #{transformer_forward.9} parent=11 // pred_check
          %p206 = pneg %p53
        $region14: #{transformer_forward.9} parent=11 // pred_check_branch
          %208 = sbr.rel (%p206) target = $region16
        $region15: #{transformer_forward.9} parent=11 // pred_region
          %s209 = smul.u32 2, %s24
          %p210 = scmp.lt.s32.totalorder %s209, 1
          %s211 = scalar_select %p210, %s209, 1
          %s212 = smul.addr %s211, 4
          %s213 = scalar_lea.vmem %s0, %s212
          %s214 = smul.u32 2, %s24
        $region16: #{transformer_forward.9} parent=11 // pred_fallthru
          _
        // Predicated region
        $region17: #{transformer_forward.9} parent=11 // pred_check
          %p215 = pneg %p74
        $region18: #{transformer_forward.9} parent=11 // pred_check_branch
          %217 = sbr.rel (%p215) target = $region20
        $region19: #{transformer_forward.9} parent=11 // pred_region
          _
        $region20: #{transformer_forward.9} parent=11 // pred_fallthru
          _
        // Predicated region
        $region21: #{transformer_forward.9} parent=11 // pred_check
          %p218 = pneg %p95
        $region22: #{transformer_forward.9} parent=11 // pred_check_branch
          %220 = sbr.rel (%p218) target = $region24
        $region23: #{transformer_forward.9} parent=11 // pred_region
          _
        $region24: #{transformer_forward.9} parent=11 // pred_fallthru
          _
        // Predicated region
        $region25: #{transformer_forward.9} parent=11 // pred_check
          %p221 = pneg %p116
        $region26: #{transformer_forward.9} parent=11 // pred_check_branch
          %223 = sbr.rel (%p221) target = $region28
        $region27: #{transformer_forward.9} parent=11 // pred_region
          _
        $region28: #{transformer_forward.9} parent=11 // pred_fallthru
          _
        // Predicated region
        $region29: #{transformer_forward.9} parent=11 // pred_check
          %p224 = pneg %p137
        $region30: #{transformer_forward.9} parent=11 // pred_check_branch
          %226 = sbr.rel (%p224) target = $region32
        $region31: #{transformer_forward.9} parent=11 // pred_region
          _
        $region32: #{transformer_forward.9} parent=11 // pred_fallthru
          _
      $region12: #{transformer_forward.9} parent=5 // pred_fallthru
        _
      %p227 = scmp.lt.s32.totalorder %s15, 2
      // Predicated region
      $region33: #{transformer_forward.9} parent=5 // pred_check
        %p228 = pneg %p227
      $region34: #{transformer_forward.9} parent=5 // pred_check_branch
        %230 = sbr.rel (%p228) target = $region36
      $region35: #{transformer_forward.9} parent=5 // pred_region
        // Predicated region
        $region37: #{transformer_forward.9} parent=35 // pred_check
          %p231 = pneg %p157
        $region38: #{transformer_forward.9} parent=35 // pred_check_branch
          %233 = sbr.rel (%p231) target = $region40
        $region39: #{transformer_forward.9} parent=35 // pred_region
          %s234 = sand.u32 %s147, 1
          %s235 = sand.u32 %s147, 1
          %s236 = smul.addr %s235, 32
          %s237 = scalar_lea.vmem [#allocation2], %s236
          %s238 = smul.addr %s23, 4
          %s239 = scalar_lea.vmem %s5, %s238
          // Predicated region
          $region41: #{transformer_forward.9} parent=39 // pred_check
            _
          $region42: #{transformer_forward.9} parent=39 // pred_check_branch
            %241 = sbr.rel (0) target = $region44
          $region43: #{transformer_forward.9} parent=39 // pred_region
            // Predicated region
            $region45: #{transformer_forward.9} parent=43 // pred_check
              _
            $region46: #{transformer_forward.9} parent=43 // pred_check_branch
              %243 = sbr.rel target = $region48
            $region47: #{transformer_forward.9} parent=43 // pred_region
              // Predicated region
              $region60: #{transformer_forward.9} parent=47 // pred_check
                _
              $region61: #{transformer_forward.9} parent=47 // pred_check_branch
                %272 = sbr.rel (0) target = $region63
              $region62: #{transformer_forward.9} parent=47 // pred_region
                loop: start=0, step=1, limit=1
                $region64: #{transformer_forward.9} parent=62 // loop_pre_header
                  _
                $region65: #{transformer_forward.9} parent=62 // loop_header
                  %s274 = sphi 0, %s278
                  %p275 = scmp.ge.s32.totalorder %s274, 1
                  %s279 = sphi %s239, %s239
                  %s280 = sphi %s237, %s237
                $region66: #{transformer_forward.9} parent=62 // loop_header_branch
                  %277 = sbr.rel (%p275) target = $region70
                $region67: #{transformer_forward.9} parent=62 // loop_body
                  _
                $region68: #{transformer_forward.9} parent=62 // loop_footer
                  %s278 = sadd.s32 1, %s274
                $region69: #{transformer_forward.9} parent=62 // loop_footer_branch
                  %273 = sbr.rel target = $region65
                $region70: #{transformer_forward.9} parent=62 // loop_exit
                  _
                loop: start=0, step=1, limit=1
                $region71: #{transformer_forward.9} parent=62 // loop_pre_header
                  _
                $region72: #{transformer_forward.9} parent=62 // loop_header
                  %s283 = sphi 0, %s287
                  %p284 = scmp.ge.s32.totalorder %s283, 1
                  %s288 = sphi %s239, %s239
                  %s289 = sphi %s237, %s237
                $region73: #{transformer_forward.9} parent=62 // loop_header_branch
                  %286 = sbr.rel (%p284) target = $region77
                $region74: #{transformer_forward.9} parent=62 // loop_body
                  %v290 = vld [vmem:[%s288] sm:$0xf]
                  %291 = vst [vmem:[%s289] sm:$0xf] %v290
                  %v292 = vld [vmem:[%s288 + $0x8] sm:$0xf]
                  %293 = vst [vmem:[%s289 + $0x4] sm:$0xf] %v292
                  %v294 = vld [vmem:[%s288 + $0x10] sm:$0xf]
                  %295 = vst [vmem:[%s289 + $0x8] sm:$0xf] %v294
                  %v296 = vld [vmem:[%s288 + $0x18] sm:$0xf]
                  %297 = vst [vmem:[%s289 + $0xc] sm:$0xf] %v296
                  %v298 = vld [vmem:[%s288 + $0x20] sm:$0xf]
                  %299 = vst [vmem:[%s289 + $0x10] sm:$0xf] %v298
                  %v300 = vld [vmem:[%s288 + $0x28] sm:$0xf]
                  %301 = vst [vmem:[%s289 + $0x14] sm:$0xf] %v300
                  %v302 = vld [vmem:[%s288 + $0x30] sm:$0xf]
                  %303 = vst [vmem:[%s289 + $0x18] sm:$0xf] %v302
                  %v304 = vld [vmem:[%s288 + $0x38] sm:$0xf]
                  %305 = vst [vmem:[%s289 + $0x1c] sm:$0xf] %v304
                $region75: #{transformer_forward.9} parent=62 // loop_footer
                  %s287 = sadd.s32 1, %s283
                $region76: #{transformer_forward.9} parent=62 // loop_footer_branch
                  %282 = sbr.rel target = $region72
                $region77: #{transformer_forward.9} parent=62 // loop_exit
                  _
              $region63: #{transformer_forward.9} parent=47 // pred_fallthru
                _
            $region48: #{transformer_forward.9} parent=43 // pred_fallthru
              _
            // Predicated region
            $region49: #{transformer_forward.9} parent=43 // pred_check
              _
            $region50: #{transformer_forward.9} parent=43 // pred_check_branch
              %245 = sbr.rel (0) target = $region52
            $region51: #{transformer_forward.9} parent=43 // pred_region
              loop: start=0, step=1, limit=1
              $region53: #{transformer_forward.9} parent=51 // loop_pre_header
                _
              $region54: #{transformer_forward.9} parent=51 // loop_header
                %s248 = sphi 0, %s252
                %p249 = scmp.ge.s32.totalorder %s248, 1
                %s253 = sphi %s239, %s239
                %s254 = sphi %s237, %s237
              $region55: #{transformer_forward.9} parent=51 // loop_header_branch
                %251 = sbr.rel (%p249) target = $region59
              $region56: #{transformer_forward.9} parent=51 // loop_body
                %v255 = vld [vmem:[%s253] sm:$0xf]
                %256 = vst [vmem:[%s254] sm:$0xf] %v255
                %v257 = vld [vmem:[%s253 + $0x8] sm:$0xf]
                %258 = vst [vmem:[%s254 + $0x4] sm:$0xf] %v257
                %v259 = vld [vmem:[%s253 + $0x10] sm:$0xf]
                %260 = vst [vmem:[%s254 + $0x8] sm:$0xf] %v259
                %v261 = vld [vmem:[%s253 + $0x18] sm:$0xf]
                %262 = vst [vmem:[%s254 + $0xc] sm:$0xf] %v261
                %v263 = vld [vmem:[%s253 + $0x20] sm:$0xf]
                %264 = vst [vmem:[%s254 + $0x10] sm:$0xf] %v263
                %v265 = vld [vmem:[%s253 + $0x28] sm:$0xf]
                %266 = vst [vmem:[%s254 + $0x14] sm:$0xf] %v265
                %v267 = vld [vmem:[%s253 + $0x30] sm:$0xf]
                %268 = vst [vmem:[%s254 + $0x18] sm:$0xf] %v267
                %v269 = vld [vmem:[%s253 + $0x38] sm:$0xf]
                %270 = vst [vmem:[%s254 + $0x1c] sm:$0xf] %v269
              $region57: #{transformer_forward.9} parent=51 // loop_footer
                %s252 = sadd.s32 1, %s248
              $region58: #{transformer_forward.9} parent=51 // loop_footer_branch
                %247 = sbr.rel target = $region54
              $region59: #{transformer_forward.9} parent=51 // loop_exit
                _
            $region52: #{transformer_forward.9} parent=43 // pred_fallthru
              _
          $region44: #{transformer_forward.9} parent=39 // pred_fallthru
            _
          %306 = vnop
        $region40: #{transformer_forward.9} parent=35 // pred_fallthru
          _
      $region36: #{transformer_forward.9} parent=5 // pred_fallthru
        _
      %p307 = scmp.le.s32.totalorder 1, %s15
      %p308 = scmp.lt.s32.totalorder %s15, 3
      %p309 = pnand %p307, %p308
      %p310 = pneg %p309
      // Predicated region
      $region78: #{transformer_forward.9} parent=5 // pred_check
        _
      $region79: #{transformer_forward.9} parent=5 // pred_check_branch
        %312 = sbr.rel (%p309) target = $region81
      $region80: #{transformer_forward.9} parent=5 // pred_region
        %s313 = ssub.s32 %s15, 1
        %s314 = sand.u32 %s150, 1
        %s315 = sand.u32 %s150, 1
        %s316 = smul.addr %s315, 32
        %s317 = scalar_lea.vmem [#allocation2], %s316
        // Predicated region
        $region82: #{transformer_forward.9} parent=80 // pred_check
          %p318 = pneg %p163
        $region83: #{transformer_forward.9} parent=80 // pred_check_branch
          %320 = sbr.rel (%p318) target = $region85
        $region84: #{transformer_forward.9} parent=80 // pred_region
          _
        $region85: #{transformer_forward.9} parent=80 // pred_fallthru
          _
        %s321 = smul.u32 2, %s24
        %p322 = scmp.lt.s32.totalorder %s321, 1
        %s323 = scalar_select %p322, %s321, 1
        %s324 = smul.addr %s323, 4
        %s325 = scalar_lea.vmem %s0, %s324
        %p326 = pneg %p53
        %p327 = pneg %p50
        %p328 = pneg %p74
        %p329 = pneg %p71
        %p330 = pneg %p95
        %p331 = pneg %p92
        %p332 = pneg %p116
        %p333 = pneg %p113
        %p334 = pneg %p137
        %p335 = pneg %p134
        %s336 = sand.u32 %s150, 1
        %s337 = sand.u32 %s150, 1
        %s338 = smul.addr %s337, 32
        %s339 = scalar_lea.vmem [#allocation2], %s338
        %p340 = pneg %p163
        %p341 = pneg %p160
        %p342 = pneg %p191
        %p343 = pneg %p188
        %s344 = sand.u32 %s178, 1
        %s345 = scalar_lea.sflag [#allocation4], %s344
        %s346 = sand.u32 %s178, 1
        %s347 = smul.addr %s346, 16
        %s348 = scalar_lea.vmem [#allocation3], %s347
        %s349 = smul.u32 2, %s24
        %p350 = scmp.lt.s32.totalorder %s349, 1
        %s351 = scalar_select %p350, %s349, 1
        %s352 = smul.addr %s351, 4
        %s353 = scalar_lea.vmem %s0, %s352
        %s354 = smul.u32 2, %s24
        %s355 = smul.u32 2, %s24
        %v357 = vld [vmem:[%s353] sm:$0xf]
        %v358 = vld [vmem:[%s353 + $0x4] sm:$0xf]
        %v359 = vld [vmem:[%s1] sm:$0xf]
        %v360 = vld [vmem:[%s1 + $0x4] sm:$0xf]
        %v361 = vld [vmem:[%s1 + $0x8] sm:$0xf]
        %v362 = vld [vmem:[%s1 + $0xc] sm:$0xf]
        %v363 = vld [vmem:[%s1 + $0x10] sm:$0xf]
        %v364 = vld [vmem:[%s1 + $0x14] sm:$0xf]
        %v365 = vld [vmem:[%s1 + $0x18] sm:$0xf]
        %v366 = vld [vmem:[%s1 + $0x1c] sm:$0xf]
        %v367 = vld [vmem:[%s2] sm:$0x1]
        %v369 = vlaneseq
        %v370 = vshrl.u32 %v369, 7
        %v371 = vsub.s32 0, %v370
        %v372 = vrot.slane %v367, %v371
        %v376 = vunpack.c.l.b16 %v357
        %v377 = vunpack.c.l.b16 %v358
        %v378 = vpack.c.b16 %v377, %v376
        %v387 = vunpack.c.l.b16 %v359
        %v388 = vunpack.c.l.b16 %v360
        %v389 = vunpack.c.l.b16 %v361
        %v390 = vunpack.c.l.b16 %v362
        %v391 = vunpack.c.l.b16 %v363
        %v392 = vunpack.c.l.b16 %v364
        %v393 = vunpack.c.l.b16 %v365
        %v394 = vunpack.c.l.b16 %v366
        %v395 = vpack.c.b16 %v388, %v387
        %v396 = vpack.c.b16 %v390, %v389
        %v397 = vpack.c.b16 %v392, %v391
        %v398 = vpack.c.b16 %v394, %v393
        %vm403 = vcmask 523264
        %v405 = vsel %vm403, %v378, 0
        %407 = vmatprep.subr.bf16.mxu0 0
        %408 = vmatpush1.bf16.msra.mxu0 %v395
        %409 = vmatprep.subr.bf16.mxu0 0
        %410 = vmatpush1.bf16.msra.mxu0 %v396
        %411 = vmatprep.subr.bf16.mxu0 0
        %412 = vmatpush1.bf16.msra.mxu0 %v397
        %413 = vmatprep.subr.bf16.mxu0 0
        %414 = vmatpush1.bf16.msra.mxu0 %v398
        %415 = vmatprep.subr.bf16.mxu0 0
        %416 = vmatpush1.bf16.msra.mxu0 0
        %417 = vmatprep.subr.bf16.mxu0 0
        %418 = vmatpush1.bf16.msra.mxu0 0
        %419 = vmatprep.subr.bf16.mxu0 0
        %420 = vmatpush1.bf16.msra.mxu0 0
        %421 = vmatprep.subr.bf16.mxu0 0
        %422 = vmatpush1.bf16.msra.mxu0 0
        %423 = vmatprep.subr.bf16.mxu0 0
        %424 = vmatpush1.bf16.msra.mxu0 0
        %425 = vmatprep.subr.bf16.mxu0 0
        %426 = vmatpush1.bf16.msra.mxu0 0
        %427 = vmatprep.subr.bf16.mxu0 0
        %428 = vmatpush1.bf16.msra.mxu0 0
        %429 = vmatprep.subr.bf16.mxu0 0
        %430 = vmatpush1.bf16.msra.mxu0 0
        %431 = vmatprep.subr.bf16.mxu0 0
        %432 = vmatpush1.bf16.msra.mxu0 0
        %433 = vmatprep.subr.bf16.mxu0 0
        %434 = vmatpush1.bf16.msra.mxu0 0
        %435 = vmatprep.subr.bf16.mxu0 0
        %436 = vmatpush1.bf16.msra.mxu0 0
        %437 = vmatprep.subr.bf16.mxu0 0
        %438 = vmatpush1.bf16.msra.mxu0 0
        %439 = vmatprep.mubr.bf16.mxu0 0
        %440 = vmatmul.mubr.bf16.gmra.mrb[0].mxu0 %v405
        %v441 = vpop.f32.mrb[0].mxu0
        %v442 = vadd.f32 %v372, %v441
        %v443 = vpop.f32.mrb[0].mxu0
        %v444 = vpop.f32.mrb[0].mxu0
        %v445 = vadd.f32 %v372, %v444
        %v446 = vpop.f32.mrb[0].mxu0
        %447 = vdwg.mxu0
        %v448 = vsel %vm403, %v442, 0.0
        %449 = vadd.xlane.f32.xlu0 %v448
        %v450 = vpop.xlane.xlu0 %449
        %v451 = vsel %vm403, %v445, 0.0
        %452 = vadd.xlane.f32.xlu0 %v451
        %v453 = vpop.xlane.xlu0 %452
        %v454 = vrcp.pop 64.0
        %v455 = vmul.f32 %v450, %v454
        %v456 = vmul.f32 %v453, %v454
        %v457 = vsub.f32 %v442, %v455
        %v458 = vsub.f32 %v445, %v456
        %v459 = vmul.f32 %v457, %v457
        %v460 = vmul.f32 %v458, %v458
        %v461 = vsel %vm403, %v459, 0.0
        %462 = vadd.xlane.f32.xlu0 %v461
        %v463 = vpop.xlane.xlu0 %462
        %v464 = vsel %vm403, %v460, 0.0
        %465 = vadd.xlane.f32.xlu0 %v464
        %v466 = vpop.xlane.xlu0 %465
        %v467 = vmul.f32 %v463, %v454
        %v468 = vmul.f32 %v466, %v454
        %v469 = vadd.f32 %v467, 1e-05
        %v470 = vadd.f32 %v468, 1e-05
        %v471 = vrsqrt.pop %v469
        %v472 = vrsqrt.pop %v470
        %v473 = vmul.f32 %v457, %v471
        %v474 = vmul.f32 %v458, %v472
        %v475 = vld [vmem:[%s3] sm:$0x1]
        %v477 = vlaneseq
        %v478 = vshrl.u32 %v477, 7
        %v479 = vsub.s32 0, %v478
        %v480 = vrot.slane %v475, %v479
        %v482 = vmul.f32 %v473, %v480
        %v483 = vmul.f32 %v474, %v480
        %v484 = vld [vmem:[%s4] sm:$0x1]
        %v486 = vlaneseq
        %v487 = vshrl.u32 %v486, 7
        %v488 = vsub.s32 0, %v487
        %v489 = vrot.slane %v484, %v488
        %v491 = vadd.f32 %v482, %v489
        %v492 = vadd.f32 %v483, %v489
        %v493 = vpack.c.bf16 %v492, %v491
        %v494 = vld [vmem:[%s317] sm:$0xf]
        %v495 = vld [vmem:[%s317 + $0x4] sm:$0xf]
        %v496 = vld [vmem:[%s317 + $0x8] sm:$0xf]
        %v497 = vld [vmem:[%s317 + $0xc] sm:$0xf]
        %v498 = vld [vmem:[%s317 + $0x10] sm:$0xf]
        %v499 = vld [vmem:[%s317 + $0x14] sm:$0xf]
        %v500 = vld [vmem:[%s317 + $0x18] sm:$0xf]
        %v501 = vld [vmem:[%s317 + $0x1c] sm:$0xf]
        %v510 = vunpack.c.l.b16 %v494
        %v511 = vunpack.c.l.b16 %v495
        %v512 = vunpack.c.l.b16 %v496
        %v513 = vunpack.c.l.b16 %v497
        %v514 = vunpack.c.l.b16 %v498
        %v515 = vunpack.c.l.b16 %v499
        %v516 = vunpack.c.l.b16 %v500
        %v517 = vunpack.c.l.b16 %v501
        %v518 = vpack.c.b16 %v511, %v510
        %v519 = vpack.c.b16 %v513, %v512
        %v520 = vpack.c.b16 %v515, %v514
        %v521 = vpack.c.b16 %v517, %v516
        %v527 = vsel %vm403, %v493, 0
        %529 = vmatprep.subr.bf16.mxu0 0
        %530 = vmatpush1.bf16.msra.mxu0 %v518
        %531 = vmatprep.subr.bf16.mxu0 0
        %532 = vmatpush1.bf16.msra.mxu0 %v519
        %533 = vmatprep.subr.bf16.mxu0 0
        %534 = vmatpush1.bf16.msra.mxu0 %v520
        %535 = vmatprep.subr.bf16.mxu0 0
        %536 = vmatpush1.bf16.msra.mxu0 %v521
        %537 = vmatprep.subr.bf16.mxu0 0
        %538 = vmatpush1.bf16.msra.mxu0 0
        %539 = vmatprep.subr.bf16.mxu0 0
        %540 = vmatpush1.bf16.msra.mxu0 0
        %541 = vmatprep.subr.bf16.mxu0 0
        %542 = vmatpush1.bf16.msra.mxu0 0
        %543 = vmatprep.subr.bf16.mxu0 0
        %544 = vmatpush1.bf16.msra.mxu0 0
        %545 = vmatprep.subr.bf16.mxu0 0
        %546 = vmatpush1.bf16.msra.mxu0 0
        %547 = vmatprep.subr.bf16.mxu0 0
        %548 = vmatpush1.bf16.msra.mxu0 0
        %549 = vmatprep.subr.bf16.mxu0 0
        %550 = vmatpush1.bf16.msra.mxu0 0
        %551 = vmatprep.subr.bf16.mxu0 0
        %552 = vmatpush1.bf16.msra.mxu0 0
        %553 = vmatprep.subr.bf16.mxu0 0
        %554 = vmatpush1.bf16.msra.mxu0 0
        %555 = vmatprep.subr.bf16.mxu0 0
        %556 = vmatpush1.bf16.msra.mxu0 0
        %557 = vmatprep.subr.bf16.mxu0 0
        %558 = vmatpush1.bf16.msra.mxu0 0
        %559 = vmatprep.subr.bf16.mxu0 0
        %560 = vmatpush1.bf16.msra.mxu0 0
        %561 = vmatprep.mubr.bf16.mxu0 0
        %562 = vmatmul.mubr.bf16.gmra.mrb[0].mxu0 %v527
        %v563 = vpop.f32.mrb[0].mxu0
        %v564 = vadd.f32 0.0, %v563
        %v565 = vpop.f32.mrb[0].mxu0
        %v566 = vpop.f32.mrb[0].mxu0
        %v567 = vadd.f32 0.0, %v566
        %v568 = vpop.f32.mrb[0].mxu0
        %569 = vdwg.mxu0
        %570 = vst [vmem:[%s348] sm:$0xff] %v564
        %571 = vst [vmem:[%s348 + $0x8] sm:$0xff] %v567
        %s572 = sand.u32 %s178, 1
        %s573 = scalar_lea.sflag [#allocation4], %s572
        %s574 = sand.u32 %s178, 1
        %s575 = smul.addr %s574, 16
        %s576 = scalar_lea.vmem [#allocation3], %s575
        // Predicated region
        $region86: #{transformer_forward.9} parent=80 // pred_check
          %p577 = pneg %p188
        $region87: #{transformer_forward.9} parent=80 // pred_check_branch
          %579 = sbr.rel (%p577) target = $region89
        $region88: #{transformer_forward.9} parent=80 // pred_region
          %s580 = smul.u32 2, %s24
          %s582 = ssub.s32 256, 256
          %583 = vsyncadd %s573, %s582
          %s584 = smul.addr %s580, 2
          %s585 = sadd.s32 %s25, %s584
          %s586 = smul.addr %s585, 128
          %s587 = scalar_lea.hbm %s6, %s586
          %s588 = sshll.u32 %s576, 4
          %s589 = int_to_ptr.vmem [resolvable:$true] %s588
          %594 = dma.vmem_to_hbm [thread:$0]  %s589, 256, %s587, %s573, 128, 256, 8
        $region89: #{transformer_forward.9} parent=80 // pred_fallthru
          _
      $region81: #{transformer_forward.9} parent=5 // pred_fallthru
        _
      %p595 = scmp.le.s32.totalorder 2, %s15
      // Predicated region
      $region90: #{transformer_forward.9} parent=5 // pred_check
        %p596 = pneg %p595
      $region91: #{transformer_forward.9} parent=5 // pred_check_branch
        %598 = sbr.rel (%p596) target = $region93
      $region92: #{transformer_forward.9} parent=5 // pred_region
        %s599 = ssub.s32 %s15, 2
        // Predicated region
        $region94: #{transformer_forward.9} parent=92 // pred_check
          %p600 = pneg %p194
        $region95: #{transformer_forward.9} parent=92 // pred_check_branch
          %602 = sbr.rel (%p600) target = $region97
        $region96: #{transformer_forward.9} parent=92 // pred_region
          %s603 = sand.u32 %s179, 1
          %s604 = scalar_lea.sflag [#allocation4], %s603
          %s605 = sand.u32 %s179, 1
          %s606 = smul.addr %s605, 16
          %s607 = scalar_lea.vmem [#allocation3], %s606
          %608 = dma.done %s604, 256
        $region97: #{transformer_forward.9} parent=92 // pred_fallthru
          _
      $region93: #{transformer_forward.9} parent=5 // pred_fallthru
        _
    $region6: #{transformer_forward.9} parent=1 // loop_footer
      %s19 = sadd.s32 1, %s15
    $region7: #{transformer_forward.9} parent=1 // loop_footer_branch
      %14 = sbr.rel target = $region3
    $region8: #{transformer_forward.9} parent=1 // loop_exit
      _
    %609 = vsyncpa [#allocation4], 1
    %s610 = scalar_lea.sflag [#allocation4], 1
    %611 = vsyncpa %s610, 1

// kernel: transformer_forward.7
$region0: #{transformer_forward.7}
  #allocation0 [shape = 'u32[]', space=smem, size = 0x4, offset = 0x4, fixed_abs, tag = 'smem constant byte address 0x4 - core index']
  #allocation1 [shape = 'u32[144,128]{1,0:T(1,128)}', space=vmem, size = 0x12000, scoped, tag = 'internal scratch']
  #allocation2 [shape = 'bf16[8,64]{1,0:T(8,128)(2,1)}', space=vmem, size = 0x800, scoped, tag = 'scratch operand']
  %s0 = inlined_call_operand.vmem [shape: bf16[2,8,64], index: 0, kind: input, shape index: {}]
  %s1 = inlined_call_operand.vmem [shape: f32[1,64], index: 1, kind: input, shape index: {}]
  %s2 = inlined_call_operand.vmem [shape: f32[1,64], index: 2, kind: input, shape index: {}]
  %s3 = inlined_call_operand.vmem [shape: bf16[64,192], index: 3, kind: input, shape index: {}]
  %s4 = inlined_call_operand.vmem [shape: f32[1,192], index: 4, kind: input, shape index: {}]
  %s5 = inlined_call_operand.vmem [shape: bf16[64,64], index: 5, kind: input, shape index: {}]
  %s6 = inlined_call_operand.vmem [shape: f32[1,64], index: 6, kind: input, shape index: {}]
  %s7 = inlined_call_operand.vmem [shape: f32[1,64], index: 7, kind: input, shape index: {}]
  %s8 = inlined_call_operand.vmem [shape: f32[1,64], index: 8, kind: input, shape index: {}]
  %s9 = inlined_call_operand.vmem [shape: bf16[64,128], index: 9, kind: input, shape index: {}]
  %s10 = inlined_call_operand.vmem [shape: f32[1,128], index: 10, kind: input, shape index: {}]
  %s11 = inlined_call_operand.vmem [shape: bf16[128,64], index: 11, kind: input, shape index: {}]
  %s12 = inlined_call_operand.vmem [shape: f32[1,64], index: 12, kind: input, shape index: {}]
  %s13 = inlined_call_operand.vmem [shape: bf16[2,8,64], index: 13, kind: output, shape index: {0}]
  %s14 = inlined_call_operand.vmem [shape: bf16[2,4,8,8], index: 14, kind: output, shape index: {1}]
  %15 = xla_tuple %s13, %s14
  %s16 = sld [smem:[#allocation0]]
  $region93: #{transformer_forward.7} parent=0
    _
  %s18 = ssub.s32 1, %s16
  %s19 = scalar_select 0, %s18, %s16
  loop: start=0, step=1, limit=4
  $region2: #{transformer_forward.7} parent=0 // loop_pre_header
    _
  $region3: #{transformer_forward.7} parent=0 // loop_header
    %s21 = sphi 0, %s25
    %p22 = scmp.ge.s32.totalorder %s21, 4
    %s31 = sphi 0, %s33
    %s34 = sphi 0, %s31
    %s35 = sphi 0, %s34
    %s51 = sphi 0, %s35
    %s55 = sphi 0, %s55
    %s57 = sphi 0, %s55
    %s58 = sphi 0, %s57
    %s72 = sphi 0, %s58
    %s76 = sphi 0, %s76
    %s78 = sphi 0, %s76
    %s79 = sphi 0, %s78
    %s93 = sphi 0, %s79
    %s97 = sphi 0, %s97
    %s99 = sphi 0, %s97
    %s100 = sphi 0, %s99
    %s114 = sphi 0, %s100
    %s118 = sphi 0, %s118
    %s120 = sphi 0, %s118
    %s121 = sphi 0, %s120
    %s135 = sphi 0, %s121
    %s139 = sphi 0, %s139
    %s141 = sphi 0, %s139
    %s142 = sphi 0, %s141
    %s156 = sphi 0, %s142
    %s160 = sphi 0, %s160
    %s162 = sphi 0, %s160
    %s163 = sphi 0, %s162
    %s177 = sphi 0, %s163
    %s181 = sphi 0, %s181
    %s183 = sphi 0, %s181
    %s184 = sphi 0, %s183
    %s198 = sphi 0, %s184
    %s202 = sphi 0, %s202
    %s204 = sphi 0, %s202
    %s205 = sphi 0, %s204
    %s219 = sphi 0, %s205
    %s223 = sphi 0, %s223
    %s225 = sphi 0, %s223
    %s226 = sphi 0, %s225
    %s240 = sphi 0, %s226
    %s244 = sphi 0, %s244
    %s246 = sphi 0, %s244
    %s247 = sphi 0, %s246
    %s261 = sphi 0, %s247
    %s265 = sphi 0, %s265
    %s267 = sphi 0, %s265
    %s268 = sphi 0, %s267
    %s282 = sphi 0, %s268
    %s286 = sphi 0, %s286
    %s288 = sphi 0, %s286
    %s289 = sphi 0, %s288
    %s303 = sphi 0, %s289
    %s309 = sphi 0, %s311
    %s312 = sphi 0, %s309
    %s313 = sphi 0, %s312
    %s329 = sphi 0, %s313
    %s335 = sphi 0, %s337
    %s338 = sphi 0, %s335
    %s339 = sphi 0, %s338
    %s355 = sphi 0, %s339
  $region4: #{transformer_forward.7} parent=0 // loop_header_branch
    %24 = sbr.rel (%p22) target = $region8
  $region5: #{transformer_forward.7} parent=0 // loop_body
    %s26 = ssub.s32 %s21, 1
    %s27 = ssub.s32 %s21, 2
    %s28 = sadd.s32 %s21, 1
    %s29 = ssub.s32 %s21, %s28
    %p30 = scmp.eq.s32.totalorder %s29, 0
    %s32 = sadd.s32 %s31, 1
    %s33 = scalar_select %p30, %s31, %s32
    %p36 = pneg %p30
    %p37 = scmp.eq.s32.totalorder %s21, 1
    %p38 = por %p36, %p37
    %p39 = scmp.ne.s32.totalorder %s31, %s34
    %p40 = scmp.eq.s32.totalorder %s21, 0
    %p41 = por %p39, %p40
    %p42 = scmp.ne.s32.totalorder %s31, %s34
    %p43 = scmp.eq.s32.totalorder %s26, 1
    %p44 = por %p42, %p43
    %p45 = scmp.ne.s32.totalorder %s34, %s35
    %p46 = scmp.eq.s32.totalorder %s26, 0
    %p47 = por %p45, %p46
    %p48 = scmp.ne.s32.totalorder %s34, %s35
    %p49 = scmp.eq.s32.totalorder %s27, 1
    %p50 = por %p48, %p49
    %p52 = scmp.ne.s32.totalorder %s35, %s51
    %p53 = scmp.eq.s32.totalorder %s27, 0
    %p54 = por %p52, %p53
    %s56 = sadd.s32 %s55, 1
    %p59 = scmp.eq.s32.totalorder %s21, 1
    %p60 = scmp.ne.s32.totalorder %s55, %s57
    %p61 = scmp.eq.s32.totalorder %s21, 0
    %p62 = por %p60, %p61
    %p63 = scmp.ne.s32.totalorder %s55, %s57
    %p64 = scmp.eq.s32.totalorder %s26, 1
    %p65 = por %p63, %p64
    %p66 = scmp.ne.s32.totalorder %s57, %s58
    %p67 = scmp.eq.s32.totalorder %s26, 0
    %p68 = por %p66, %p67
    %p69 = scmp.ne.s32.totalorder %s57, %s58
    %p70 = scmp.eq.s32.totalorder %s27, 1
    %p71 = por %p69, %p70
    %p73 = scmp.ne.s32.totalorder %s58, %s72
    %p74 = scmp.eq.s32.totalorder %s27, 0
    %p75 = por %p73, %p74
    %s77 = sadd.s32 %s76, 1
    %p80 = scmp.eq.s32.totalorder %s21, 1
    %p81 = scmp.ne.s32.totalorder %s76, %s78
    %p82 = scmp.eq.s32.totalorder %s21, 0
    %p83 = por %p81, %p82
    %p84 = scmp.ne.s32.totalorder %s76, %s78
    %p85 = scmp.eq.s32.totalorder %s26, 1
    %p86 = por %p84, %p85
    %p87 = scmp.ne.s32.totalorder %s78, %s79
    %p88 = scmp.eq.s32.totalorder %s26, 0
    %p89 = por %p87, %p88
    %p90 = scmp.ne.s32.totalorder %s78, %s79
    %p91 = scmp.eq.s32.totalorder %s27, 1
    %p92 = por %p90, %p91
    %p94 = scmp.ne.s32.totalorder %s79, %s93
    %p95 = scmp.eq.s32.totalorder %s27, 0
    %p96 = por %p94, %p95
    %s98 = sadd.s32 %s97, 1
    %p101 = scmp.eq.s32.totalorder %s21, 1
    %p102 = scmp.ne.s32.totalorder %s97, %s99
    %p103 = scmp.eq.s32.totalorder %s21, 0
    %p104 = por %p102, %p103
    %p105 = scmp.ne.s32.totalorder %s97, %s99
    %p106 = scmp.eq.s32.totalorder %s26, 1
    %p107 = por %p105, %p106
    %p108 = scmp.ne.s32.totalorder %s99, %s100
    %p109 = scmp.eq.s32.totalorder %s26, 0
    %p110 = por %p108, %p109
    %p111 = scmp.ne.s32.totalorder %s99, %s100
    %p112 = scmp.eq.s32.totalorder %s27, 1
    %p113 = por %p111, %p112
    %p115 = scmp.ne.s32.totalorder %s100, %s114
    %p116 = scmp.eq.s32.totalorder %s27, 0
    %p117 = por %p115, %p116
    %s119 = sadd.s32 %s118, 1
    %p122 = scmp.eq.s32.totalorder %s21, 1
    %p123 = scmp.ne.s32.totalorder %s118, %s120
    %p124 = scmp.eq.s32.totalorder %s21, 0
    %p125 = por %p123, %p124
    %p126 = scmp.ne.s32.totalorder %s118, %s120
    %p127 = scmp.eq.s32.totalorder %s26, 1
    %p128 = por %p126, %p127
    %p129 = scmp.ne.s32.totalorder %s120, %s121
    %p130 = scmp.eq.s32.totalorder %s26, 0
    %p131 = por %p129, %p130
    %p132 = scmp.ne.s32.totalorder %s120, %s121
    %p133 = scmp.eq.s32.totalorder %s27, 1
    %p134 = por %p132, %p133
    %p136 = scmp.ne.s32.totalorder %s121, %s135
    %p137 = scmp.eq.s32.totalorder %s27, 0
    %p138 = por %p136, %p137
    %s140 = sadd.s32 %s139, 1
    %p143 = scmp.eq.s32.totalorder %s21, 1
    %p144 = scmp.ne.s32.totalorder %s139, %s141
    %p145 = scmp.eq.s32.totalorder %s21, 0
    %p146 = por %p144, %p145
    %p147 = scmp.ne.s32.totalorder %s139, %s141
    %p148 = scmp.eq.s32.totalorder %s26, 1
    %p149 = por %p147, %p148
    %p150 = scmp.ne.s32.totalorder %s141, %s142
    %p151 = scmp.eq.s32.totalorder %s26, 0
    %p152 = por %p150, %p151
    %p153 = scmp.ne.s32.totalorder %s141, %s142
    %p154 = scmp.eq.s32.totalorder %s27, 1
    %p155 = por %p153, %p154
    %p157 = scmp.ne.s32.totalorder %s142, %s156
    %p158 = scmp.eq.s32.totalorder %s27, 0
    %p159 = por %p157, %p158
    %s161 = sadd.s32 %s160, 1
    %p164 = scmp.eq.s32.totalorder %s21, 1
    %p165 = scmp.ne.s32.totalorder %s160, %s162
    %p166 = scmp.eq.s32.totalorder %s21, 0
    %p167 = por %p165, %p166
    %p168 = scmp.ne.s32.totalorder %s160, %s162
    %p169 = scmp.eq.s32.totalorder %s26, 1
    %p170 = por %p168, %p169
    %p171 = scmp.ne.s32.totalorder %s162, %s163
    %p172 = scmp.eq.s32.totalorder %s26, 0
    %p173 = por %p171, %p172
    %p174 = scmp.ne.s32.totalorder %s162, %s163
    %p175 = scmp.eq.s32.totalorder %s27, 1
    %p176 = por %p174, %p175
    %p178 = scmp.ne.s32.totalorder %s163, %s177
    %p179 = scmp.eq.s32.totalorder %s27, 0
    %p180 = por %p178, %p179
    %s182 = sadd.s32 %s181, 1
    %p185 = scmp.eq.s32.totalorder %s21, 1
    %p186 = scmp.ne.s32.totalorder %s181, %s183
    %p187 = scmp.eq.s32.totalorder %s21, 0
    %p188 = por %p186, %p187
    %p189 = scmp.ne.s32.totalorder %s181, %s183
    %p190 = scmp.eq.s32.totalorder %s26, 1
    %p191 = por %p189, %p190
    %p192 = scmp.ne.s32.totalorder %s183, %s184
    %p193 = scmp.eq.s32.totalorder %s26, 0
    %p194 = por %p192, %p193
    %p195 = scmp.ne.s32.totalorder %s183, %s184
    %p196 = scmp.eq.s32.totalorder %s27, 1
    %p197 = por %p195, %p196
    %p199 = scmp.ne.s32.totalorder %s184, %s198
    %p200 = scmp.eq.s32.totalorder %s27, 0
    %p201 = por %p199, %p200
    %s203 = sadd.s32 %s202, 1
    %p206 = scmp.eq.s32.totalorder %s21, 1
    %p207 = scmp.ne.s32.totalorder %s202, %s204
    %p208 = scmp.eq.s32.totalorder %s21, 0
    %p209 = por %p207, %p208
    %p210 = scmp.ne.s32.totalorder %s202, %s204
    %p211 = scmp.eq.s32.totalorder %s26, 1
    %p212 = por %p210, %p211
    %p213 = scmp.ne.s32.totalorder %s204, %s205
    %p214 = scmp.eq.s32.totalorder %s26, 0
    %p215 = por %p213, %p214
    %p216 = scmp.ne.s32.totalorder %s204, %s205
    %p217 = scmp.eq.s32.totalorder %s27, 1
    %p218 = por %p216, %p217
    %p220 = scmp.ne.s32.totalorder %s205, %s219
    %p221 = scmp.eq.s32.totalorder %s27, 0
    %p222 = por %p220, %p221
    %s224 = sadd.s32 %s223, 1
    %p227 = scmp.eq.s32.totalorder %s21, 1
    %p228 = scmp.ne.s32.totalorder %s223, %s225
    %p229 = scmp.eq.s32.totalorder %s21, 0
    %p230 = por %p228, %p229
    %p231 = scmp.ne.s32.totalorder %s223, %s225
    %p232 = scmp.eq.s32.totalorder %s26, 1
    %p233 = por %p231, %p232
    %p234 = scmp.ne.s32.totalorder %s225, %s226
    %p235 = scmp.eq.s32.totalorder %s26, 0
    %p236 = por %p234, %p235
    %p237 = scmp.ne.s32.totalorder %s225, %s226
    %p238 = scmp.eq.s32.totalorder %s27, 1
    %p239 = por %p237, %p238
    %p241 = scmp.ne.s32.totalorder %s226, %s240
    %p242 = scmp.eq.s32.totalorder %s27, 0
    %p243 = por %p241, %p242
    %s245 = sadd.s32 %s244, 1
    %p248 = scmp.eq.s32.totalorder %s21, 1
    %p249 = scmp.ne.s32.totalorder %s244, %s246
    %p250 = scmp.eq.s32.totalorder %s21, 0
    %p251 = por %p249, %p250
    %p252 = scmp.ne.s32.totalorder %s244, %s246
    %p253 = scmp.eq.s32.totalorder %s26, 1
    %p254 = por %p252, %p253
    %p255 = scmp.ne.s32.totalorder %s246, %s247
    %p256 = scmp.eq.s32.totalorder %s26, 0
    %p257 = por %p255, %p256
    %p258 = scmp.ne.s32.totalorder %s246, %s247
    %p259 = scmp.eq.s32.totalorder %s27, 1
    %p260 = por %p258, %p259
    %p262 = scmp.ne.s32.totalorder %s247, %s261
    %p263 = scmp.eq.s32.totalorder %s27, 0
    %p264 = por %p262, %p263
    %s266 = sadd.s32 %s265, 1
    %p269 = scmp.eq.s32.totalorder %s21, 1
    %p270 = scmp.ne.s32.totalorder %s265, %s267
    %p271 = scmp.eq.s32.totalorder %s21, 0
    %p272 = por %p270, %p271
    %p273 = scmp.ne.s32.totalorder %s265, %s267
    %p274 = scmp.eq.s32.totalorder %s26, 1
    %p275 = por %p273, %p274
    %p276 = scmp.ne.s32.totalorder %s267, %s268
    %p277 = scmp.eq.s32.totalorder %s26, 0
    %p278 = por %p276, %p277
    %p279 = scmp.ne.s32.totalorder %s267, %s268
    %p280 = scmp.eq.s32.totalorder %s27, 1
    %p281 = por %p279, %p280
    %p283 = scmp.ne.s32.totalorder %s268, %s282
    %p284 = scmp.eq.s32.totalorder %s27, 0
    %p285 = por %p283, %p284
    %s287 = sadd.s32 %s286, 1
    %p290 = scmp.eq.s32.totalorder %s21, 1
    %p291 = scmp.ne.s32.totalorder %s286, %s288
    %p292 = scmp.eq.s32.totalorder %s21, 0
    %p293 = por %p291, %p292
    %p294 = scmp.ne.s32.totalorder %s286, %s288
    %p295 = scmp.eq.s32.totalorder %s26, 1
    %p296 = por %p294, %p295
    %p297 = scmp.ne.s32.totalorder %s288, %s289
    %p298 = scmp.eq.s32.totalorder %s26, 0
    %p299 = por %p297, %p298
    %p300 = scmp.ne.s32.totalorder %s288, %s289
    %p301 = scmp.eq.s32.totalorder %s27, 1
    %p302 = por %p300, %p301
    %p304 = scmp.ne.s32.totalorder %s289, %s303
    %p305 = scmp.eq.s32.totalorder %s27, 0
    %p306 = por %p304, %p305
    %s307 = ssub.s32 %s21, %s28
    %p308 = scmp.eq.s32.totalorder %s307, 0
    %s310 = sadd.s32 %s309, 1
    %s311 = scalar_select %p308, %s309, %s310
    %p314 = pneg %p308
    %p315 = scmp.eq.s32.totalorder %s21, 1
    %p316 = por %p314, %p315
    %p317 = scmp.ne.s32.totalorder %s309, %s312
    %p318 = scmp.eq.s32.totalorder %s21, 0
    %p319 = por %p317, %p318
    %p320 = scmp.ne.s32.totalorder %s309, %s312
    %p321 = scmp.eq.s32.totalorder %s26, 1
    %p322 = por %p320, %p321
    %p323 = scmp.ne.s32.totalorder %s312, %s313
    %p324 = scmp.eq.s32.totalorder %s26, 0
    %p325 = por %p323, %p324
    %p326 = scmp.ne.s32.totalorder %s312, %s313
    %p327 = scmp.eq.s32.totalorder %s27, 1
    %p328 = por %p326, %p327
    %p330 = scmp.ne.s32.totalorder %s313, %s329
    %p331 = scmp.eq.s32.totalorder %s27, 0
    %p332 = por %p330, %p331
    %s333 = ssub.s32 %s21, %s28
    %p334 = scmp.eq.s32.totalorder %s333, 0
    %s336 = sadd.s32 %s335, 1
    %s337 = scalar_select %p334, %s335, %s336
    %p340 = pneg %p334
    %p341 = scmp.eq.s32.totalorder %s21, 1
    %p342 = por %p340, %p341
    %p343 = scmp.ne.s32.totalorder %s335, %s338
    %p344 = scmp.eq.s32.totalorder %s21, 0
    %p345 = por %p343, %p344
    %p346 = scmp.ne.s32.totalorder %s335, %s338
    %p347 = scmp.eq.s32.totalorder %s26, 1
    %p348 = por %p346, %p347
    %p349 = scmp.ne.s32.totalorder %s338, %s339
    %p350 = scmp.eq.s32.totalorder %s26, 0
    %p351 = por %p349, %p350
    %p352 = scmp.ne.s32.totalorder %s338, %s339
    %p353 = scmp.eq.s32.totalorder %s27, 1
    %p354 = por %p352, %p353
    %p356 = scmp.ne.s32.totalorder %s339, %s355
    %p357 = scmp.eq.s32.totalorder %s27, 0
    %p358 = por %p356, %p357
    %p359 = scmp.le.s32.totalorder 1, %s21
    %p360 = scmp.lt.s32.totalorder %s21, 3
    %p361 = pnand %p359, %p360
    %p362 = pneg %p361
    // Predicated region
    $region9: #{transformer_forward.7} parent=5 // pred_check
      _
    $region10: #{transformer_forward.7} parent=5 // pred_check_branch
      %364 = sbr.rel (%p361) target = $region12
    $region11: #{transformer_forward.7} parent=5 // pred_region
      %s365 = ssub.s32 %s21, 1
      // Predicated region
      $region13: #{transformer_forward.7} parent=11 // pred_check
        %p366 = pneg %p68
      $region14: #{transformer_forward.7} parent=11 // pred_check_branch
        %368 = sbr.rel (%p366) target = $region16
      $region15: #{transformer_forward.7} parent=11 // pred_region
        _
      $region16: #{transformer_forward.7} parent=11 // pred_fallthru
        _
      // Predicated region
      $region17: #{transformer_forward.7} parent=11 // pred_check
        %p369 = pneg %p89
      $region18: #{transformer_forward.7} parent=11 // pred_check_branch
        %371 = sbr.rel (%p369) target = $region20
      $region19: #{transformer_forward.7} parent=11 // pred_region
        _
      $region20: #{transformer_forward.7} parent=11 // pred_fallthru
        _
      // Predicated region
      $region21: #{transformer_forward.7} parent=11 // pred_check
        %p372 = pneg %p110
      $region22: #{transformer_forward.7} parent=11 // pred_check_branch
        %374 = sbr.rel (%p372) target = $region24
      $region23: #{transformer_forward.7} parent=11 // pred_region
        _
      $region24: #{transformer_forward.7} parent=11 // pred_fallthru
        _
      // Predicated region
      $region25: #{transformer_forward.7} parent=11 // pred_check
        %p375 = pneg %p131
      $region26: #{transformer_forward.7} parent=11 // pred_check_branch
        %377 = sbr.rel (%p375) target = $region28
      $region27: #{transformer_forward.7} parent=11 // pred_region
        _
      $region28: #{transformer_forward.7} parent=11 // pred_fallthru
        _
      // Predicated region
      $region29: #{transformer_forward.7} parent=11 // pred_check
        %p378 = pneg %p152
      $region30: #{transformer_forward.7} parent=11 // pred_check_branch
        %380 = sbr.rel (%p378) target = $region32
      $region31: #{transformer_forward.7} parent=11 // pred_region
        _
      $region32: #{transformer_forward.7} parent=11 // pred_fallthru
        _
      // Predicated region
      $region33: #{transformer_forward.7} parent=11 // pred_check
        %p381 = pneg %p173
      $region34: #{transformer_forward.7} parent=11 // pred_check_branch
        %383 = sbr.rel (%p381) target = $region36
      $region35: #{transformer_forward.7} parent=11 // pred_region
        _
      $region36: #{transformer_forward.7} parent=11 // pred_fallthru
        _
      // Predicated region
      $region37: #{transformer_forward.7} parent=11 // pred_check
        %p384 = pneg %p194
      $region38: #{transformer_forward.7} parent=11 // pred_check_branch
        %386 = sbr.rel (%p384) target = $region40
      $region39: #{transformer_forward.7} parent=11 // pred_region
        _
      $region40: #{transformer_forward.7} parent=11 // pred_fallthru
        _
      // Predicated region
      $region41: #{transformer_forward.7} parent=11 // pred_check
        %p387 = pneg %p215
      $region42: #{transformer_forward.7} parent=11 // pred_check_branch
        %389 = sbr.rel (%p387) target = $region44
      $region43: #{transformer_forward.7} parent=11 // pred_region
        _
      $region44: #{transformer_forward.7} parent=11 // pred_fallthru
        _
      // Predicated region
      $region45: #{transformer_forward.7} parent=11 // pred_check
        %p390 = pneg %p236
      $region46: #{transformer_forward.7} parent=11 // pred_check_branch
        %392 = sbr.rel (%p390) target = $region48
      $region47: #{transformer_forward.7} parent=11 // pred_region
        _
      $region48: #{transformer_forward.7} parent=11 // pred_fallthru
        _
      // Predicated region
      $region49: #{transformer_forward.7} parent=11 // pred_check
        %p393 = pneg %p257
      $region50: #{transformer_forward.7} parent=11 // pred_check_branch
        %395 = sbr.rel (%p393) target = $region52
      $region51: #{transformer_forward.7} parent=11 // pred_region
        _
      $region52: #{transformer_forward.7} parent=11 // pred_fallthru
        _
      // Predicated region
      $region53: #{transformer_forward.7} parent=11 // pred_check
        %p396 = pneg %p278
      $region54: #{transformer_forward.7} parent=11 // pred_check_branch
        %398 = sbr.rel (%p396) target = $region56
      $region55: #{transformer_forward.7} parent=11 // pred_region
        _
      $region56: #{transformer_forward.7} parent=11 // pred_fallthru
        _
      // Predicated region
      $region57: #{transformer_forward.7} parent=11 // pred_check
        %p399 = pneg %p299
      $region58: #{transformer_forward.7} parent=11 // pred_check_branch
        %401 = sbr.rel (%p399) target = $region60
      $region59: #{transformer_forward.7} parent=11 // pred_region
        _
      $region60: #{transformer_forward.7} parent=11 // pred_fallthru
        _
    $region12: #{transformer_forward.7} parent=5 // pred_fallthru
      _
    %p402 = scmp.lt.s32.totalorder %s21, 2
    // Predicated region
    $region61: #{transformer_forward.7} parent=5 // pred_check
      %p403 = pneg %p402
    $region62: #{transformer_forward.7} parent=5 // pred_check_branch
      %405 = sbr.rel (%p403) target = $region64
    $region63: #{transformer_forward.7} parent=5 // pred_region
      // Predicated region
      $region65: #{transformer_forward.7} parent=63 // pred_check
        %p406 = pneg %p41
      $region66: #{transformer_forward.7} parent=63 // pred_check_branch
        %408 = sbr.rel (%p406) target = $region68
      $region67: #{transformer_forward.7} parent=63 // pred_region
        %p409 = scmp.lt.s32.totalorder %s21, 1
        %s410 = scalar_select %p409, %s21, 1
        %s411 = smul.addr %s410, 4
        %s412 = scalar_lea.vmem %s0, %s411
      $region68: #{transformer_forward.7} parent=63 // pred_fallthru
        _
    $region64: #{transformer_forward.7} parent=5 // pred_fallthru
      _
    %p413 = scmp.le.s32.totalorder 1, %s21
    %p414 = scmp.lt.s32.totalorder %s21, 3
    %p415 = pnand %p413, %p414
    %p416 = pneg %p415
    // Predicated region
    $region69: #{transformer_forward.7} parent=5 // pred_check
      _
    $region70: #{transformer_forward.7} parent=5 // pred_check_branch
      %418 = sbr.rel (%p415) target = $region72
    $region71: #{transformer_forward.7} parent=5 // pred_region
      %s419 = ssub.s32 %s21, 1
      %p420 = scmp.lt.s32.totalorder %s26, 1
      %s421 = scalar_select %p420, %s26, 1
      %s422 = smul.addr %s421, 4
      %s423 = scalar_lea.vmem %s0, %s422
      %p424 = pneg %p47
      %p425 = pneg %p44
      %p426 = pneg %p68
      %p427 = pneg %p65
      %p428 = pneg %p89
      %p429 = pneg %p86
      %p430 = pneg %p110
      %p431 = pneg %p107
      %p432 = pneg %p131
      %p433 = pneg %p128
      %p434 = pneg %p152
      %p435 = pneg %p149
      %p436 = pneg %p173
      %p437 = pneg %p170
      %p438 = pneg %p194
      %p439 = pneg %p191
      %p440 = pneg %p215
      %p441 = pneg %p212
      %p442 = pneg %p236
      %p443 = pneg %p233
      %p444 = pneg %p257
      %p445 = pneg %p254
      %p446 = pneg %p278
      %p447 = pneg %p275
      %p448 = pneg %p299
      %p449 = pneg %p296
      %p450 = pneg %p325
      %p451 = pneg %p322
      %p452 = scmp.lt.s32.totalorder %s26, 1
      %s453 = scalar_select %p452, %s26, 1
      %s454 = smul.addr %s453, 4
      %s455 = scalar_lea.vmem %s13, %s454
      %p456 = pneg %p351
      %p457 = pneg %p348
      %p458 = scmp.lt.s32.totalorder %s26, 1
      %s459 = scalar_select %p458, %s26, 1
      %s460 = smul.addr %s459, 4
      %s461 = smul.addr %s460, 4
      %s462 = scalar_lea.vmem %s14, %s461
      %p463 = scmp.lt.s32.totalorder %s26, 1
      %s464 = scalar_select %p463, %s26, 1
      %s465 = smul.addr %s464, 4
      %s466 = scalar_lea.vmem %s0, %s465
      %p467 = scmp.lt.s32.totalorder %s26, 1
      %s468 = scalar_select %p467, %s26, 1
      %s469 = smul.addr %s468, 4
      %s470 = scalar_lea.vmem %s13, %s469
      %p471 = scmp.lt.s32.totalorder %s26, 1
      %s472 = scalar_select %p471, %s26, 1
      %s473 = smul.addr %s472, 4
      %s474 = smul.addr %s473, 4
      %s475 = scalar_lea.vmem %s14, %s474
      %v477 = vld [vmem:[%s466] sm:$0xf]
      %v478 = vunpack.c.l.bf16 %v477
      %vm479 = vcmask 523264
      %v480 = vsel %vm479, %v478, 0.0
      %481 = vadd.xlane.f32.xlu0 %v480
      %v482 = vpop.xlane.xlu0 %481
      %v483 = vrcp.pop 64.0
      %v484 = vmul.f32 %v482, %v483
      %v485 = vsub.f32 %v478, %v484
      %v486 = vmul.f32 %v485, %v485
      %v487 = vsel %vm479, %v486, 0.0
      %488 = vadd.xlane.f32.xlu0 %v487
      %v489 = vpop.xlane.xlu0 %488
      %v490 = vmul.f32 %v489, %v483
      %v491 = vadd.f32 %v490, 1e-05
      %v492 = vrsqrt.pop %v491
      %v493 = vmul.f32 %v485, %v492
      %v494 = vld [vmem:[%s1] sm:$0x1]
      %v496 = vlaneseq
      %v497 = vshrl.u32 %v496, 7
      %v498 = vsub.s32 0, %v497
      %v499 = vrot.slane %v494, %v498
      %v501 = vmul.f32 %v493, %v499
      %v502 = vld [vmem:[%s2] sm:$0x1]
      %v504 = vlaneseq
      %v505 = vshrl.u32 %v504, 7
      %v506 = vsub.s32 0, %v505
      %v507 = vrot.slane %v502, %v506
      %v509 = vadd.f32 %v501, %v507
      %v510 = vpack.c.bf16 %v509, %v509
      %v511 = vld [vmem:[%s3] sm:$0xff]
      %v512 = vld [vmem:[%s3 + $0x8] sm:$0xff]
      %v513 = vld [vmem:[%s3 + $0x10] sm:$0xff]
      %v514 = vld [vmem:[%s3 + $0x18] sm:$0xff]
      %v515 = vld [vmem:[%s3 + $0x20] sm:$0xff]
      %v516 = vld [vmem:[%s3 + $0x28] sm:$0xff]
      %v517 = vld [vmem:[%s3 + $0x30] sm:$0xff]
      %v518 = vld [vmem:[%s3 + $0x38] sm:$0xff]
      %v519 = vld [vmem:[%s4] sm:$0x3]
      %v521 = vlaneseq
      %v522 = vshrl.u32 %v521, 7
      %v523 = vsub.s32 0, %v522
      %v524 = vrot.slane %v519, %v523
      %v525 = vlaneseq
      %v526 = vshrl.u32 %v525, 7
      %v527 = vsub.s32 1, %v526
      %v528 = vrot.slane %v519, %v527
      %v539 = vunpack.c.l.b16 %v511
      %v540 = vunpack.c.h.b16 %v511
      %v541 = vunpack.c.l.b16 %v512
      %v542 = vunpack.c.h.b16 %v512
      %v543 = vunpack.c.l.b16 %v513
      %v544 = vunpack.c.h.b16 %v513
      %v545 = vunpack.c.l.b16 %v514
      %v546 = vunpack.c.h.b16 %v514
      %v547 = vunpack.c.l.b16 %v515
      %v548 = vunpack.c.h.b16 %v515
      %v549 = vunpack.c.l.b16 %v516
      %v550 = vunpack.c.h.b16 %v516
      %v551 = vunpack.c.l.b16 %v517
      %v552 = vunpack.c.h.b16 %v517
      %v553 = vunpack.c.l.b16 %v518
      %v554 = vunpack.c.h.b16 %v518
      %v555 = vpack.c.b16 %v541, %v539
      %v556 = vpack.c.b16 %v542, %v540
      %v557 = vpack.c.b16 %v545, %v543
      %v558 = vpack.c.b16 %v546, %v544
      %v559 = vpack.c.b16 %v549, %v547
      %v560 = vpack.c.b16 %v550, %v548
      %v561 = vpack.c.b16 %v553, %v551
      %v562 = vpack.c.b16 %v554, %v552
      %v572 = vsel %vm479, %v510, 0
      %574 = vmatprep.subr.bf16.mxu0 %v556
      %575 = vmatpush1.bf16.msra.mxu0 %v555
      %576 = vmatprep.subr.bf16.mxu0 %v558
      %577 = vmatpush1.bf16.msra.mxu0 %v557
      %578 = vmatprep.subr.bf16.mxu0 %v560
      %579 = vmatpush1.bf16.msra.mxu0 %v559
      %580 = vmatprep.subr.bf16.mxu0 %v562
      %581 = vmatpush1.bf16.msra.mxu0 %v561
      %582 = vmatprep.subr.bf16.mxu0 0
      %583 = vmatpush1.bf16.msra.mxu0 0
      %584 = vmatprep.subr.bf16.mxu0 0
      %585 = vmatpush1.bf16.msra.mxu0 0
      %586 = vmatprep.subr.bf16.mxu0 0
      %587 = vmatpush1.bf16.msra.mxu0 0
      %588 = vmatprep.subr.bf16.mxu0 0
      %589 = vmatpush1.bf16.msra.mxu0 0
      %590 = vmatprep.subr.bf16.mxu0 0
      %591 = vmatpush1.bf16.msra.mxu0 0
      %592 = vmatprep.subr.bf16.mxu0 0
      %593 = vmatpush1.bf16.msra.mxu0 0
      %594 = vmatprep.subr.bf16.mxu0 0
      %595 = vmatpush1.bf16.msra.mxu0 0
      %596 = vmatprep.subr.bf16.mxu0 0
      %597 = vmatpush1.bf16.msra.mxu0 0
      %598 = vmatprep.subr.bf16.mxu0 0
      %599 = vmatpush1.bf16.msra.mxu0 0
      %600 = vmatprep.subr.bf16.mxu0 0
      %601 = vmatpush1.bf16.msra.mxu0 0
      %602 = vmatprep.subr.bf16.mxu0 0
      %603 = vmatpush1.bf16.msra.mxu0 0
      %604 = vmatprep.subr.bf16.mxu0 0
      %605 = vmatpush1.bf16.msra.mxu0 0
      %606 = vmatprep.mubr.bf16.mxu0 0
      %607 = vmatmul.mubr.bf16.gmra.mrb[0].mxu0 %v572
      %v608 = vpop.f32.mrb[0].mxu0
      %v609 = vadd.f32 %v524, %v608
      %v610 = vpop.f32.mrb[0].mxu0
      %v611 = vadd.f32 %v528, %v610
      %v612 = vpop.f32.mrb[0].mxu0
      %v613 = vpop.f32.mrb[0].mxu0
      %614 = vdwg.mxu0
      %v615 = vpack.c.bf16 %v609, %v609
      %v616 = vpack.c.bf16 %v611, %v611
      %v617 = vlaneseq
      %v618 = vshrl.u32 %v617, 7
      %v619 = vlaneseq
      %v620 = vand.u32 %v619, 127
      %vm621 = vcmp.le.s32.totalorder %v620, %v618
      %623 = vrot.lane.b32.xlu0 %v615, 64
      %v624 = vpop.permute.xlu0 %623
      %vm625 = vcmask 130048
      %v627 = vsel %vm625, %v615, 0
      %v630 = vsel %vm625, %v624, 0
      %632 = vmatprep.subr.bf16.mxu0 0
      %633 = vmatpush1.bf16.xpose.msra.mxu0 %v630
      %634 = vmatprep.subr.bf16.mxu0 0
      %635 = vmatpush1.bf16.xpose.msra.mxu0 0
      %636 = vmatprep.subr.bf16.mxu0 0
      %637 = vmatpush1.bf16.xpose.msra.mxu0 0
      %638 = vmatprep.subr.bf16.mxu0 0
      %639 = vmatpush1.bf16.xpose.msra.mxu0 0
      %640 = vmatprep.subr.bf16.mxu0 0
      %641 = vmatpush1.bf16.xpose.msra.mxu0 0
      %642 = vmatprep.subr.bf16.mxu0 0
      %643 = vmatpush1.bf16.xpose.msra.mxu0 0
      %644 = vmatprep.subr.bf16.mxu0 0
      %645 = vmatpush1.bf16.xpose.msra.mxu0 0
      %646 = vmatprep.subr.bf16.mxu0 0
      %647 = vmatpush1.bf16.xpose.msra.mxu0 0
      %648 = vmatprep.subr.bf16.mxu0 0
      %649 = vmatpush1.bf16.xpose.msra.mxu0 0
      %650 = vmatprep.subr.bf16.mxu0 0
      %651 = vmatpush1.bf16.xpose.msra.mxu0 0
      %652 = vmatprep.subr.bf16.mxu0 0
      %653 = vmatpush1.bf16.xpose.msra.mxu0 0
      %654 = vmatprep.subr.bf16.mxu0 0
      %655 = vmatpush1.bf16.xpose.msra.mxu0 0
      %656 = vmatprep.subr.bf16.mxu0 0
      %657 = vmatpush1.bf16.xpose.msra.mxu0 0
      %658 = vmatprep.subr.bf16.mxu0 0
      %659 = vmatpush1.bf16.xpose.msra.mxu0 0
      %660 = vmatprep.subr.bf16.mxu0 0
      %661 = vmatpush1.bf16.xpose.msra.mxu0 0
      %662 = vmatprep.subr.bf16.mxu0 0
      %663 = vmatpush1.bf16.xpose.msra.mxu0 0
      %664 = vmatprep.mubr.bf16.mxu0 0
      %665 = vmatmul.mubr.bf16.gmra.mrb[0].mxu0 %v627
      %v666 = vpop.f32.mrb[0].mxu0
      %v667 = vadd.f32 0.0, %v666
      %v668 = vpop.f32.mrb[0].mxu0
      %v669 = vpop.f32.mrb[0].mxu0
      %v670 = vpop.f32.mrb[0].mxu0
      %671 = vdwg.mxu0
      %v672 = vmul.f32 %v667, 0.25
      %v673 = vsel %vm621, %v672, -1e+09
      %vm674 = vcmask 64512
      %v675 = vsel %vm674, %v673, -inf
      %676 = vmax.xlane.f32.xlu0 %v675
      %v677 = vpop.xlane.xlu0 %676
      %v678 = vsub.f32 %v673, %v677
      %v679 = vmul.f32 %v678, 1.442695
      %v680 = vpow.pop %v679
      %v681 = vsel %vm674, %v680, 0.0
      %682 = vadd.xlane.f32.xlu0 %v681
      %v683 = vpop.xlane.xlu0 %682
      %v684 = vrcp.pop %v683
      %v685 = vmul.f32 %v680, %v684
      %v686 = vpack.c.bf16 %v685, %v685
      %vm687 = vcmask 60416
      %688 = vst.msk [vmem:[%s475] sm:$0xf] %vm687, %v686
      %v690 = vsel %vm674, %v686, 0
      %vm692 = vcmask 1043456
      %v694 = vsel %vm692, %v616, 0
      %696 = vmatprep.subr.bf16.mxu0 0
      %697 = vmatpush1.bf16.msra.mxu0 %v694
      %698 = vmatprep.subr.bf16.mxu0 0
      %699 = vmatpush1.bf16.msra.mxu0 0
      %700 = vmatprep.subr.bf16.mxu0 0
      %701 = vmatpush1.bf16.msra.mxu0 0
      %702 = vmatprep.subr.bf16.mxu0 0
      %703 = vmatpush1.bf16.msra.mxu0 0
      %704 = vmatprep.subr.bf16.mxu0 0
      %705 = vmatpush1.bf16.msra.mxu0 0
      %706 = vmatprep.subr.bf16.mxu0 0
      %707 = vmatpush1.bf16.msra.mxu0 0
      %708 = vmatprep.subr.bf16.mxu0 0
      %709 = vmatpush1.bf16.msra.mxu0 0
      %710 = vmatprep.subr.bf16.mxu0 0
      %711 = vmatpush1.bf16.msra.mxu0 0
      %712 = vmatprep.subr.bf16.mxu0 0
      %713 = vmatpush1.bf16.msra.mxu0 0
      %714 = vmatprep.subr.bf16.mxu0 0
      %715 = vmatpush1.bf16.msra.mxu0 0
      %716 = vmatprep.subr.bf16.mxu0 0
      %717 = vmatpush1.bf16.msra.mxu0 0
      %718 = vmatprep.subr.bf16.mxu0 0
      %719 = vmatpush1.bf16.msra.mxu0 0
      %720 = vmatprep.subr.bf16.mxu0 0
      %721 = vmatpush1.bf16.msra.mxu0 0
      %722 = vmatprep.subr.bf16.mxu0 0
      %723 = vmatpush1.bf16.msra.mxu0 0
      %724 = vmatprep.subr.bf16.mxu0 0
      %725 = vmatpush1.bf16.msra.mxu0 0
      %726 = vmatprep.subr.bf16.mxu0 0
      %727 = vmatpush1.bf16.msra.mxu0 0
      %728 = vmatprep.mubr.bf16.mxu0 0
      %729 = vmatmul.mubr.bf16.gmra.mrb[0].mxu0 %v690
      %v730 = vpop.f32.mrb[0].mxu0
      %v731 = vadd.f32 0.0, %v730
      %v732 = vpop.f32.mrb[0].mxu0
      %v733 = vpop.f32.mrb[0].mxu0
      %v734 = vpop.f32.mrb[0].mxu0
      %735 = vdwg.mxu0
      %v736 = vpack.c.bf16 %v731, %v731
      %vm737 = vcmask 125952
      %738 = vst.msk [vmem:[#allocation2] sm:$0xf] %vm737, %v736
      %739 = vrot.lane.b32.xlu0 %v615, 112
      %v740 = vpop.permute.xlu0 %739
      %741 = vrot.lane.b32.xlu0 %v615, 48
      %v742 = vpop.permute.xlu0 %741
      %v744 = vsel %vm625, %v740, 0
      %v747 = vsel %vm625, %v742, 0
      %749 = vmatprep.subr.bf16.mxu0 0
      %750 = vmatpush1.bf16.xpose.msra.mxu0 %v747
      %751 = vmatprep.subr.bf16.mxu0 0
      %752 = vmatpush1.bf16.xpose.msra.mxu0 0
      %753 = vmatprep.subr.bf16.mxu0 0
      %754 = vmatpush1.bf16.xpose.msra.mxu0 0
      %755 = vmatprep.subr.bf16.mxu0 0
      %756 = vmatpush1.bf16.xpose.msra.mxu0 0
      %757 = vmatprep.subr.bf16.mxu0 0
      %758 = vmatpush1.bf16.xpose.msra.mxu0 0
      %759 = vmatprep.subr.bf16.mxu0 0
      %760 = vmatpush1.bf16.xpose.msra.mxu0 0
      %761 = vmatprep.subr.bf16.mxu0 0
      %762 = vmatpush1.bf16.xpose.msra.mxu0 0
      %763 = vmatprep.subr.bf16.mxu0 0
      %764 = vmatpush1.bf16.xpose.msra.mxu0 0
      %765 = vmatprep.subr.bf16.mxu0 0
      %766 = vmatpush1.bf16.xpose.msra.mxu0 0
      %767 = vmatprep.subr.bf16.mxu0 0
      %768 = vmatpush1.bf16.xpose.msra.mxu0 0
      %769 = vmatprep.subr.bf16.mxu0 0
      %770 = vmatpush1.bf16.xpose.msra.mxu0 0
      %771 = vmatprep.subr.bf16.mxu0 0
      %772 = vmatpush1.bf16.xpose.msra.mxu0 0
      %773 = vmatprep.subr.bf16.mxu0 0
      %774 = vmatpush1.bf16.xpose.msra.mxu0 0
      %775 = vmatprep.subr.bf16.mxu0 0
      %776 = vmatpush1.bf16.xpose.msra.mxu0 0
      %777 = vmatprep.subr.bf16.mxu0 0
      %778 = vmatpush1.bf16.xpose.msra.mxu0 0
      %779 = vmatprep.subr.bf16.mxu0 0
      %780 = vmatpush1.bf16.xpose.msra.mxu0 0
      %781 = vmatprep.mubr.bf16.mxu0 0
      %782 = vmatmul.mubr.bf16.gmra.mrb[0].mxu0 %v744
      %v783 = vpop.f32.mrb[0].mxu0
      %v784 = vadd.f32 0.0, %v783
      %v785 = vpop.f32.mrb[0].mxu0
      %v786 = vpop.f32.mrb[0].mxu0
      %v787 = vpop.f32.mrb[0].mxu0
      %788 = vdwg.mxu0
      %v789 = vmul.f32 %v784, 0.25
      %v790 = vsel %vm621, %v789, -1e+09
      %v791 = vsel %vm674, %v790, -inf
      %792 = vmax.xlane.f32.xlu0 %v791
      %v793 = vpop.xlane.xlu0 %792
      %v794 = vsub.f32 %v790, %v793
      %v795 = vmul.f32 %v794, 1.442695
      %v796 = vpow.pop %v795
      %v797 = vsel %vm674, %v796, 0.0
      %798 = vadd.xlane.f32.xlu0 %v797
      %v799 = vpop.xlane.xlu0 %798
      %v800 = vrcp.pop %v799
      %v801 = vmul.f32 %v796, %v800
      %v802 = vpack.c.bf16 %v801, %v801
      %s803 = scalar_lea.vmem %s475, 4
      %804 = vst.msk [vmem:[%s803] sm:$0xf] %vm687, %v802
      %806 = vrot.lane.b32.xlu0 %v616, 112
      %v807 = vpop.permute.xlu0 %806
      %v809 = vsel %vm674, %v802, 0
      %v812 = vsel %vm692, %v807, 0
      %814 = vmatprep.subr.bf16.mxu0 0
      %815 = vmatpush1.bf16.msra.mxu0 %v812
      %816 = vmatprep.subr.bf16.mxu0 0
      %817 = vmatpush1.bf16.msra.mxu0 0
      %818 = vmatprep.subr.bf16.mxu0 0
      %819 = vmatpush1.bf16.msra.mxu0 0
      %820 = vmatprep.subr.bf16.mxu0 0
      %821 = vmatpush1.bf16.msra.mxu0 0
      %822 = vmatprep.subr.bf16.mxu0 0
      %823 = vmatpush1.bf16.msra.mxu0 0
      %824 = vmatprep.subr.bf16.mxu0 0
      %825 = vmatpush1.bf16.msra.mxu0 0
      %826 = vmatprep.subr.bf16.mxu0 0
      %827 = vmatpush1.bf16.msra.mxu0 0
      %828 = vmatprep.subr.bf16.mxu0 0
      %829 = vmatpush1.bf16.msra.mxu0 0
      %830 = vmatprep.subr.bf16.mxu0 0
      %831 = vmatpush1.bf16.msra.mxu0 0
      %832 = vmatprep.subr.bf16.mxu0 0
      %833 = vmatpush1.bf16.msra.mxu0 0
      %834 = vmatprep.subr.bf16.mxu0 0
      %835 = vmatpush1.bf16.msra.mxu0 0
      %836 = vmatprep.subr.bf16.mxu0 0
      %837 = vmatpush1.bf16.msra.mxu0 0
      %838 = vmatprep.subr.bf16.mxu0 0
      %839 = vmatpush1.bf16.msra.mxu0 0
      %840 = vmatprep.subr.bf16.mxu0 0
      %841 = vmatpush1.bf16.msra.mxu0 0
      %842 = vmatprep.subr.bf16.mxu0 0
      %843 = vmatpush1.bf16.msra.mxu0 0
      %844 = vmatprep.subr.bf16.mxu0 0
      %845 = vmatpush1.bf16.msra.mxu0 0
      %846 = vmatprep.mubr.bf16.mxu0 0
      %847 = vmatmul.mubr.bf16.gmra.mrb[0].mxu0 %v809
      %v848 = vpop.f32.mrb[0].mxu0
      %v849 = vadd.f32 0.0, %v848
      %v850 = vpop.f32.mrb[0].mxu0
      %v851 = vpop.f32.mrb[0].mxu0
      %v852 = vpop.f32.mrb[0].mxu0
      %853 = vdwg.mxu0
      %v854 = vpack.c.bf16 %v849, %v849
      %v856 = vunpack.c.l.b16 %v854
      %v857 = vpack.c.b16 %v856, %v856
      %858 = vrot.lane.b32.xlu0 %v857, 16
      %v859 = vpop.permute.xlu0 %858
      %vm861 = vcmask 257152
      %862 = vst.msk [vmem:[#allocation2] sm:$0xf] %vm861, %v859
      %863 = vrot.lane.b32.xlu0 %v615, 96
      %v864 = vpop.permute.xlu0 %863
      %865 = vrot.lane.b32.xlu0 %v615, 32
      %v866 = vpop.permute.xlu0 %865
      %v868 = vsel %vm625, %v864, 0
      %v871 = vsel %vm625, %v866, 0
      %873 = vmatprep.subr.bf16.mxu0 0
      %874 = vmatpush1.bf16.xpose.msra.mxu0 %v871
      %875 = vmatprep.subr.bf16.mxu0 0
      %876 = vmatpush1.bf16.xpose.msra.mxu0 0
      %877 = vmatprep.subr.bf16.mxu0 0
      %878 = vmatpush1.bf16.xpose.msra.mxu0 0
      %879 = vmatprep.subr.bf16.mxu0 0
      %880 = vmatpush1.bf16.xpose.msra.mxu0 0
      %881 = vmatprep.subr.bf16.mxu0 0
      %882 = vmatpush1.bf16.xpose.msra.mxu0 0
      %883 = vmatprep.subr.bf16.mxu0 0
      %884 = vmatpush1.bf16.xpose.msra.mxu0 0
      %885 = vmatprep.subr.bf16.mxu0 0
      %886 = vmatpush1.bf16.xpose.msra.mxu0 0
      %887 = vmatprep.subr.bf16.mxu0 0
      %888 = vmatpush1.bf16.xpose.msra.mxu0 0
      %889 = vmatprep.subr.bf16.mxu0 0
      %890 = vmatpush1.bf16.xpose.msra.mxu0 0
      %891 = vmatprep.subr.bf16.mxu0 0
      %892 = vmatpush1.bf16.xpose.msra.mxu0 0
      %893 = vmatprep.subr.bf16.mxu0 0
      %894 = vmatpush1.bf16.xpose.msra.mxu0 0
      %895 = vmatprep.subr.bf16.mxu0 0
      %896 = vmatpush1.bf16.xpose.msra.mxu0 0
      %897 = vmatprep.subr.bf16.mxu0 0
      %898 = vmatpush1.bf16.xpose.msra.mxu0 0
      %899 = vmatprep.subr.bf16.mxu0 0
      %900 = vmatpush1.bf16.xpose.msra.mxu0 0
      %901 = vmatprep.subr.bf16.mxu0 0
      %902 = vmatpush1.bf16.xpose.msra.mxu0 0
      %903 = vmatprep.subr.bf16.mxu0 0
      %904 = vmatpush1.bf16.xpose.msra.mxu0 0
      %905 = vmatprep.mubr.bf16.mxu0 0
      %906 = vmatmul.mubr.bf16.gmra.mrb[0].mxu0 %v868
      %v907 = vpop.f32.mrb[0].mxu0
      %v908 = vadd.f32 0.0, %v907
      %v909 = vpop.f32.mrb[0].mxu0
      %v910 = vpop.f32.mrb[0].mxu0
      %v911 = vpop.f32.mrb[0].mxu0
      %912 = vdwg.mxu0
      %v913 = vmul.f32 %v908, 0.25
      %v914 = vsel %vm621, %v913, -1e+09
      %v915 = vsel %vm674, %v914, -inf
      %916 = vmax.xlane.f32.xlu0 %v915
      %v917 = vpop.xlane.xlu0 %916
      %v918 = vsub.f32 %v914, %v917
      %v919 = vmul.f32 %v918, 1.442695
      %v920 = vpow.pop %v919
      %v921 = vsel %vm674, %v920, 0.0
      %922 = vadd.xlane.f32.xlu0 %v921
      %v923 = vpop.xlane.xlu0 %922
      %v924 = vrcp.pop %v923
      %v925 = vmul.f32 %v920, %v924
      %v926 = vpack.c.bf16 %v925, %v925
      %s927 = scalar_lea.vmem %s475, 8
      %928 = vst.msk [vmem:[%s927] sm:$0xf] %vm687, %v926
      %929 = vrot.lane.b32.xlu0 %v616, 96
      %v930 = vpop.permute.xlu0 %929
      %v932 = vsel %vm674, %v926, 0
      %v935 = vsel %vm692, %v930, 0
      %937 = vmatprep.subr.bf16.mxu0 0
      %938 = vmatpush1.bf16.msra.mxu0 %v935
      %939 = vmatprep.subr.bf16.mxu0 0
      %940 = vmatpush1.bf16.msra.mxu0 0
      %941 = vmatprep.subr.bf16.mxu0 0
      %942 = vmatpush1.bf16.msra.mxu0 0
      %943 = vmatprep.subr.bf16.mxu0 0
      %944 = vmatpush1.bf16.msra.mxu0 0
      %945 = vmatprep.subr.bf16.mxu0 0
      %946 = vmatpush1.bf16.msra.mxu0 0
      %947 = vmatprep.subr.bf16.mxu0 0
      %948 = vmatpush1.bf16.msra.mxu0 0
      %949 = vmatprep.subr.bf16.mxu0 0
      %950 = vmatpush1.bf16.msra.mxu0 0
      %951 = vmatprep.subr.bf16.mxu0 0
      %952 = vmatpush1.bf16.msra.mxu0 0
      %953 = vmatprep.subr.bf16.mxu0 0
      %954 = vmatpush1.bf16.msra.mxu0 0
      %955 = vmatprep.subr.bf16.mxu0 0
      %956 = vmatpush1.bf16.msra.mxu0 0
      %957 = vmatprep.subr.bf16.mxu0 0
      %958 = vmatpush1.bf16.msra.mxu0 0
      %959 = vmatprep.subr.bf16.mxu0 0
      %960 = vmatpush1.bf16.msra.mxu0 0
      %961 = vmatprep.subr.bf16.mxu0 0
      %962 = vmatpush1.bf16.msra.mxu0 0
      %963 = vmatprep.subr.bf16.mxu0 0
      %964 = vmatpush1.bf16.msra.mxu0 0
      %965 = vmatprep.subr.bf16.mxu0 0
      %966 = vmatpush1.bf16.msra.mxu0 0
      %967 = vmatprep.subr.bf16.mxu0 0
      %968 = vmatpush1.bf16.msra.mxu0 0
      %969 = vmatprep.mubr.bf16.mxu0 0
      %970 = vmatmul.mubr.bf16.gmra.mrb[0].mxu0 %v932
      %v971 = vpop.f32.mrb[0].mxu0
      %v972 = vadd.f32 0.0, %v971
      %v973 = vpop.f32.mrb[0].mxu0
      %v974 = vpop.f32.mrb[0].mxu0
      %v975 = vpop.f32.mrb[0].mxu0
      %976 = vdwg.mxu0
      %v977 = vpack.c.bf16 %v972, %v972
      %v979 = vunpack.c.l.b16 %v977
      %v980 = vpack.c.b16 %v979, %v979
      %981 = vrot.lane.b32.xlu0 %v980, 32
      %v982 = vpop.permute.xlu0 %981
      %vm984 = vcmask 388352
      %985 = vst.msk [vmem:[#allocation2] sm:$0xf] %vm984, %v982
      %986 = vrot.lane.b32.xlu0 %v615, 80
      %v987 = vpop.permute.xlu0 %986
      %988 = vrot.lane.b32.xlu0 %v615, 16
      %v989 = vpop.permute.xlu0 %988
      %v991 = vsel %vm625, %v987, 0
      %v994 = vsel %vm625, %v989, 0
      %996 = vmatprep.subr.bf16.mxu0 0
      %997 = vmatpush1.bf16.xpose.msra.mxu0 %v994
      %998 = vmatprep.subr.bf16.mxu0 0
      %999 = vmatpush1.bf16.xpose.msra.mxu0 0
      %1000 = vmatprep.subr.bf16.mxu0 0
      %1001 = vmatpush1.bf16.xpose.msra.mxu0 0
      %1002 = vmatprep.subr.bf16.mxu0 0
      %1003 = vmatpush1.bf16.xpose.msra.mxu0 0
      %1004 = vmatprep.subr.bf16.mxu0 0
      %1005 = vmatpush1.bf16.xpose.msra.mxu0 0
      %1006 = vmatprep.subr.bf16.mxu0 0
      %1007 = vmatpush1.bf16.xpose.msra.mxu0 0
      %1008 = vmatprep.subr.bf16.mxu0 0
      %1009 = vmatpush1.bf16.xpose.msra.mxu0 0
      %1010 = vmatprep.subr.bf16.mxu0 0
      %1011 = vmatpush1.bf16.xpose.msra.mxu0 0
      %1012 = vmatprep.subr.bf16.mxu0 0
      %1013 = vmatpush1.bf16.xpose.msra.mxu0 0
      %1014 = vmatprep.subr.bf16.mxu0 0
      %1015 = vmatpush1.bf16.xpose.msra.mxu0 0
      %1016 = vmatprep.subr.bf16.mxu0 0
      %1017 = vmatpush1.bf16.xpose.msra.mxu0 0
      %1018 = vmatprep.subr.bf16.mxu0 0
      %1019 = vmatpush1.bf16.xpose.msra.mxu0 0
      %1020 = vmatprep.subr.bf16.mxu0 0
      %1021 = vmatpush1.bf16.xpose.msra.mxu0 0
      %1022 = vmatprep.subr.bf16.mxu0 0
      %1023 = vmatpush1.bf16.xpose.msra.mxu0 0
      %1024 = vmatprep.subr.bf16.mxu0 0
      %1025 = vmatpush1.bf16.xpose.msra.mxu0 0
      %1026 = vmatprep.subr.bf16.mxu0 0
      %1027 = vmatpush1.bf16.xpose.msra.mxu0 0
      %1028 = vmatprep.mubr.bf16.mxu0 0
      %1029 = vmatmul.mubr.bf16.gmra.mrb[0].mxu0 %v991
      %v1030 = vpop.f32.mrb[0].mxu0
      %v1031 = vadd.f32 0.0, %v1030
      %v1032 = vpop.f32.mrb[0].mxu0
      %v1033 = vpop.f32.mrb[0].mxu0
      %v1034 = vpop.f32.mrb[0].mxu0
      %1035 = vdwg.mxu0
      %v1036 = vmul.f32 %v1031, 0.25
      %v1037 = vsel %vm621, %v1036, -1e+09
      %v1038 = vsel %vm674, %v1037, -inf
      %1039 = vmax.xlane.f32.xlu0 %v1038
      %v1040 = vpop.xlane.xlu0 %1039
      %v1041 = vsub.f32 %v1037, %v1040
      %v1042 = vmul.f32 %v1041, 1.442695
      %v1043 = vpow.pop %v1042
      %v1044 = vsel %vm674, %v1043, 0.0
      %1045 = vadd.xlane.f32.xlu0 %v1044
      %v1046 = vpop.xlane.xlu0 %1045
      %v1047 = vrcp.pop %v1046
      %v1048 = vmul.f32 %v1043, %v1047
      %v1049 = vpack.c.bf16 %v1048, %v1048
      %s1050 = scalar_lea.vmem %s475, 12
      %1051 = vst.msk [vmem:[%s1050] sm:$0xf] %vm687, %v1049
      %1052 = vrot.lane.b32.xlu0 %v616, 80
      %v1053 = vpop.permute.xlu0 %1052
      %v1055 = vsel %vm674, %v1049, 0
      %v1058 = vsel %vm692, %v1053, 0
      %1060 = vmatprep.subr.bf16.mxu0 0
      %1061 = vmatpush1.bf16.msra.mxu0 %v1058
      %1062 = vmatprep.subr.bf16.mxu0 0
      %1063 = vmatpush1.bf16.msra.mxu0 0
      %1064 = vmatprep.subr.bf16.mxu0 0
      %1065 = vmatpush1.bf16.msra.mxu0 0
      %1066 = vmatprep.subr.bf16.mxu0 0
      %1067 = vmatpush1.bf16.msra.mxu0 0
      %1068 = vmatprep.subr.bf16.mxu0 0
      %1069 = vmatpush1.bf16.msra.mxu0 0
      %1070 = vmatprep.subr.bf16.mxu0 0
      %1071 = vmatpush1.bf16.msra.mxu0 0
      %1072 = vmatprep.subr.bf16.mxu0 0
      %1073 = vmatpush1.bf16.msra.mxu0 0
      %1074 = vmatprep.subr.bf16.mxu0 0
      %1075 = vmatpush1.bf16.msra.mxu0 0
      %1076 = vmatprep.subr.bf16.mxu0 0
      %1077 = vmatpush1.bf16.msra.mxu0 0
      %1078 = vmatprep.subr.bf16.mxu0 0
      %1079 = vmatpush1.bf16.msra.mxu0 0
      %1080 = vmatprep.subr.bf16.mxu0 0
      %1081 = vmatpush1.bf16.msra.mxu0 0
      %1082 = vmatprep.subr.bf16.mxu0 0
      %1083 = vmatpush1.bf16.msra.mxu0 0
      %1084 = vmatprep.subr.bf16.mxu0 0
      %1085 = vmatpush1.bf16.msra.mxu0 0
      %1086 = vmatprep.subr.bf16.mxu0 0
      %1087 = vmatpush1.bf16.msra.mxu0 0
      %1088 = vmatprep.subr.bf16.mxu0 0
      %1089 = vmatpush1.bf16.msra.mxu0 0
      %1090 = vmatprep.subr.bf16.mxu0 0
      %1091 = vmatpush1.bf16.msra.mxu0 0
      %1092 = vmatprep.mubr.bf16.mxu0 0
      %1093 = vmatmul.mubr.bf16.gmra.mrb[0].mxu0 %v1055
      %v1094 = vpop.f32.mrb[0].mxu0
      %v1095 = vadd.f32 0.0, %v1094
      %v1096 = vpop.f32.mrb[0].mxu0
      %v1097 = vpop.f32.mrb[0].mxu0
      %v1098 = vpop.f32.mrb[0].mxu0
      %1099 = vdwg.mxu0
      %v1100 = vpack.c.bf16 %v1095, %v1095
      %v1102 = vunpack.c.l.b16 %v1100
      %v1103 = vpack.c.b16 %v1102, %v1102
      %1104 = vrot.lane.b32.xlu0 %v1103, 48
      %v1105 = vpop.permute.xlu0 %1104
      %vm1107 = vcmask 519552
      %1108 = vst.msk [vmem:[#allocation2] sm:$0xf] %vm1107, %v1105
      %v1109 = vld [vmem:[#allocation2] sm:$0xf]
      %v1110 = vld [vmem:[%s5] sm:$0xf]
      %v1111 = vld [vmem:[%s5 + $0x4] sm:$0xf]
      %v1112 = vld [vmem:[%s5 + $0x8] sm:$0xf]
      %v1113 = vld [vmem:[%s5 + $0xc] sm:$0xf]
      %v1114 = vld [vmem:[%s5 + $0x10] sm:$0xf]
      %v1115 = vld [vmem:[%s5 + $0x14] sm:$0xf]
      %v1116 = vld [vmem:[%s5 + $0x18] sm:$0xf]
      %v1117 = vld [vmem:[%s5 + $0x1c] sm:$0xf]
      %v1126 = vunpack.c.l.b16 %v1110
      %v1127 = vunpack.c.l.b16 %v1111
      %v1128 = vunpack.c.l.b16 %v1112
      %v1129 = vunpack.c.l.b16 %v1113
      %v1130 = vunpack.c.l.b16 %v1114
      %v1131 = vunpack.c.l.b16 %v1115
      %v1132 = vunpack.c.l.b16 %v1116
      %v1133 = vunpack.c.l.b16 %v1117
      %v1134 = vpack.c.b16 %v1127, %v1126
      %v1135 = vpack.c.b16 %v1129, %v1128
      %v1136 = vpack.c.b16 %v1131, %v1130
      %v1137 = vpack.c.b16 %v1133, %v1132
      %v1143 = vsel %vm479, %v1109, 0
      %1145 = vmatprep.subr.bf16.mxu0 0
      %1146 = vmatpush1.bf16.msra.mxu0 %v1134
      %1147 = vmatprep.subr.bf16.mxu0 0
      %1148 = vmatpush1.bf16.msra.mxu0 %v1135
      %1149 = vmatprep.subr.bf16.mxu0 0
      %1150 = vmatpush1.bf16.msra.mxu0 %v1136
      %1151 = vmatprep.subr.bf16.mxu0 0
      %1152 = vmatpush1.bf16.msra.mxu0 %v1137
      %1153 = vmatprep.subr.bf16.mxu0 0
      %1154 = vmatpush1.bf16.msra.mxu0 0
      %1155 = vmatprep.subr.bf16.mxu0 0
      %1156 = vmatpush1.bf16.msra.mxu0 0
      %1157 = vmatprep.subr.bf16.mxu0 0
      %1158 = vmatpush1.bf16.msra.mxu0 0
      %1159 = vmatprep.subr.bf16.mxu0 0
      %1160 = vmatpush1.bf16.msra.mxu0 0
      %1161 = vmatprep.subr.bf16.mxu0 0
      %1162 = vmatpush1.bf16.msra.mxu0 0
      %1163 = vmatprep.subr.bf16.mxu0 0
      %1164 = vmatpush1.bf16.msra.mxu0 0
      %1165 = vmatprep.subr.bf16.mxu0 0
      %1166 = vmatpush1.bf16.msra.mxu0 0
      %1167 = vmatprep.subr.bf16.mxu0 0
      %1168 = vmatpush1.bf16.msra.mxu0 0
      %1169 = vmatprep.subr.bf16.mxu0 0
      %1170 = vmatpush1.bf16.msra.mxu0 0
      %1171 = vmatprep.subr.bf16.mxu0 0
      %1172 = vmatpush1.bf16.msra.mxu0 0
      %1173 = vmatprep.subr.bf16.mxu0 0
      %1174 = vmatpush1.bf16.msra.mxu0 0
      %1175 = vmatprep.subr.bf16.mxu0 0
      %1176 = vmatpush1.bf16.msra.mxu0 0
      %1177 = vmatprep.mubr.bf16.mxu0 0
      %1178 = vmatmul.mubr.bf16.gmra.mrb[0].mxu0 %v1143
      %v1179 = vpop.f32.mrb[0].mxu0
      %v1180 = vadd.f32 0.0, %v1179
      %v1181 = vpop.f32.mrb[0].mxu0
      %v1182 = vpop.f32.mrb[0].mxu0
      %v1183 = vpop.f32.mrb[0].mxu0
      %1184 = vdwg.mxu0
      %v1185 = vadd.f32 %v478, %v1180
      %v1186 = vld [vmem:[%s6] sm:$0x1]
      %v1188 = vlaneseq
      %v1189 = vshrl.u32 %v1188, 7
      %v1190 = vsub.s32 0, %v1189
      %v1191 = vrot.slane %v1186, %v1190
      %v1193 = vadd.f32 %v1185, %v1191
      %v1194 = vsel %vm479, %v1193, 0.0
      %1195 = vadd.xlane.f32.xlu0 %v1194
      %v1196 = vpop.xlane.xlu0 %1195
      %v1197 = vmul.f32 %v1196, %v483
      %v1198 = vsub.f32 %v1193, %v1197
      %v1199 = vmul.f32 %v1198, %v1198
      %v1200 = vsel %vm479, %v1199, 0.0
      %1201 = vadd.xlane.f32.xlu0 %v1200
      %v1202 = vpop.xlane.xlu0 %1201
      %v1203 = vmul.f32 %v1202, %v483
      %v1204 = vadd.f32 %v1203, 1e-05
      %v1205 = vrsqrt.pop %v1204
      %v1206 = vmul.f32 %v1198, %v1205
      %v1207 = vld [vmem:[%s7] sm:$0x1]
      %v1209 = vlaneseq
      %v1210 = vshrl.u32 %v1209, 7
      %v1211 = vsub.s32 0, %v1210
      %v1212 = vrot.slane %v1207, %v1211
      %v1214 = vmul.f32 %v1206, %v1212
      %v1215 = vld [vmem:[%s8] sm:$0x1]
      %v1217 = vlaneseq
      %v1218 = vshrl.u32 %v1217, 7
      %v1219 = vsub.s32 0, %v1218
      %v1220 = vrot.slane %v1215, %v1219
      %v1222 = vadd.f32 %v1214, %v1220
      %v1223 = vpack.c.bf16 %v1222, %v1222
      %v1224 = vld [vmem:[%s9] sm:$0xf]
      %v1225 = vld [vmem:[%s9 + $0x4] sm:$0xf]
      %v1226 = vld [vmem:[%s9 + $0x8] sm:$0xf]
      %v1227 = vld [vmem:[%s9 + $0xc] sm:$0xf]
      %v1228 = vld [vmem:[%s9 + $0x10] sm:$0xf]
      %v1229 = vld [vmem:[%s9 + $0x14] sm:$0xf]
      %v1230 = vld [vmem:[%s9 + $0x18] sm:$0xf]
      %v1231 = vld [vmem:[%s9 + $0x1c] sm:$0xf]
      %v1232 = vld [vmem:[%s10] sm:$0x1]
      %v1234 = vlaneseq
      %v1235 = vshrl.u32 %v1234, 7
      %v1236 = vsub.s32 0, %v1235
      %v1237 = vrot.slane %v1232, %v1236
      %v1247 = vunpack.c.l.b16 %v1224
      %v1248 = vunpack.c.l.b16 %v1225
      %v1249 = vunpack.c.l.b16 %v1226
      %v1250 = vunpack.c.l.b16 %v1227
      %v1251 = vunpack.c.l.b16 %v1228
      %v1252 = vunpack.c.l.b16 %v1229
      %v1253 = vunpack.c.l.b16 %v1230
      %v1254 = vunpack.c.l.b16 %v1231
      %v1255 = vpack.c.b16 %v1248, %v1247
      %v1256 = vpack.c.b16 %v1250, %v1249
      %v1257 = vpack.c.b16 %v1252, %v1251
      %v1258 = vpack.c.b16 %v1254, %v1253
      %v1264 = vsel %vm479, %v1223, 0
      %1266 = vmatprep.subr.bf16.mxu0 0
      %1267 = vmatpush1.bf16.msra.mxu0 %v1255
      %1268 = vmatprep.subr.bf16.mxu0 0
      %1269 = vmatpush1.bf16.msra.mxu0 %v1256
      %1270 = vmatprep.subr.bf16.mxu0 0
      %1271 = vmatpush1.bf16.msra.mxu0 %v1257
      %1272 = vmatprep.subr.bf16.mxu0 0
      %1273 = vmatpush1.bf16.msra.mxu0 %v1258
      %1274 = vmatprep.subr.bf16.mxu0 0
      %1275 = vmatpush1.bf16.msra.mxu0 0
      %1276 = vmatprep.subr.bf16.mxu0 0
      %1277 = vmatpush1.bf16.msra.mxu0 0
      %1278 = vmatprep.subr.bf16.mxu0 0
      %1279 = vmatpush1.bf16.msra.mxu0 0
      %1280 = vmatprep.subr.bf16.mxu0 0
      %1281 = vmatpush1.bf16.msra.mxu0 0
      %1282 = vmatprep.subr.bf16.mxu0 0
      %1283 = vmatpush1.bf16.msra.mxu0 0
      %1284 = vmatprep.subr.bf16.mxu0 0
      %1285 = vmatpush1.bf16.msra.mxu0 0
      %1286 = vmatprep.subr.bf16.mxu0 0
      %1287 = vmatpush1.bf16.msra.mxu0 0
      %1288 = vmatprep.subr.bf16.mxu0 0
      %1289 = vmatpush1.bf16.msra.mxu0 0
      %1290 = vmatprep.subr.bf16.mxu0 0
      %1291 = vmatpush1.bf16.msra.mxu0 0
      %1292 = vmatprep.subr.bf16.mxu0 0
      %1293 = vmatpush1.bf16.msra.mxu0 0
      %1294 = vmatprep.subr.bf16.mxu0 0
      %1295 = vmatpush1.bf16.msra.mxu0 0
      %1296 = vmatprep.subr.bf16.mxu0 0
      %1297 = vmatpush1.bf16.msra.mxu0 0
      %1298 = vmatprep.mubr.bf16.mxu0 0
      %1299 = vmatmul.mubr.bf16.gmra.mrb[0].mxu0 %v1264
      %v1300 = vpop.f32.mrb[0].mxu0
      %v1301 = vadd.f32 %v1237, %v1300
      %v1302 = vpop.f32.mrb[0].mxu0
      %v1303 = vpop.f32.mrb[0].mxu0
      %v1304 = vpop.f32.mrb[0].mxu0
      %1305 = vdwg.mxu0
      %v1306 = vmul.f32 %v1301, %v1301
      %v1307 = vmul.f32 %v1301, %v1306
      %v1308 = vmul.f32 %v1307, 0.044715
      %v1309 = vadd.f32 %v1301, %v1308
      %v1310 = vmul.f32 %v1309, 0.7978846
      %v1311 = vtanh.pop %v1310
      %v1312 = vadd.f32 %v1311, 1.0
      %v1313 = vmul.f32 %v1312, 0.5
      %v1314 = vmul.f32 %v1301, %v1313
      %v1315 = vpack.c.bf16 %v1314, %v1314
      %v1316 = vld [vmem:[%s11] sm:$0xf]
      %v1317 = vld [vmem:[%s11 + $0x4] sm:$0xf]
      %v1318 = vld [vmem:[%s11 + $0x8] sm:$0xf]
      %v1319 = vld [vmem:[%s11 + $0xc] sm:$0xf]
      %v1320 = vld [vmem:[%s11 + $0x10] sm:$0xf]
      %v1321 = vld [vmem:[%s11 + $0x14] sm:$0xf]
      %v1322 = vld [vmem:[%s11 + $0x18] sm:$0xf]
      %v1323 = vld [vmem:[%s11 + $0x1c] sm:$0xf]
      %v1324 = vld [vmem:[%s11 + $0x20] sm:$0xf]
      %v1325 = vld [vmem:[%s11 + $0x24] sm:$0xf]
      %v1326 = vld [vmem:[%s11 + $0x28] sm:$0xf]
      %v1327 = vld [vmem:[%s11 + $0x2c] sm:$0xf]
      %v1328 = vld [vmem:[%s11 + $0x30] sm:$0xf]
      %v1329 = vld [vmem:[%s11 + $0x34] sm:$0xf]
      %v1330 = vld [vmem:[%s11 + $0x38] sm:$0xf]
      %v1331 = vld [vmem:[%s11 + $0x3c] sm:$0xf]
      %v1332 = vld [vmem:[%s12] sm:$0x1]
      %v1334 = vlaneseq
      %v1335 = vshrl.u32 %v1334, 7
      %v1336 = vsub.s32 0, %v1335
      %v1337 = vrot.slane %v1332, %v1336
      %v1355 = vunpack.c.l.b16 %v1316
      %v1356 = vunpack.c.l.b16 %v1317
      %v1357 = vunpack.c.l.b16 %v1318
      %v1358 = vunpack.c.l.b16 %v1319
      %v1359 = vunpack.c.l.b16 %v1320
      %v1360 = vunpack.c.l.b16 %v1321
      %v1361 = vunpack.c.l.b16 %v1322
      %v1362 = vunpack.c.l.b16 %v1323
      %v1363 = vunpack.c.l.b16 %v1324
      %v1364 = vunpack.c.l.b16 %v1325
      %v1365 = vunpack.c.l.b16 %v1326
      %v1366 = vunpack.c.l.b16 %v1327
      %v1367 = vunpack.c.l.b16 %v1328
      %v1368 = vunpack.c.l.b16 %v1329
      %v1369 = vunpack.c.l.b16 %v1330
      %v1370 = vunpack.c.l.b16 %v1331
      %v1371 = vpack.c.b16 %v1356, %v1355
      %v1372 = vpack.c.b16 %v1358, %v1357
      %v1373 = vpack.c.b16 %v1360, %v1359
      %v1374 = vpack.c.b16 %v1362, %v1361
      %v1375 = vpack.c.b16 %v1364, %v1363
      %v1376 = vpack.c.b16 %v1366, %v1365
      %v1377 = vpack.c.b16 %v1368, %v1367
      %v1378 = vpack.c.b16 %v1370, %v1369
      %1387 = vmatprep.subr.bf16.mxu0 0
      %1388 = vmatpush1.bf16.msra.mxu0 %v1371
      %1389 = vmatprep.subr.bf16.mxu0 0
      %1390 = vmatpush1.bf16.msra.mxu0 %v1372
      %1391 = vmatprep.subr.bf16.mxu0 0
      %1392 = vmatpush1.bf16.msra.mxu0 %v1373
      %1393 = vmatprep.subr.bf16.mxu0 0
      %1394 = vmatpush1.bf16.msra.mxu0 %v1374
      %1395 = vmatprep.subr.bf16.mxu0 0
      %1396 = vmatpush1.bf16.msra.mxu0 %v1375
      %1397 = vmatprep.subr.bf16.mxu0 0
      %1398 = vmatpush1.bf16.msra.mxu0 %v1376
      %1399 = vmatprep.subr.bf16.mxu0 0
      %1400 = vmatpush1.bf16.msra.mxu0 %v1377
      %1401 = vmatprep.subr.bf16.mxu0 0
      %1402 = vmatpush1.bf16.msra.mxu0 %v1378
      %1403 = vmatprep.subr.bf16.mxu0 0
      %1404 = vmatpush1.bf16.msra.mxu0 0
      %1405 = vmatprep.subr.bf16.mxu0 0
      %1406 = vmatpush1.bf16.msra.mxu0 0
      %1407 = vmatprep.subr.bf16.mxu0 0
      %1408 = vmatpush1.bf16.msra.mxu0 0
      %1409 = vmatprep.subr.bf16.mxu0 0
      %1410 = vmatpush1.bf16.msra.mxu0 0
      %1411 = vmatprep.subr.bf16.mxu0 0
      %1412 = vmatpush1.bf16.msra.mxu0 0
      %1413 = vmatprep.subr.bf16.mxu0 0
      %1414 = vmatpush1.bf16.msra.mxu0 0
      %1415 = vmatprep.subr.bf16.mxu0 0
      %1416 = vmatpush1.bf16.msra.mxu0 0
      %1417 = vmatprep.subr.bf16.mxu0 0
      %1418 = vmatpush1.bf16.msra.mxu0 0
      %1419 = vmatprep.mubr.bf16.mxu0 0
      %1420 = vmatmul.mubr.bf16.gmra.mrb[0].mxu0 %v1315
      %v1421 = vpop.f32.mrb[0].mxu0
      %v1422 = vadd.f32 %v1337, %v1421
      %v1423 = vpop.f32.mrb[0].mxu0
      %v1424 = vpop.f32.mrb[0].mxu0
      %v1425 = vpop.f32.mrb[0].mxu0
      %1426 = vdwg.mxu0
      %v1427 = vadd.f32 %v1193, %v1422
      %v1428 = vpack.c.bf16 %v1427, %v1427
      %vm1429 = vcmask 519168
      %1430 = vst.msk [vmem:[%s470] sm:$0xf] %vm1429, %v1428
      %p1431 = scmp.lt.s32.totalorder %s26, 1
      %s1432 = scalar_select %p1431, %s26, 1
      %s1433 = smul.addr %s1432, 4
      %s1434 = scalar_lea.vmem %s13, %s1433
      %p1435 = scmp.lt.s32.totalorder %s26, 1
      %s1436 = scalar_select %p1435, %s26, 1
      %s1437 = smul.addr %s1436, 4
      %s1438 = smul.addr %s1437, 4
      %s1439 = scalar_lea.vmem %s14, %s1438
      // Predicated region
      $region73: #{transformer_forward.7} parent=71 // pred_check
        %p1440 = pneg %p322
      $region74: #{transformer_forward.7} parent=71 // pred_check_branch
        %1442 = sbr.rel (%p1440) target = $region76
      $region75: #{transformer_forward.7} parent=71 // pred_region
        _
      $region76: #{transformer_forward.7} parent=71 // pred_fallthru
        _
      // Predicated region
      $region77: #{transformer_forward.7} parent=71 // pred_check
        %p1443 = pneg %p348
      $region78: #{transformer_forward.7} parent=71 // pred_check_branch
        %1445 = sbr.rel (%p1443) target = $region80
      $region79: #{transformer_forward.7} parent=71 // pred_region
        _
      $region80: #{transformer_forward.7} parent=71 // pred_fallthru
        _
    $region72: #{transformer_forward.7} parent=5 // pred_fallthru
      _
    %p1446 = scmp.le.s32.totalorder 2, %s21
    // Predicated region
    $region81: #{transformer_forward.7} parent=5 // pred_check
      %p1447 = pneg %p1446
    $region82: #{transformer_forward.7} parent=5 // pred_check_branch
      %1449 = sbr.rel (%p1447) target = $region84
    $region83: #{transformer_forward.7} parent=5 // pred_region
      %s1450 = ssub.s32 %s21, 2
      // Predicated region
      $region85: #{transformer_forward.7} parent=83 // pred_check
        %p1451 = pneg %p328
      $region86: #{transformer_forward.7} parent=83 // pred_check_branch
        %1453 = sbr.rel (%p1451) target = $region88
      $region87: #{transformer_forward.7} parent=83 // pred_region
        %p1454 = scmp.lt.s32.totalorder %s27, 1
        %s1455 = scalar_select %p1454, %s27, 1
        %s1456 = smul.addr %s1455, 4
        %s1457 = scalar_lea.vmem %s13, %s1456
      $region88: #{transformer_forward.7} parent=83 // pred_fallthru
        _
      // Predicated region
      $region89: #{transformer_forward.7} parent=83 // pred_check
        %p1458 = pneg %p354
      $region90: #{transformer_forward.7} parent=83 // pred_check_branch
        %1460 = sbr.rel (%p1458) target = $region92
      $region91: #{transformer_forward.7} parent=83 // pred_region
        %p1461 = scmp.lt.s32.totalorder %s27, 1
        %s1462 = scalar_select %p1461, %s27, 1
        %s1463 = smul.addr %s1462, 4
        %s1464 = smul.addr %s1463, 4
        %s1465 = scalar_lea.vmem %s14, %s1464
      $region92: #{transformer_forward.7} parent=83 // pred_fallthru
        _
    $region84: #{transformer_forward.7} parent=5 // pred_fallthru
      _
  $region6: #{transformer_forward.7} parent=0 // loop_footer
    %s25 = sadd.s32 1, %s21
  $region7: #{transformer_forward.7} parent=0 // loop_footer_branch
    %20 = sbr.rel target = $region3
  $region8: #{transformer_forward.7} parent=0 // loop_exit
    _

</llo_original>
